<compile_context>
chip_gen: v7x
topology: tpu7x:2x2x1
jax: 0.10.0
libtpu: 0.0.40
codegen_flags: <defaults>
</compile_context>

<pallas_src>
import functools

import jax
import jax.numpy as jnp
from jax.experimental import pallas as pl
from jax.experimental.pallas import tpu as pltpu


def _round_up(x, m):
    return ((x + m - 1) // m) * m


def _cdiv(a, b):
    return -(-a // b)


def _vmem_capacity_bytes():
    """Physical VMEM per core (128 MiB on v5e/v6e, 64 MiB on v7x)."""
    cap = 64 * 1024 * 1024  # conservative default (v7x)
    try:
        info = pltpu.get_tpu_info()
        cap = int(getattr(info, "vmem_capacity_bytes", cap)) or cap
    except Exception:
        pass
    return cap


def _vmem_tile_bytes(sublanes, lanes, itemsize):
    """VMEM footprint of a 2-D tile after (sublane, lane) layout padding."""
    packing = max(1, 4 // itemsize)
    return (_round_up(max(sublanes, 1), 8 * packing)
            * _round_up(max(lanes, 1), 128) * itemsize)


def _oup_padded(oup):
    # 128-aligned lane-dense output stores; 256-aligned above 128 so the
    # 2x256x256 MXU on v6e/v7x gets full-width pushes (don't blow 128 up to 256).
    if oup <= 128:
        return 128
    return _round_up(oup, 256)


# ---------------------------------------------------------------------------
# Fused kernel: one grid step = one image x one OUP block.  x read once,
# weight resident, taps folded in-kernel, one f32 store.
# ---------------------------------------------------------------------------
def _fused_conv_kernel(x_ref, w_ref, o_ref, *, ksz_h, ksz_w, wrow, oh):
    # x_ref: (1, (HP+1)*WP, C_pad)     bf16  flattened padded image
    # w_ref: (KH, KW, C_pad, OUP_BLK)  bf16  resident weight block
    # o_ref: (1, OH*WP, OUP_BLK)       f32   flattened output block
    m = oh * wrow
    acc = jnp.zeros((m, o_ref.shape[-1]), jnp.float32)
    for i in range(ksz_h):
        for j in range(ksz_w):
            base = i * wrow + j
            # With the flattened row layout this tap is one contiguous slab.
            xs = x_ref[0, base:base + m, :]                    # (m, C_pad) bf16
            acc = acc + jnp.dot(xs, w_ref[i, j],
                                preferred_element_type=jnp.float32)
    o_ref[0] = acc        # single lane-dense f32 store (no read-modify-write)


# ---------------------------------------------------------------------------
# Fallback im2col matmul kernels.
# ---------------------------------------------------------------------------
def _mm_kernel_resident(p_ref, w_ref, o_ref):
    # Single resident K chunk: write the dot directly (no zero-init / RMW).
    o_ref[...] = jnp.dot(p_ref[...], w_ref[...],
                         preferred_element_type=jnp.float32)


def _mm_kernel_streamed(p_ref, w_ref, o_ref):
    # K streamed on the trailing "arbitrary" axis; o_ref is the accumulator.
    @pl.when(pl.program_id(1) == 0)
    def _():
        o_ref[...] = jnp.zeros_like(o_ref)

    o_ref[...] += jnp.dot(p_ref[...], w_ref[...],
                          preferred_element_type=jnp.float32)


# ---------------------------------------------------------------------------
# Wrapper (layout glue stays in plain JAX; the hot contraction is Pallas).
# ---------------------------------------------------------------------------
@functools.partial(jax.jit, static_argnames=("stride", "pad"))
def conv_forward(x_nchw, weight_oihw, *, stride, pad):
    """Equivalent of Conv.forward: nn.Conv2d(..., bias=False)(x), NCHW in/out."""
    OUP, INP, KH, KW = weight_oihw.shape
    N, C, H, W = x_nchw.shape
    assert C == INP

    HP, WP = H + 2 * pad, W + 2 * pad
    OH = (HP - KH) // stride + 1
    OW = (WP - KW) // stride + 1

    c_pad = _round_up(C, 8)            # sublane-aligned channels (also pads K)
    oup_pad = _oup_padded(OUP)

    cap = _vmem_capacity_bytes()
    budget = int(0.55 * cap)           # tile budget; leaves compiler headroom

    # NCHW -> NHWC once; weights to (KH, KW, C_pad, OUP_pad), zero-padded.
    x_nhwc = jnp.transpose(x_nchw, (0, 2, 3, 1))
    w = jnp.transpose(weight_oihw, (2, 3, 1, 0))
    w = jnp.pad(w, ((0, 0), (0, 0), (0, c_pad - C), (0, oup_pad - OUP)))
    w_bf = w.astype(jnp.bfloat16)

    # ------------------- fused, read-x-once path (stride == 1) -----------------
    if stride == 1:
        lflat = (HP + 1) * WP          # +1 zero halo row keeps every tap in bounds
        m_img = OH * WP

        def fused_bytes(ob):
            return (2 * _vmem_tile_bytes(lflat, c_pad, 2)            # image (dbl-buf)
                    + 2 * KH * KW * _vmem_tile_bytes(c_pad, ob, 2)   # weight block
                    + 2 * _vmem_tile_bytes(m_img, ob, 4)             # out block
                    + _vmem_tile_bytes(m_img, ob, 4))                # f32 accumulator

        # Largest OUP block (multiple of 128, divides oup_pad) fitting the budget;
        # prefer the full weight resident so it is fetched exactly once.
        oup_blk = None
        for ob in range(oup_pad, 0, -128):
            if oup_pad % ob == 0 and fused_bytes(ob) <= budget:
                oup_blk = ob
                break

        if oup_blk is not None:
            x_p = jnp.pad(
                x_nhwc, ((0, 0), (pad, pad + 1), (pad, pad), (0, c_pad - C)))
            x_flat = x_p.astype(jnp.bfloat16).reshape(N, lflat, c_pad)

            n_ob = oup_pad // oup_blk
            kern = functools.partial(
                _fused_conv_kernel, ksz_h=KH, ksz_w=KW, wrow=WP, oh=OH)

            w_reads = N if n_ob > 1 else 1
            flops = 2 * N * m_img * KH * KW * c_pad * oup_pad
            bytes_accessed = (x_flat.size * 2 + w_reads * w_bf.size * 2
                              + N * m_img * oup_pad * 4)
            vmem_limit = int(min(0.85 * cap,
                                 max(2 * fused_bytes(oup_blk), 16 * 1024 * 1024)))

            out_flat = pl.pallas_call(
                kern,
                out_shape=jax.ShapeDtypeStruct((N, m_img, oup_pad), jnp.float32),
                grid=(N, n_ob),
                in_specs=[
                    # Whole flattened image: read from HBM exactly once per image.
                    pl.BlockSpec((1, lflat, c_pad), lambda n, j: (n, 0, 0)),
                    # Weight block; index constant when n_ob == 1 -> resident.
                    pl.BlockSpec((KH, KW, c_pad, oup_blk),
                                 lambda n, j: (0, 0, 0, j)),
                ],
                out_specs=pl.BlockSpec((1, m_img, oup_blk),
                                       lambda n, j: (n, 0, j)),
                compiler_params=pltpu.CompilerParams(
                    dimension_semantics=("parallel", "parallel"),
                    vmem_limit_bytes=vmem_limit,
                ),
                cost_estimate=pl.CostEstimate(
                    flops=int(flops), transcendentals=0,
                    bytes_accessed=int(bytes_accessed)),
            )(x_flat, w_bf)

            out = out_flat.reshape(N, OH, WP, oup_pad)[:, :, :OW, :OUP]
            return jnp.transpose(out, (0, 3, 1, 2))

    # ------------------- fallback: bf16 im2col matmul --------------------------
    x_bf = jnp.pad(
        x_nhwc, ((0, 0), (pad, pad), (pad, pad), (0, c_pad - C))
    ).astype(jnp.bfloat16)

    # im2col with channels already padded, so K = KH*KW*c_pad is a multiple of 8
    # and the big [M, K] matrix never needs a separate jnp.pad copy.
    taps = []
    for kh in range(KH):
        for kw in range(KW):
            taps.append(
                x_bf[:, kh:kh + stride * (OH - 1) + 1:stride,
                     kw:kw + stride * (OW - 1) + 1:stride, :])
    M = N * OH * OW
    K = KH * KW * c_pad
    patches = jnp.concatenate(taps, axis=-1).reshape(M, K)
    w2d = w_bf.reshape(K, oup_pad)

    def tile_bytes(tm_, tk_, lhs_bufs=2):
        return (lhs_bufs * _vmem_tile_bytes(tm_, tk_, 2)     # bf16 patch tiles
                + 2 * _vmem_tile_bytes(tk_, oup_pad, 2)      # bf16 weight tiles
                + 2 * _vmem_tile_bytes(tm_, oup_pad, 4))     # f32 output tiles

    # Keep the whole weight resident (fetched once) whenever the budget allows;
    # only stream K in 128-aligned chunks when it truly doesn't fit.
    resident_k = tile_bytes(256, K) <= budget
    if resident_k:
        tk, k_pad = K, K
    else:
        tk = 512
        k_pad = _round_up(K, tk)
        patches = jnp.pad(patches, ((0, 0), (0, k_pad - K)))
        w2d = jnp.pad(w2d, ((0, k_pad - K), (0, 0)))

    # M tile: biggest power of two that fits the budget and leaves >= 2 tiles so
    # the "parallel" axis shards across both TensorCores on v7x.  M itself is NOT
    # padded: Pallas masks the boundary block (garbage rows are sliced off below).
    m8 = _round_up(M, 8)
    tm = 8
    for cand in (1024, 512, 256, 128, 64, 32, 16, 8):
        if cand <= m8 and tile_bytes(cand, tk) <= budget and (
                _cdiv(M, cand) >= 2 or cand == 8):
            tm = cand
            break
    grid_m = _cdiv(M, tm)

    vmem_limit = int(min(0.85 * cap,
                         max(2 * tile_bytes(tm, tk, lhs_bufs=3),
                             16 * 1024 * 1024)))
    flops = 2 * M * k_pad * oup_pad
    bytes_accessed = (patches.size * 2
                      + w2d.size * 2 * (1 if resident_k else grid_m)
                      + M * oup_pad * 4)
    cost = pl.CostEstimate(flops=int(flops), transcendentals=0,
                           bytes_accessed=int(bytes_accessed))

    if resident_k:
        out2d = pl.pallas_call(
            _mm_kernel_resident,
            out_shape=jax.ShapeDtypeStruct((M, oup_pad), jnp.float32),
            grid=(grid_m,),
            in_specs=[
                pl.BlockSpec((tm, K), lambda i: (i, 0)),
                pl.BlockSpec((K, oup_pad), lambda i: (0, 0)),   # resident weight
            ],
            out_specs=pl.BlockSpec((tm, oup_pad), lambda i: (i, 0)),
            compiler_params=pltpu.CompilerParams(
                dimension_semantics=("parallel",),
                vmem_limit_bytes=vmem_limit),
            cost_estimate=cost,
        )(patches, w2d)
    else:
        lhs_spec = pl.BlockSpec((tm, tk), lambda i, k: (i, k))
        if tile_bytes(tm, tk, lhs_bufs=3) <= budget:
            # Mem-bound streamed-K case: 3-deep patch pipeline hides DMA jitter.
            lhs_spec = pl.BlockSpec((tm, tk), lambda i, k: (i, k),
                                    pipeline_mode=pl.Buffered(3))
        out2d = pl.pallas_call(
            _mm_kernel_streamed,
            out_shape=jax.ShapeDtypeStruct((M, oup_pad), jnp.float32),
            grid=(grid_m, k_pad // tk),
            in_specs=[
                lhs_spec,
                pl.BlockSpec((tk, oup_pad), lambda i, k: (k, 0)),
            ],
            out_specs=pl.BlockSpec((tm, oup_pad), lambda i, k: (i, 0)),
            compiler_params=pltpu.CompilerParams(
                dimension_semantics=("parallel", "arbitrary"),
                vmem_limit_bytes=vmem_limit),
            cost_estimate=cost,
        )(patches, w2d)

    out = out2d[:, :OUP].reshape(N, OH, OW, OUP)
    return jnp.transpose(out, (0, 3, 1, 2))


# ---------------------------------------------------------------------------
# Demo / correctness check.
# ---------------------------------------------------------------------------
if __name__ == "__main__":
    key = jax.random.PRNGKey(0)
    kx, kw1, kw2 = jax.random.split(key, 3)

    # Conv(inp=4, oup=8, kernel_size=3, stride, pad=1) on a (2, 4, 16, 16) input.
    N, inp, H, W = 2, 4, 16, 16
    oup, ksz = 8, 3

    x = jax.random.normal(kx, (N, inp, H, W), dtype=jnp.float32)
    fan_in = inp * ksz * ksz
    bound = (1.0 / fan_in) ** 0.5
    w1 = jax.random.uniform(kw1, (oup, inp, ksz, ksz),
                            minval=-bound, maxval=bound, dtype=jnp.float32)
    w2 = jax.random.uniform(kw2, (oup, inp, ksz, ksz),
                            minval=-bound, maxval=bound, dtype=jnp.float32)

    def ref_conv(xa, wa, stride, pad):
        # Reference with operands rounded to bf16 (kernel uses bf16 x bf16 -> f32).
        xr = xa.astype(jnp.bfloat16).astype(jnp.float32)
        wr = wa.astype(jnp.bfloat16).astype(jnp.float32)
        return jax.lax.conv_general_dilated(
            xr, wr, window_strides=(stride, stride),
            padding=((pad, pad), (pad, pad)),
            dimension_numbers=("NCHW", "OIHW", "NCHW"),
            precision=jax.lax.Precision.HIGHEST)

    # 1) stride-1 conv -> fused (read-x-once) kernel path.
    out1 = jax.block_until_ready(conv_forward(x, w1, stride=1, pad=1))
    ref1 = ref_conv(x, w1, 1, 1)
    assert out1.shape == ref1.shape, (out1.shape, ref1.shape)
    err1 = float(jnp.max(jnp.abs(out1 - ref1)))
    assert err1 < 2e-3, err1

    # 2) stride-2 conv -> im2col fallback kernel path.
    out2 = jax.block_until_ready(conv_forward(x, w2, stride=2, pad=1))
    ref2 = ref_conv(x, w2, 2, 1)
    assert out2.shape == ref2.shape, (out2.shape, ref2.shape)
    err2 = float(jnp.max(jnp.abs(out2 - ref2)))
    assert err2 < 2e-3, err2

    print("KERNEL_OK")
</pallas_src>

<mosaic_0001>
module attributes {stable_mosaic.version = 11 : i64} {
  func.func @_fused_conv_kernel(%arg0: i32, %arg1: i32, %arg2: memref<1x342x8xbf16, #tpu.memory_space<vmem>>, %arg3: memref<3x3x8x128xbf16, #tpu.memory_space<vmem>>, %arg4: memref<1x288x128xf32, #tpu.memory_space<vmem>>) attributes {dimension_semantics = [#tpu.dimension_semantics<parallel>, #tpu.dimension_semantics<parallel>], iteration_bounds = array<i64: 2, 1>, scalar_prefetch = 0 : i64, scratch_operands = 0 : i64, tpu.core_type = #tpu.core_type<tc>, window_params = [{transform_indices = @transform_0, window_bounds = array<i64: 1, 342, 8>}, {transform_indices = @transform_1, window_bounds = array<i64: 3, 3, 8, 128>}, {transform_indices = @transform_2, window_bounds = array<i64: 1, 288, 128>}]} {
    %cst = arith.constant 0.000000e+00 : f32
    %0 = vector.broadcast %cst : f32 to vector<288x128xf32>
    %c0 = arith.constant 0 : index
    %c0_0 = arith.constant 0 : index
    %c0_1 = arith.constant 0 : index
    %1 = vector.load %arg2[%c0, %c0_0, %c0_1] : memref<1x342x8xbf16, #tpu.memory_space<vmem>>, vector<1x288x8xbf16>
    %2 = vector.shape_cast %1 : vector<1x288x8xbf16> to vector<288x8xbf16>
    %c0_2 = arith.constant 0 : index
    %c0_3 = arith.constant 0 : index
    %c0_4 = arith.constant 0 : index
    %c0_5 = arith.constant 0 : index
    %3 = vector.load %arg3[%c0_2, %c0_3, %c0_4, %c0_5] : memref<3x3x8x128xbf16, #tpu.memory_space<vmem>>, vector<1x1x8x128xbf16>
    %4 = vector.shape_cast %3 : vector<1x1x8x128xbf16> to vector<8x128xbf16>
    %cst_6 = arith.constant dense<0.000000e+00> : vector<288x128xf32>
    %5 = tpu.matmul %2, %4, %cst_6 {dimension_numbers = #tpu.dot_dimension_numbers<[1], [0], [0], [1], [0, 0, 1, 1], [], []>} : vector<288x8xbf16>, vector<8x128xbf16>, vector<288x128xf32> -> vector<288x128xf32>
    %6 = arith.addf %0, %5 : vector<288x128xf32>
    %c0_7 = arith.constant 0 : index
    %c1 = arith.constant 1 : index
    %c0_8 = arith.constant 0 : index
    %7 = vector.load %arg2[%c0_7, %c1, %c0_8] : memref<1x342x8xbf16, #tpu.memory_space<vmem>>, vector<1x288x8xbf16>
    %8 = vector.shape_cast %7 : vector<1x288x8xbf16> to vector<288x8xbf16>
    %c0_9 = arith.constant 0 : index
    %c1_10 = arith.constant 1 : index
    %c0_11 = arith.constant 0 : index
    %c0_12 = arith.constant 0 : index
    %9 = vector.load %arg3[%c0_9, %c1_10, %c0_11, %c0_12] : memref<3x3x8x128xbf16, #tpu.memory_space<vmem>>, vector<1x1x8x128xbf16>
    %10 = vector.shape_cast %9 : vector<1x1x8x128xbf16> to vector<8x128xbf16>
    %cst_13 = arith.constant dense<0.000000e+00> : vector<288x128xf32>
    %11 = tpu.matmul %8, %10, %cst_13 {dimension_numbers = #tpu.dot_dimension_numbers<[1], [0], [0], [1], [0, 0, 1, 1], [], []>} : vector<288x8xbf16>, vector<8x128xbf16>, vector<288x128xf32> -> vector<288x128xf32>
    %12 = arith.addf %6, %11 : vector<288x128xf32>
    %c0_14 = arith.constant 0 : index
    %c2 = arith.constant 2 : index
    %c0_15 = arith.constant 0 : index
    %13 = vector.load %arg2[%c0_14, %c2, %c0_15] : memref<1x342x8xbf16, #tpu.memory_space<vmem>>, vector<1x288x8xbf16>
    %14 = vector.shape_cast %13 : vector<1x288x8xbf16> to vector<288x8xbf16>
    %c0_16 = arith.constant 0 : index
    %c2_17 = arith.constant 2 : index
    %c0_18 = arith.constant 0 : index
    %c0_19 = arith.constant 0 : index
    %15 = vector.load %arg3[%c0_16, %c2_17, %c0_18, %c0_19] : memref<3x3x8x128xbf16, #tpu.memory_space<vmem>>, vector<1x1x8x128xbf16>
    %16 = vector.shape_cast %15 : vector<1x1x8x128xbf16> to vector<8x128xbf16>
    %cst_20 = arith.constant dense<0.000000e+00> : vector<288x128xf32>
    %17 = tpu.matmul %14, %16, %cst_20 {dimension_numbers = #tpu.dot_dimension_numbers<[1], [0], [0], [1], [0, 0, 1, 1], [], []>} : vector<288x8xbf16>, vector<8x128xbf16>, vector<288x128xf32> -> vector<288x128xf32>
    %18 = arith.addf %12, %17 : vector<288x128xf32>
    %c0_21 = arith.constant 0 : index
    %c18 = arith.constant 18 : index
    %c0_22 = arith.constant 0 : index
    %19 = vector.load %arg2[%c0_21, %c18, %c0_22] : memref<1x342x8xbf16, #tpu.memory_space<vmem>>, vector<1x288x8xbf16>
    %20 = vector.shape_cast %19 : vector<1x288x8xbf16> to vector<288x8xbf16>
    %c1_23 = arith.constant 1 : index
    %c0_24 = arith.constant 0 : index
    %c0_25 = arith.constant 0 : index
    %c0_26 = arith.constant 0 : index
    %21 = vector.load %arg3[%c1_23, %c0_24, %c0_25, %c0_26] : memref<3x3x8x128xbf16, #tpu.memory_space<vmem>>, vector<1x1x8x128xbf16>
    %22 = vector.shape_cast %21 : vector<1x1x8x128xbf16> to vector<8x128xbf16>
    %cst_27 = arith.constant dense<0.000000e+00> : vector<288x128xf32>
    %23 = tpu.matmul %20, %22, %cst_27 {dimension_numbers = #tpu.dot_dimension_numbers<[1], [0], [0], [1], [0, 0, 1, 1], [], []>} : vector<288x8xbf16>, vector<8x128xbf16>, vector<288x128xf32> -> vector<288x128xf32>
    %24 = arith.addf %18, %23 : vector<288x128xf32>
    %c0_28 = arith.constant 0 : index
    %c19 = arith.constant 19 : index
    %c0_29 = arith.constant 0 : index
    %25 = vector.load %arg2[%c0_28, %c19, %c0_29] : memref<1x342x8xbf16, #tpu.memory_space<vmem>>, vector<1x288x8xbf16>
    %26 = vector.shape_cast %25 : vector<1x288x8xbf16> to vector<288x8xbf16>
    %c1_30 = arith.constant 1 : index
    %c1_31 = arith.constant 1 : index
    %c0_32 = arith.constant 0 : index
    %c0_33 = arith.constant 0 : index
    %27 = vector.load %arg3[%c1_30, %c1_31, %c0_32, %c0_33] : memref<3x3x8x128xbf16, #tpu.memory_space<vmem>>, vector<1x1x8x128xbf16>
    %28 = vector.shape_cast %27 : vector<1x1x8x128xbf16> to vector<8x128xbf16>
    %cst_34 = arith.constant dense<0.000000e+00> : vector<288x128xf32>
    %29 = tpu.matmul %26, %28, %cst_34 {dimension_numbers = #tpu.dot_dimension_numbers<[1], [0], [0], [1], [0, 0, 1, 1], [], []>} : vector<288x8xbf16>, vector<8x128xbf16>, vector<288x128xf32> -> vector<288x128xf32>
    %30 = arith.addf %24, %29 : vector<288x128xf32>
    %c0_35 = arith.constant 0 : index
    %c20 = arith.constant 20 : index
    %c0_36 = arith.constant 0 : index
    %31 = vector.load %arg2[%c0_35, %c20, %c0_36] : memref<1x342x8xbf16, #tpu.memory_space<vmem>>, vector<1x288x8xbf16>
    %32 = vector.shape_cast %31 : vector<1x288x8xbf16> to vector<288x8xbf16>
    %c1_37 = arith.constant 1 : index
    %c2_38 = arith.constant 2 : index
    %c0_39 = arith.constant 0 : index
    %c0_40 = arith.constant 0 : index
    %33 = vector.load %arg3[%c1_37, %c2_38, %c0_39, %c0_40] : memref<3x3x8x128xbf16, #tpu.memory_space<vmem>>, vector<1x1x8x128xbf16>
    %34 = vector.shape_cast %33 : vector<1x1x8x128xbf16> to vector<8x128xbf16>
    %cst_41 = arith.constant dense<0.000000e+00> : vector<288x128xf32>
    %35 = tpu.matmul %32, %34, %cst_41 {dimension_numbers = #tpu.dot_dimension_numbers<[1], [0], [0], [1], [0, 0, 1, 1], [], []>} : vector<288x8xbf16>, vector<8x128xbf16>, vector<288x128xf32> -> vector<288x128xf32>
    %36 = arith.addf %30, %35 : vector<288x128xf32>
    %c0_42 = arith.constant 0 : index
    %c36 = arith.constant 36 : index
    %c0_43 = arith.constant 0 : index
    %37 = vector.load %arg2[%c0_42, %c36, %c0_43] : memref<1x342x8xbf16, #tpu.memory_space<vmem>>, vector<1x288x8xbf16>
    %38 = vector.shape_cast %37 : vector<1x288x8xbf16> to vector<288x8xbf16>
    %c2_44 = arith.constant 2 : index
    %c0_45 = arith.constant 0 : index
    %c0_46 = arith.constant 0 : index
    %c0_47 = arith.constant 0 : index
    %39 = vector.load %arg3[%c2_44, %c0_45, %c0_46, %c0_47] : memref<3x3x8x128xbf16, #tpu.memory_space<vmem>>, vector<1x1x8x128xbf16>
    %40 = vector.shape_cast %39 : vector<1x1x8x128xbf16> to vector<8x128xbf16>
    %cst_48 = arith.constant dense<0.000000e+00> : vector<288x128xf32>
    %41 = tpu.matmul %38, %40, %cst_48 {dimension_numbers = #tpu.dot_dimension_numbers<[1], [0], [0], [1], [0, 0, 1, 1], [], []>} : vector<288x8xbf16>, vector<8x128xbf16>, vector<288x128xf32> -> vector<288x128xf32>
    %42 = arith.addf %36, %41 : vector<288x128xf32>
    %c0_49 = arith.constant 0 : index
    %c37 = arith.constant 37 : index
    %c0_50 = arith.constant 0 : index
    %43 = vector.load %arg2[%c0_49, %c37, %c0_50] : memref<1x342x8xbf16, #tpu.memory_space<vmem>>, vector<1x288x8xbf16>
    %44 = vector.shape_cast %43 : vector<1x288x8xbf16> to vector<288x8xbf16>
    %c2_51 = arith.constant 2 : index
    %c1_52 = arith.constant 1 : index
    %c0_53 = arith.constant 0 : index
    %c0_54 = arith.constant 0 : index
    %45 = vector.load %arg3[%c2_51, %c1_52, %c0_53, %c0_54] : memref<3x3x8x128xbf16, #tpu.memory_space<vmem>>, vector<1x1x8x128xbf16>
    %46 = vector.shape_cast %45 : vector<1x1x8x128xbf16> to vector<8x128xbf16>
    %cst_55 = arith.constant dense<0.000000e+00> : vector<288x128xf32>
    %47 = tpu.matmul %44, %46, %cst_55 {dimension_numbers = #tpu.dot_dimension_numbers<[1], [0], [0], [1], [0, 0, 1, 1], [], []>} : vector<288x8xbf16>, vector<8x128xbf16>, vector<288x128xf32> -> vector<288x128xf32>
    %48 = arith.addf %42, %47 : vector<288x128xf32>
    %c0_56 = arith.constant 0 : index
    %c38 = arith.constant 38 : index
    %c0_57 = arith.constant 0 : index
    %49 = vector.load %arg2[%c0_56, %c38, %c0_57] : memref<1x342x8xbf16, #tpu.memory_space<vmem>>, vector<1x288x8xbf16>
    %50 = vector.shape_cast %49 : vector<1x288x8xbf16> to vector<288x8xbf16>
    %c2_58 = arith.constant 2 : index
    %c2_59 = arith.constant 2 : index
    %c0_60 = arith.constant 0 : index
    %c0_61 = arith.constant 0 : index
    %51 = vector.load %arg3[%c2_58, %c2_59, %c0_60, %c0_61] : memref<3x3x8x128xbf16, #tpu.memory_space<vmem>>, vector<1x1x8x128xbf16>
    %52 = vector.shape_cast %51 : vector<1x1x8x128xbf16> to vector<8x128xbf16>
    %cst_62 = arith.constant dense<0.000000e+00> : vector<288x128xf32>
    %53 = tpu.matmul %50, %52, %cst_62 {dimension_numbers = #tpu.dot_dimension_numbers<[1], [0], [0], [1], [0, 0, 1, 1], [], []>} : vector<288x8xbf16>, vector<8x128xbf16>, vector<288x128xf32> -> vector<288x128xf32>
    %54 = arith.addf %48, %53 : vector<288x128xf32>
    %c0_63 = arith.constant 0 : index
    %c0_64 = arith.constant 0 : index
    %c0_65 = arith.constant 0 : index
    %55 = vector.load %arg4[%c0_63, %c0_64, %c0_65] : memref<1x288x128xf32, #tpu.memory_space<vmem>>, vector<1x288x128xf32>
    %56 = vector.shape_cast %55 : vector<1x288x128xf32> to vector<288x128xf32>
    %57 = vector.shape_cast %54 : vector<288x128xf32> to vector<1x288x128xf32>
    tpu.vector_store %arg4[%c0_63, %c0_64, %c0_65], %57 {strides = array<i32>} : memref<1x288x128xf32, #tpu.memory_space<vmem>>, vector<1x288x128xf32>,
    return
  }
  func.func @transform_0(%arg0: i32, %arg1: i32) -> (i32, i32, i32) {
    %c0_i32 = arith.constant 0 : i32
    %c0_i32_0 = arith.constant 0 : i32
    %c0_i32_1 = arith.constant 0 : i32
    return %arg0, %c0_i32, %c0_i32_0 : i32, i32, i32
  }
  func.func @transform_1(%arg0: i32, %arg1: i32) -> (i32, i32, i32, i32) {
    %c0_i32 = arith.constant 0 : i32
    %c0_i32_0 = arith.constant 0 : i32
    %c0_i32_1 = arith.constant 0 : i32
    %c0_i32_2 = arith.constant 0 : i32
    return %c0_i32, %c0_i32_0, %c0_i32_1, %arg1 : i32, i32, i32, i32
  }
  func.func @transform_2(%arg0: i32, %arg1: i32) -> (i32, i32, i32) {
    %c0_i32 = arith.constant 0 : i32
    %c0_i32_0 = arith.constant 0 : i32
    return %arg0, %c0_i32, %arg1 : i32, i32, i32
  }
}

</mosaic_0001>

<llo_original>
// kernel: conv_forward.1
$region0: #{conv_forward.1}
  #allocation0 [shape = 'u32[]', space=smem, size = 0x4, offset = 0x4, fixed_abs, tag = 'smem constant byte address 0x4 - core index']
  #allocation1 [shape = 'u32[144,128]{1,0:T(1,128)}', space=vmem, size = 0x12000, scoped, tag = 'internal scratch']
  %s0 = inlined_call_operand.vmem [shape: bf16[2,342,8], index: 0, kind: input, shape index: {}]
  %s1 = inlined_call_operand.vmem [shape: bf16[3,3,8,128], index: 1, kind: input, shape index: {}]
  %s2 = inlined_call_operand.vmem [shape: f32[2,288,128], index: 2, kind: output, shape index: {}]
  %s3 = sld [smem:[#allocation0]]
  $region41: #{conv_forward.1} parent=0
    _
  %s5 = ssub.s32 1, %s3
  %s6 = scalar_select 0, %s5, %s3
  loop: start=0, step=1, limit=4
  $region2: #{conv_forward.1} parent=0 // loop_pre_header
    _
  $region3: #{conv_forward.1} parent=0 // loop_header
    %s8 = sphi 0, %s12
    %p9 = scmp.ge.s32.totalorder %s8, 4
    %s15 = sphi 0, %s27
    %s16 = sphi 0, %s23
    %s17 = sphi 0, %s15
    %s18 = sphi 0, %s16
    %s19 = sphi 0, %s17
    %s20 = sphi 0, %s18
    %s30 = sphi 0, %s32
    %s33 = sphi 0, %s30
    %s34 = sphi 0, %s33
    %s50 = sphi 0, %s34
    %s56 = sphi 0, %s58
    %s59 = sphi 0, %s56
    %s60 = sphi 0, %s59
    %s76 = sphi 0, %s60
    %s84 = sphi 0, %s86
    %s87 = sphi 0, %s84
    %s88 = sphi 0, %s87
    %s104 = sphi 0, %s88
  $region4: #{conv_forward.1} parent=0 // loop_header_branch
    %11 = sbr.rel (%p9) target = $region8
  $region5: #{conv_forward.1} parent=0 // loop_body
    %s13 = ssub.s32 %s8, 1
    %s14 = ssub.s32 %s8, 2
    %s21 = sadd.s32 1, %s16
    %p22 = scmp.ge.s32.totalorder %s21, 1
    %s23 = scalar_select %p22, 0, %s21
    %s24 = sadd.s32 1, %s15
    %s25 = scalar_select %p22, %s24, %s15
    %p26 = scmp.ge.s32.totalorder %s25, 2
    %s27 = scalar_select %p26, 0, %s25
    %s28 = ssub.s32 %s15, %s27
    %p29 = scmp.eq.s32.totalorder %s28, 0
    %s31 = sadd.s32 %s30, 1
    %s32 = scalar_select %p29, %s30, %s31
    %p35 = pneg %p29
    %p36 = scmp.eq.s32.totalorder %s8, 1
    %p37 = por %p35, %p36
    %p38 = scmp.ne.s32.totalorder %s30, %s33
    %p39 = scmp.eq.s32.totalorder %s8, 0
    %p40 = por %p38, %p39
    %p41 = scmp.ne.s32.totalorder %s30, %s33
    %p42 = scmp.eq.s32.totalorder %s13, 1
    %p43 = por %p41, %p42
    %p44 = scmp.ne.s32.totalorder %s33, %s34
    %p45 = scmp.eq.s32.totalorder %s13, 0
    %p46 = por %p44, %p45
    %p47 = scmp.ne.s32.totalorder %s33, %s34
    %p48 = scmp.eq.s32.totalorder %s14, 1
    %p49 = por %p47, %p48
    %p51 = scmp.ne.s32.totalorder %s34, %s50
    %p52 = scmp.eq.s32.totalorder %s14, 0
    %p53 = por %p51, %p52
    %s54 = ssub.s32 %s16, %s23
    %p55 = scmp.eq.s32.totalorder %s54, 0
    %s57 = sadd.s32 %s56, 1
    %s58 = scalar_select %p55, %s56, %s57
    %p61 = pneg %p55
    %p62 = scmp.eq.s32.totalorder %s8, 1
    %p63 = por %p61, %p62
    %p64 = scmp.ne.s32.totalorder %s56, %s59
    %p65 = scmp.eq.s32.totalorder %s8, 0
    %p66 = por %p64, %p65
    %p67 = scmp.ne.s32.totalorder %s56, %s59
    %p68 = scmp.eq.s32.totalorder %s13, 1
    %p69 = por %p67, %p68
    %p70 = scmp.ne.s32.totalorder %s59, %s60
    %p71 = scmp.eq.s32.totalorder %s13, 0
    %p72 = por %p70, %p71
    %p73 = scmp.ne.s32.totalorder %s59, %s60
    %p74 = scmp.eq.s32.totalorder %s14, 1
    %p75 = por %p73, %p74
    %p77 = scmp.ne.s32.totalorder %s60, %s76
    %p78 = scmp.eq.s32.totalorder %s14, 0
    %p79 = por %p77, %p78
    %s80 = ssub.s32 %s15, %s27
    %s81 = ssub.s32 %s16, %s23
    %s82 = sor.u32 %s80, %s81
    %p83 = scmp.eq.s32.totalorder %s82, 0
    %s85 = sadd.s32 %s84, 1
    %s86 = scalar_select %p83, %s84, %s85
    %p89 = pneg %p83
    %p90 = scmp.eq.s32.totalorder %s8, 1
    %p91 = por %p89, %p90
    %p92 = scmp.ne.s32.totalorder %s84, %s87
    %p93 = scmp.eq.s32.totalorder %s8, 0
    %p94 = por %p92, %p93
    %p95 = scmp.ne.s32.totalorder %s84, %s87
    %p96 = scmp.eq.s32.totalorder %s13, 1
    %p97 = por %p95, %p96
    %p98 = scmp.ne.s32.totalorder %s87, %s88
    %p99 = scmp.eq.s32.totalorder %s13, 0
    %p100 = por %p98, %p99
    %p101 = scmp.ne.s32.totalorder %s87, %s88
    %p102 = scmp.eq.s32.totalorder %s14, 1
    %p103 = por %p101, %p102
    %p105 = scmp.ne.s32.totalorder %s88, %s104
    %p106 = scmp.eq.s32.totalorder %s14, 0
    %p107 = por %p105, %p106
    %p108 = scmp.le.s32.totalorder 1, %s8
    %p109 = scmp.lt.s32.totalorder %s8, 3
    %p110 = pnand %p108, %p109
    %p111 = pneg %p110
    // Predicated region
    $region9: #{conv_forward.1} parent=5 // pred_check
      _
    $region10: #{conv_forward.1} parent=5 // pred_check_branch
      %113 = sbr.rel (%p110) target = $region12
    $region11: #{conv_forward.1} parent=5 // pred_region
      %s114 = ssub.s32 %s8, 1
      // Predicated region
      $region13: #{conv_forward.1} parent=11 // pred_check
        %p115 = pneg %p72
      $region14: #{conv_forward.1} parent=11 // pred_check_branch
        %117 = sbr.rel (%p115) target = $region16
      $region15: #{conv_forward.1} parent=11 // pred_region
        %p118 = scmp.lt.s32.totalorder %s18, 0
        %s119 = scalar_select %p118, %s18, 0
        %s120 = smul.addr %s119, 4
        %s121 = scalar_lea.vmem %s1, %s120
      $region16: #{conv_forward.1} parent=11 // pred_fallthru
        _
    $region12: #{conv_forward.1} parent=5 // pred_fallthru
      _
    %p122 = scmp.lt.s32.totalorder %s8, 2
    // Predicated region
    $region17: #{conv_forward.1} parent=5 // pred_check
      %p123 = pneg %p122
    $region18: #{conv_forward.1} parent=5 // pred_check_branch
      %125 = sbr.rel (%p123) target = $region20
    $region19: #{conv_forward.1} parent=5 // pred_region
      // Predicated region
      $region21: #{conv_forward.1} parent=19 // pred_check
        %p126 = pneg %p40
      $region22: #{conv_forward.1} parent=19 // pred_check_branch
        %128 = sbr.rel (%p126) target = $region24
      $region23: #{conv_forward.1} parent=19 // pred_region
        %p129 = scmp.lt.s32.totalorder %s15, 1
        %s130 = scalar_select %p129, %s15, 1
        %s131 = smul.addr %s130, 43
        %s132 = smul.addr %s131, 4
        %s133 = scalar_lea.vmem %s0, %s132
      $region24: #{conv_forward.1} parent=19 // pred_fallthru
        _
    $region20: #{conv_forward.1} parent=5 // pred_fallthru
      _
    %p134 = scmp.le.s32.totalorder 1, %s8
    %p135 = scmp.lt.s32.totalorder %s8, 3
    %p136 = pnand %p134, %p135
    %p137 = pneg %p136
    // Predicated region
    $region25: #{conv_forward.1} parent=5 // pred_check
      _
    $region26: #{conv_forward.1} parent=5 // pred_check_branch
      %139 = sbr.rel (%p136) target = $region28
    $region27: #{conv_forward.1} parent=5 // pred_region
      %s140 = ssub.s32 %s8, 1
      %p141 = scmp.lt.s32.totalorder %s17, 1
      %s142 = scalar_select %p141, %s17, 1
      %s143 = smul.addr %s142, 43
      %s144 = smul.addr %s143, 4
      %s145 = scalar_lea.vmem %s0, %s144
      %p146 = pneg %p46
      %p147 = pneg %p43
      %p148 = scmp.lt.s32.totalorder %s18, 0
      %s149 = scalar_select %p148, %s18, 0
      %s150 = smul.addr %s149, 4
      %s151 = scalar_lea.vmem %s1, %s150
      %p152 = pneg %p72
      %p153 = pneg %p69
      %p154 = pneg %p100
      %p155 = pneg %p97
      %p156 = scmp.lt.s32.totalorder %s17, 1
      %s157 = scalar_select %p156, %s17, 1
      %p158 = scmp.lt.s32.totalorder %s18, 0
      %s159 = scalar_select %p158, %s18, 0
      %s160 = smul.addr %s157, 36
      %s161 = sadd.s32 %s159, %s160
      %s162 = smul.addr %s161, 8
      %s163 = scalar_lea.vmem %s2, %s162
      %p164 = scmp.lt.s32.totalorder %s17, 1
      %s165 = scalar_select %p164, %s17, 1
      %s166 = smul.addr %s165, 43
      %s167 = smul.addr %s166, 4
      %s168 = scalar_lea.vmem %s0, %s167
      %p169 = scmp.lt.s32.totalorder %s18, 0
      %s170 = scalar_select %p169, %s18, 0
      %s171 = smul.addr %s170, 4
      %s172 = scalar_lea.vmem %s1, %s171
      %p173 = scmp.lt.s32.totalorder %s17, 1
      %s174 = scalar_select %p173, %s17, 1
      %p175 = scmp.lt.s32.totalorder %s18, 0
      %s176 = scalar_select %p175, %s18, 0
      %s177 = smul.addr %s174, 36
      %s178 = sadd.s32 %s176, %s177
      %s179 = smul.addr %s178, 8
      %s180 = scalar_lea.vmem %s2, %s179
      %v182 = vld [vmem:[%s168] sm:$0xf]
      %v183 = vld [vmem:[%s168 + $0x4] sm:$0xf]
      %v184 = vld [vmem:[%s168 + $0x8] sm:$0xf]
      %v185 = vld [vmem:[%s168 + $0xc] sm:$0xf]
      %v186 = vld [vmem:[%s168 + $0x10] sm:$0xf]
      %v187 = vld [vmem:[%s168 + $0x14] sm:$0xf]
      %v188 = vld [vmem:[%s168 + $0x18] sm:$0xf]
      %v189 = vld [vmem:[%s168 + $0x1c] sm:$0xf]
      %v190 = vld [vmem:[%s168 + $0x20] sm:$0xf]
      %v191 = vld [vmem:[%s168 + $0x24] sm:$0xf]
      %v192 = vld [vmem:[%s168 + $0x28] sm:$0xf]
      %v193 = vld [vmem:[%s168 + $0x2c] sm:$0xf]
      %v194 = vld [vmem:[%s168 + $0x30] sm:$0xf]
      %v195 = vld [vmem:[%s168 + $0x34] sm:$0xf]
      %v196 = vld [vmem:[%s168 + $0x38] sm:$0xf]
      %v197 = vld [vmem:[%s168 + $0x3c] sm:$0xf]
      %v198 = vld [vmem:[%s168 + $0x40] sm:$0xf]
      %v199 = vld [vmem:[%s168 + $0x44] sm:$0xf]
      %v200 = vld [vmem:[%s168 + $0x48] sm:$0xf]
      %v201 = vld [vmem:[%s168 + $0x4c] sm:$0xf]
      %v202 = vld [vmem:[%s168 + $0x50] sm:$0xf]
      %v203 = vld [vmem:[%s168 + $0x54] sm:$0xf]
      %v204 = vld [vmem:[%s168 + $0x58] sm:$0xf]
      %v205 = vld [vmem:[%s168 + $0x5c] sm:$0xf]
      %v206 = vld [vmem:[%s168 + $0x60] sm:$0xf]
      %v207 = vld [vmem:[%s168 + $0x64] sm:$0xf]
      %v208 = vld [vmem:[%s168 + $0x68] sm:$0xf]
      %v209 = vld [vmem:[%s168 + $0x6c] sm:$0xf]
      %v210 = vld [vmem:[%s168 + $0x70] sm:$0xf]
      %v211 = vld [vmem:[%s168 + $0x74] sm:$0xf]
      %v212 = vld [vmem:[%s168 + $0x78] sm:$0xf]
      %v213 = vld [vmem:[%s168 + $0x7c] sm:$0xf]
      %v214 = vld [vmem:[%s168 + $0x80] sm:$0xf]
      %v215 = vld [vmem:[%s168 + $0x84] sm:$0xf]
      %v216 = vld [vmem:[%s168 + $0x88] sm:$0xf]
      %v217 = vld [vmem:[%s168 + $0x8c] sm:$0xf]
      %v218 = vld [vmem:[%s172] sm:$0xf]
      %v219 = vld [vmem:[%s168 + $0x90] sm:$0x1]
      %s220 = scalar_lea.vmem %s172, 4
      %v221 = vld [vmem:[%s220] sm:$0xf]
      %v259 = vunpack.c.l.b16 %v182
      %v260 = vunpack.c.l.b16 %v183
      %v261 = vunpack.c.l.b16 %v184
      %v262 = vunpack.c.l.b16 %v185
      %v263 = vunpack.c.l.b16 %v186
      %v264 = vunpack.c.l.b16 %v187
      %v265 = vunpack.c.l.b16 %v188
      %v266 = vunpack.c.l.b16 %v189
      %v267 = vunpack.c.l.b16 %v190
      %v268 = vunpack.c.l.b16 %v191
      %v269 = vunpack.c.l.b16 %v192
      %v270 = vunpack.c.l.b16 %v193
      %v271 = vunpack.c.l.b16 %v194
      %v272 = vunpack.c.l.b16 %v195
      %v273 = vunpack.c.l.b16 %v196
      %v274 = vunpack.c.l.b16 %v197
      %v275 = vunpack.c.l.b16 %v198
      %v276 = vunpack.c.l.b16 %v199
      %v277 = vunpack.c.l.b16 %v200
      %v278 = vunpack.c.l.b16 %v201
      %v279 = vunpack.c.l.b16 %v202
      %v280 = vunpack.c.l.b16 %v203
      %v281 = vunpack.c.l.b16 %v204
      %v282 = vunpack.c.l.b16 %v205
      %v283 = vunpack.c.l.b16 %v206
      %v284 = vunpack.c.l.b16 %v207
      %v285 = vunpack.c.l.b16 %v208
      %v286 = vunpack.c.l.b16 %v209
      %v287 = vunpack.c.l.b16 %v210
      %v288 = vunpack.c.l.b16 %v211
      %v289 = vunpack.c.l.b16 %v212
      %v290 = vunpack.c.l.b16 %v213
      %v291 = vunpack.c.l.b16 %v214
      %v292 = vunpack.c.l.b16 %v215
      %v293 = vunpack.c.l.b16 %v216
      %v294 = vunpack.c.l.b16 %v217
      %v295 = vunpack.c.l.b16 %v219
      %v296 = vpack.c.b16 %v260, %v259
      %v297 = vpack.c.b16 %v262, %v261
      %v298 = vpack.c.b16 %v264, %v263
      %v299 = vpack.c.b16 %v266, %v265
      %v300 = vpack.c.b16 %v268, %v267
      %v301 = vpack.c.b16 %v270, %v269
      %v302 = vpack.c.b16 %v272, %v271
      %v303 = vpack.c.b16 %v274, %v273
      %v304 = vpack.c.b16 %v276, %v275
      %v305 = vpack.c.b16 %v278, %v277
      %v306 = vpack.c.b16 %v280, %v279
      %v307 = vpack.c.b16 %v282, %v281
      %v308 = vpack.c.b16 %v284, %v283
      %v309 = vpack.c.b16 %v286, %v285
      %v310 = vpack.c.b16 %v288, %v287
      %v311 = vpack.c.b16 %v290, %v289
      %v312 = vpack.c.b16 %v292, %v291
      %v313 = vpack.c.b16 %v294, %v293
      %v314 = vpack.c.b16 %v295, %v295
      %vm315 = vsmask.f32 7424
      %v317 = vshrl.u32 %v296, 16
      %v319 = vshll.u32 %v296, 16
      %v321 = vrot.slane %v319, 1
      %v322 = vor.u32 %v317, %v321
      %v324 = vshll.u32 %v297, 16
      %v326 = vrot.slane %v324, 1
      %v327 = vsel %vm315, %v322, %v326
      %v328 = vshrl.u32 %v297, 16
      %v330 = vor.u32 %v328, %v326
      %v332 = vshll.u32 %v298, 16
      %v334 = vrot.slane %v332, 1
      %v335 = vsel %vm315, %v330, %v334
      %v336 = vshrl.u32 %v298, 16
      %v338 = vor.u32 %v336, %v334
      %v340 = vshll.u32 %v299, 16
      %v342 = vrot.slane %v340, 1
      %v343 = vsel %vm315, %v338, %v342
      %v344 = vshrl.u32 %v299, 16
      %v346 = vor.u32 %v344, %v342
      %v348 = vshll.u32 %v300, 16
      %v350 = vrot.slane %v348, 1
      %v351 = vsel %vm315, %v346, %v350
      %v352 = vshrl.u32 %v300, 16
      %v354 = vor.u32 %v352, %v350
      %v356 = vshll.u32 %v301, 16
      %v358 = vrot.slane %v356, 1
      %v359 = vsel %vm315, %v354, %v358
      %v360 = vshrl.u32 %v301, 16
      %v362 = vor.u32 %v360, %v358
      %v364 = vshll.u32 %v302, 16
      %v366 = vrot.slane %v364, 1
      %v367 = vsel %vm315, %v362, %v366
      %v368 = vshrl.u32 %v302, 16
      %v370 = vor.u32 %v368, %v366
      %v372 = vshll.u32 %v303, 16
      %v374 = vrot.slane %v372, 1
      %v375 = vsel %vm315, %v370, %v374
      %v376 = vshrl.u32 %v303, 16
      %v378 = vor.u32 %v376, %v374
      %v380 = vshll.u32 %v304, 16
      %v382 = vrot.slane %v380, 1
      %v383 = vsel %vm315, %v378, %v382
      %v384 = vshrl.u32 %v304, 16
      %v386 = vor.u32 %v384, %v382
      %v388 = vshll.u32 %v305, 16
      %v390 = vrot.slane %v388, 1
      %v391 = vsel %vm315, %v386, %v390
      %v392 = vshrl.u32 %v305, 16
      %v394 = vor.u32 %v392, %v390
      %v396 = vshll.u32 %v306, 16
      %v398 = vrot.slane %v396, 1
      %v399 = vsel %vm315, %v394, %v398
      %v400 = vshrl.u32 %v306, 16
      %v402 = vor.u32 %v400, %v398
      %v404 = vshll.u32 %v307, 16
      %v406 = vrot.slane %v404, 1
      %v407 = vsel %vm315, %v402, %v406
      %v408 = vshrl.u32 %v307, 16
      %v410 = vor.u32 %v408, %v406
      %v412 = vshll.u32 %v308, 16
      %v414 = vrot.slane %v412, 1
      %v415 = vsel %vm315, %v410, %v414
      %v416 = vshrl.u32 %v308, 16
      %v418 = vor.u32 %v416, %v414
      %v420 = vshll.u32 %v309, 16
      %v422 = vrot.slane %v420, 1
      %v423 = vsel %vm315, %v418, %v422
      %v424 = vshrl.u32 %v309, 16
      %v426 = vor.u32 %v424, %v422
      %v428 = vshll.u32 %v310, 16
      %v430 = vrot.slane %v428, 1
      %v431 = vsel %vm315, %v426, %v430
      %v432 = vshrl.u32 %v310, 16
      %v434 = vor.u32 %v432, %v430
      %v436 = vshll.u32 %v311, 16
      %v438 = vrot.slane %v436, 1
      %v439 = vsel %vm315, %v434, %v438
      %v440 = vshrl.u32 %v311, 16
      %v442 = vor.u32 %v440, %v438
      %v444 = vshll.u32 %v312, 16
      %v446 = vrot.slane %v444, 1
      %v447 = vsel %vm315, %v442, %v446
      %v448 = vshrl.u32 %v312, 16
      %v450 = vor.u32 %v448, %v446
      %v452 = vshll.u32 %v313, 16
      %v454 = vrot.slane %v452, 1
      %v455 = vsel %vm315, %v450, %v454
      %v456 = vshrl.u32 %v313, 16
      %v458 = vor.u32 %v456, %v454
      %v460 = vshll.u32 %v314, 16
      %v462 = vrot.slane %v460, 1
      %v463 = vsel %vm315, %v458, %v462
      %vm464 = vcmask 64512
      %v466 = vsel %vm464, %v327, 0
      %v469 = vsel %vm464, %v335, 0
      %v472 = vsel %vm464, %v343, 0
      %v475 = vsel %vm464, %v351, 0
      %v478 = vsel %vm464, %v359, 0
      %v481 = vsel %vm464, %v367, 0
      %v484 = vsel %vm464, %v375, 0
      %v487 = vsel %vm464, %v383, 0
      %v490 = vsel %vm464, %v391, 0
      %v493 = vsel %vm464, %v399, 0
      %v496 = vsel %vm464, %v407, 0
      %v499 = vsel %vm464, %v415, 0
      %v502 = vsel %vm464, %v423, 0
      %v505 = vsel %vm464, %v431, 0
      %v508 = vsel %vm464, %v439, 0
      %v511 = vsel %vm464, %v447, 0
      %v514 = vsel %vm464, %v455, 0
      %v517 = vsel %vm464, %v463, 0
      %vm519 = vcmask 1043456
      %v521 = vsel %vm519, %v221, 0
      %523 = vmatprep.subr.bf16.mxu0 0
      %524 = vmatpush1.bf16.msra.mxu0 %v521
      %525 = vmatprep.subr.bf16.mxu0 0
      %526 = vmatpush1.bf16.msra.mxu0 0
      %527 = vmatprep.subr.bf16.mxu0 0
      %528 = vmatpush1.bf16.msra.mxu0 0
      %529 = vmatprep.subr.bf16.mxu0 0
      %530 = vmatpush1.bf16.msra.mxu0 0
      %531 = vmatprep.subr.bf16.mxu0 0
      %532 = vmatpush1.bf16.msra.mxu0 0
      %533 = vmatprep.subr.bf16.mxu0 0
      %534 = vmatpush1.bf16.msra.mxu0 0
      %535 = vmatprep.subr.bf16.mxu0 0
      %536 = vmatpush1.bf16.msra.mxu0 0
      %537 = vmatprep.subr.bf16.mxu0 0
      %538 = vmatpush1.bf16.msra.mxu0 0
      %539 = vmatprep.subr.bf16.mxu0 0
      %540 = vmatpush1.bf16.msra.mxu0 0
      %541 = vmatprep.subr.bf16.mxu0 0
      %542 = vmatpush1.bf16.msra.mxu0 0
      %543 = vmatprep.subr.bf16.mxu0 0
      %544 = vmatpush1.bf16.msra.mxu0 0
      %545 = vmatprep.subr.bf16.mxu0 0
      %546 = vmatpush1.bf16.msra.mxu0 0
      %547 = vmatprep.subr.bf16.mxu0 0
      %548 = vmatpush1.bf16.msra.mxu0 0
      %549 = vmatprep.subr.bf16.mxu0 0
      %550 = vmatpush1.bf16.msra.mxu0 0
      %551 = vmatprep.subr.bf16.mxu0 0
      %552 = vmatpush1.bf16.msra.mxu0 0
      %553 = vmatprep.subr.bf16.mxu0 0
      %554 = vmatpush1.bf16.msra.mxu0 0
      %555 = vmatprep.mubr.bf16.mxu0 0
      %556 = vmatmul.mubr.bf16.gmra.mrb[0].mxu0 %v466
      %v557 = vpop.f32.mrb[0].mxu0
      %v558 = vadd.f32 0.0, %v557
      %v559 = vpop.f32.mrb[0].mxu0
      %v560 = vpop.f32.mrb[0].mxu0
      %v561 = vadd.f32 0.0, %v560
      %v562 = vpop.f32.mrb[0].mxu0
      %563 = vmatprep.mubr.bf16.mxu0 0
      %564 = vmatmul.mubr.bf16.gmra.mrb[0].mxu0 %v469
      %v565 = vpop.f32.mrb[0].mxu0
      %v566 = vadd.f32 0.0, %v565
      %v567 = vpop.f32.mrb[0].mxu0
      %v568 = vpop.f32.mrb[0].mxu0
      %v569 = vadd.f32 0.0, %v568
      %v570 = vpop.f32.mrb[0].mxu0
      %571 = vmatprep.mubr.bf16.mxu0 0
      %572 = vmatmul.mubr.bf16.gmra.mrb[0].mxu0 %v472
      %v573 = vpop.f32.mrb[0].mxu0
      %v574 = vadd.f32 0.0, %v573
      %v575 = vpop.f32.mrb[0].mxu0
      %v576 = vpop.f32.mrb[0].mxu0
      %v577 = vadd.f32 0.0, %v576
      %v578 = vpop.f32.mrb[0].mxu0
      %579 = vmatprep.mubr.bf16.mxu0 0
      %580 = vmatmul.mubr.bf16.gmra.mrb[0].mxu0 %v475
      %v581 = vpop.f32.mrb[0].mxu0
      %v582 = vadd.f32 0.0, %v581
      %v583 = vpop.f32.mrb[0].mxu0
      %v584 = vpop.f32.mrb[0].mxu0
      %v585 = vadd.f32 0.0, %v584
      %v586 = vpop.f32.mrb[0].mxu0
      %587 = vmatprep.mubr.bf16.mxu0 0
      %588 = vmatmul.mubr.bf16.gmra.mrb[0].mxu0 %v478
      %v589 = vpop.f32.mrb[0].mxu0
      %v590 = vadd.f32 0.0, %v589
      %v591 = vpop.f32.mrb[0].mxu0
      %v592 = vpop.f32.mrb[0].mxu0
      %v593 = vadd.f32 0.0, %v592
      %v594 = vpop.f32.mrb[0].mxu0
      %595 = vmatprep.mubr.bf16.mxu0 0
      %596 = vmatmul.mubr.bf16.gmra.mrb[0].mxu0 %v481
      %v597 = vpop.f32.mrb[0].mxu0
      %v598 = vadd.f32 0.0, %v597
      %v599 = vpop.f32.mrb[0].mxu0
      %v600 = vpop.f32.mrb[0].mxu0
      %v601 = vadd.f32 0.0, %v600
      %v602 = vpop.f32.mrb[0].mxu0
      %603 = vmatprep.mubr.bf16.mxu0 0
      %604 = vmatmul.mubr.bf16.gmra.mrb[0].mxu0 %v484
      %v605 = vpop.f32.mrb[0].mxu0
      %v606 = vadd.f32 0.0, %v605
      %v607 = vpop.f32.mrb[0].mxu0
      %v608 = vpop.f32.mrb[0].mxu0
      %v609 = vadd.f32 0.0, %v608
      %v610 = vpop.f32.mrb[0].mxu0
      %611 = vmatprep.mubr.bf16.mxu0 0
      %612 = vmatmul.mubr.bf16.gmra.mrb[0].mxu0 %v487
      %v613 = vpop.f32.mrb[0].mxu0
      %v614 = vadd.f32 0.0, %v613
      %v615 = vpop.f32.mrb[0].mxu0
      %v616 = vpop.f32.mrb[0].mxu0
      %v617 = vadd.f32 0.0, %v616
      %v618 = vpop.f32.mrb[0].mxu0
      %619 = vmatprep.mubr.bf16.mxu0 0
      %620 = vmatmul.mubr.bf16.gmra.mrb[0].mxu0 %v490
      %v621 = vpop.f32.mrb[0].mxu0
      %v622 = vadd.f32 0.0, %v621
      %v623 = vpop.f32.mrb[0].mxu0
      %v624 = vpop.f32.mrb[0].mxu0
      %v625 = vadd.f32 0.0, %v624
      %v626 = vpop.f32.mrb[0].mxu0
      %627 = vmatprep.mubr.bf16.mxu0 0
      %628 = vmatmul.mubr.bf16.gmra.mrb[0].mxu0 %v493
      %v629 = vpop.f32.mrb[0].mxu0
      %v630 = vadd.f32 0.0, %v629
      %v631 = vpop.f32.mrb[0].mxu0
      %v632 = vpop.f32.mrb[0].mxu0
      %v633 = vadd.f32 0.0, %v632
      %v634 = vpop.f32.mrb[0].mxu0
      %635 = vmatprep.mubr.bf16.mxu0 0
      %636 = vmatmul.mubr.bf16.gmra.mrb[0].mxu0 %v496
      %v637 = vpop.f32.mrb[0].mxu0
      %v638 = vadd.f32 0.0, %v637
      %v639 = vpop.f32.mrb[0].mxu0
      %v640 = vpop.f32.mrb[0].mxu0
      %v641 = vadd.f32 0.0, %v640
      %v642 = vpop.f32.mrb[0].mxu0
      %643 = vmatprep.mubr.bf16.mxu0 0
      %644 = vmatmul.mubr.bf16.gmra.mrb[0].mxu0 %v499
      %v645 = vpop.f32.mrb[0].mxu0
      %v646 = vadd.f32 0.0, %v645
      %v647 = vpop.f32.mrb[0].mxu0
      %v648 = vpop.f32.mrb[0].mxu0
      %v649 = vadd.f32 0.0, %v648
      %v650 = vpop.f32.mrb[0].mxu0
      %651 = vmatprep.mubr.bf16.mxu0 0
      %652 = vmatmul.mubr.bf16.gmra.mrb[0].mxu0 %v502
      %v653 = vpop.f32.mrb[0].mxu0
      %v654 = vadd.f32 0.0, %v653
      %v655 = vpop.f32.mrb[0].mxu0
      %v656 = vpop.f32.mrb[0].mxu0
      %v657 = vadd.f32 0.0, %v656
      %v658 = vpop.f32.mrb[0].mxu0
      %659 = vmatprep.mubr.bf16.mxu0 0
      %660 = vmatmul.mubr.bf16.gmra.mrb[0].mxu0 %v505
      %v661 = vpop.f32.mrb[0].mxu0
      %v662 = vadd.f32 0.0, %v661
      %v663 = vpop.f32.mrb[0].mxu0
      %v664 = vpop.f32.mrb[0].mxu0
      %v665 = vadd.f32 0.0, %v664
      %v666 = vpop.f32.mrb[0].mxu0
      %667 = vmatprep.mubr.bf16.mxu0 0
      %668 = vmatmul.mubr.bf16.gmra.mrb[0].mxu0 %v508
      %v669 = vpop.f32.mrb[0].mxu0
      %v670 = vadd.f32 0.0, %v669
      %v671 = vpop.f32.mrb[0].mxu0
      %v672 = vpop.f32.mrb[0].mxu0
      %v673 = vadd.f32 0.0, %v672
      %v674 = vpop.f32.mrb[0].mxu0
      %675 = vmatprep.mubr.bf16.mxu0 0
      %676 = vmatmul.mubr.bf16.gmra.mrb[0].mxu0 %v511
      %v677 = vpop.f32.mrb[0].mxu0
      %v678 = vadd.f32 0.0, %v677
      %v679 = vpop.f32.mrb[0].mxu0
      %v680 = vpop.f32.mrb[0].mxu0
      %v681 = vadd.f32 0.0, %v680
      %v682 = vpop.f32.mrb[0].mxu0
      %683 = vmatprep.mubr.bf16.mxu0 0
      %684 = vmatmul.mubr.bf16.gmra.mrb[0].mxu0 %v514
      %v685 = vpop.f32.mrb[0].mxu0
      %v686 = vadd.f32 0.0, %v685
      %v687 = vpop.f32.mrb[0].mxu0
      %v688 = vpop.f32.mrb[0].mxu0
      %v689 = vadd.f32 0.0, %v688
      %v690 = vpop.f32.mrb[0].mxu0
      %691 = vmatprep.mubr.bf16.mxu0 0
      %692 = vmatmul.mubr.bf16.gmra.mrb[0].mxu0 %v517
      %v693 = vpop.f32.mrb[0].mxu0
      %v694 = vadd.f32 0.0, %v693
      %v695 = vpop.f32.mrb[0].mxu0
      %v696 = vpop.f32.mrb[0].mxu0
      %v697 = vadd.f32 0.0, %v696
      %v698 = vpop.f32.mrb[0].mxu0
      %699 = vdwg.mxu0
      %v700 = vsel %vm464, %v296, 0
      %v702 = vsel %vm464, %v297, 0
      %v704 = vsel %vm464, %v298, 0
      %v706 = vsel %vm464, %v299, 0
      %v708 = vsel %vm464, %v300, 0
      %v710 = vsel %vm464, %v301, 0
      %v712 = vsel %vm464, %v302, 0
      %v714 = vsel %vm464, %v303, 0
      %v716 = vsel %vm464, %v304, 0
      %v718 = vsel %vm464, %v305, 0
      %v720 = vsel %vm464, %v306, 0
      %v722 = vsel %vm464, %v307, 0
      %v724 = vsel %vm464, %v308, 0
      %v726 = vsel %vm464, %v309, 0
      %v728 = vsel %vm464, %v310, 0
      %v730 = vsel %vm464, %v311, 0
      %v732 = vsel %vm464, %v312, 0
      %v734 = vsel %vm464, %v313, 0
      %v737 = vsel %vm519, %v218, 0
      %739 = vmatprep.subr.bf16.mxu0 0
      %740 = vmatpush1.bf16.msra.mxu0 %v737
      %741 = vmatprep.subr.bf16.mxu0 0
      %742 = vmatpush1.bf16.msra.mxu0 0
      %743 = vmatprep.subr.bf16.mxu0 0
      %744 = vmatpush1.bf16.msra.mxu0 0
      %745 = vmatprep.subr.bf16.mxu0 0
      %746 = vmatpush1.bf16.msra.mxu0 0
      %747 = vmatprep.subr.bf16.mxu0 0
      %748 = vmatpush1.bf16.msra.mxu0 0
      %749 = vmatprep.subr.bf16.mxu0 0
      %750 = vmatpush1.bf16.msra.mxu0 0
      %751 = vmatprep.subr.bf16.mxu0 0
      %752 = vmatpush1.bf16.msra.mxu0 0
      %753 = vmatprep.subr.bf16.mxu0 0
      %754 = vmatpush1.bf16.msra.mxu0 0
      %755 = vmatprep.subr.bf16.mxu0 0
      %756 = vmatpush1.bf16.msra.mxu0 0
      %757 = vmatprep.subr.bf16.mxu0 0
      %758 = vmatpush1.bf16.msra.mxu0 0
      %759 = vmatprep.subr.bf16.mxu0 0
      %760 = vmatpush1.bf16.msra.mxu0 0
      %761 = vmatprep.subr.bf16.mxu0 0
      %762 = vmatpush1.bf16.msra.mxu0 0
      %763 = vmatprep.subr.bf16.mxu0 0
      %764 = vmatpush1.bf16.msra.mxu0 0
      %765 = vmatprep.subr.bf16.mxu0 0
      %766 = vmatpush1.bf16.msra.mxu0 0
      %767 = vmatprep.subr.bf16.mxu0 0
      %768 = vmatpush1.bf16.msra.mxu0 0
      %769 = vmatprep.subr.bf16.mxu0 0
      %770 = vmatpush1.bf16.msra.mxu0 0
      %771 = vmatprep.mubr.bf16.mxu0 0
      %772 = vmatmul.mubr.bf16.gmra.mrb[0].mxu0 %v700
      %v773 = vpop.f32.mrb[0].mxu0
      %v774 = vadd.f32 %v558, %v773
      %v775 = vpop.f32.mrb[0].mxu0
      %v776 = vpop.f32.mrb[0].mxu0
      %v777 = vadd.f32 %v561, %v776
      %v778 = vpop.f32.mrb[0].mxu0
      %779 = vmatprep.mubr.bf16.mxu0 0
      %780 = vmatmul.mubr.bf16.gmra.mrb[0].mxu0 %v702
      %v781 = vpop.f32.mrb[0].mxu0
      %v782 = vadd.f32 %v566, %v781
      %v783 = vpop.f32.mrb[0].mxu0
      %v784 = vpop.f32.mrb[0].mxu0
      %v785 = vadd.f32 %v569, %v784
      %v786 = vpop.f32.mrb[0].mxu0
      %787 = vmatprep.mubr.bf16.mxu0 0
      %788 = vmatmul.mubr.bf16.gmra.mrb[0].mxu0 %v704
      %v789 = vpop.f32.mrb[0].mxu0
      %v790 = vadd.f32 %v574, %v789
      %v791 = vpop.f32.mrb[0].mxu0
      %v792 = vpop.f32.mrb[0].mxu0
      %v793 = vadd.f32 %v577, %v792
      %v794 = vpop.f32.mrb[0].mxu0
      %795 = vmatprep.mubr.bf16.mxu0 0
      %796 = vmatmul.mubr.bf16.gmra.mrb[0].mxu0 %v706
      %v797 = vpop.f32.mrb[0].mxu0
      %v798 = vadd.f32 %v582, %v797
      %v799 = vpop.f32.mrb[0].mxu0
      %v800 = vpop.f32.mrb[0].mxu0
      %v801 = vadd.f32 %v585, %v800
      %v802 = vpop.f32.mrb[0].mxu0
      %803 = vmatprep.mubr.bf16.mxu0 0
      %804 = vmatmul.mubr.bf16.gmra.mrb[0].mxu0 %v708
      %v805 = vpop.f32.mrb[0].mxu0
      %v806 = vadd.f32 %v590, %v805
      %v807 = vpop.f32.mrb[0].mxu0
      %v808 = vpop.f32.mrb[0].mxu0
      %v809 = vadd.f32 %v593, %v808
      %v810 = vpop.f32.mrb[0].mxu0
      %811 = vmatprep.mubr.bf16.mxu0 0
      %812 = vmatmul.mubr.bf16.gmra.mrb[0].mxu0 %v710
      %v813 = vpop.f32.mrb[0].mxu0
      %v814 = vadd.f32 %v598, %v813
      %v815 = vpop.f32.mrb[0].mxu0
      %v816 = vpop.f32.mrb[0].mxu0
      %v817 = vadd.f32 %v601, %v816
      %v818 = vpop.f32.mrb[0].mxu0
      %819 = vmatprep.mubr.bf16.mxu0 0
      %820 = vmatmul.mubr.bf16.gmra.mrb[0].mxu0 %v712
      %v821 = vpop.f32.mrb[0].mxu0
      %v822 = vadd.f32 %v606, %v821
      %v823 = vpop.f32.mrb[0].mxu0
      %v824 = vpop.f32.mrb[0].mxu0
      %v825 = vadd.f32 %v609, %v824
      %v826 = vpop.f32.mrb[0].mxu0
      %827 = vmatprep.mubr.bf16.mxu0 0
      %828 = vmatmul.mubr.bf16.gmra.mrb[0].mxu0 %v714
      %v829 = vpop.f32.mrb[0].mxu0
      %v830 = vadd.f32 %v614, %v829
      %v831 = vpop.f32.mrb[0].mxu0
      %v832 = vpop.f32.mrb[0].mxu0
      %v833 = vadd.f32 %v617, %v832
      %v834 = vpop.f32.mrb[0].mxu0
      %835 = vmatprep.mubr.bf16.mxu0 0
      %836 = vmatmul.mubr.bf16.gmra.mrb[0].mxu0 %v716
      %v837 = vpop.f32.mrb[0].mxu0
      %v838 = vadd.f32 %v622, %v837
      %v839 = vpop.f32.mrb[0].mxu0
      %v840 = vpop.f32.mrb[0].mxu0
      %v841 = vadd.f32 %v625, %v840
      %v842 = vpop.f32.mrb[0].mxu0
      %843 = vmatprep.mubr.bf16.mxu0 0
      %844 = vmatmul.mubr.bf16.gmra.mrb[0].mxu0 %v718
      %v845 = vpop.f32.mrb[0].mxu0
      %v846 = vadd.f32 %v630, %v845
      %v847 = vpop.f32.mrb[0].mxu0
      %v848 = vpop.f32.mrb[0].mxu0
      %v849 = vadd.f32 %v633, %v848
      %v850 = vpop.f32.mrb[0].mxu0
      %851 = vmatprep.mubr.bf16.mxu0 0
      %852 = vmatmul.mubr.bf16.gmra.mrb[0].mxu0 %v720
      %v853 = vpop.f32.mrb[0].mxu0
      %v854 = vadd.f32 %v638, %v853
      %v855 = vpop.f32.mrb[0].mxu0
      %v856 = vpop.f32.mrb[0].mxu0
      %v857 = vadd.f32 %v641, %v856
      %v858 = vpop.f32.mrb[0].mxu0
      %859 = vmatprep.mubr.bf16.mxu0 0
      %860 = vmatmul.mubr.bf16.gmra.mrb[0].mxu0 %v722
      %v861 = vpop.f32.mrb[0].mxu0
      %v862 = vadd.f32 %v646, %v861
      %v863 = vpop.f32.mrb[0].mxu0
      %v864 = vpop.f32.mrb[0].mxu0
      %v865 = vadd.f32 %v649, %v864
      %v866 = vpop.f32.mrb[0].mxu0
      %867 = vmatprep.mubr.bf16.mxu0 0
      %868 = vmatmul.mubr.bf16.gmra.mrb[0].mxu0 %v724
      %v869 = vpop.f32.mrb[0].mxu0
      %v870 = vadd.f32 %v654, %v869
      %v871 = vpop.f32.mrb[0].mxu0
      %v872 = vpop.f32.mrb[0].mxu0
      %v873 = vadd.f32 %v657, %v872
      %v874 = vpop.f32.mrb[0].mxu0
      %875 = vmatprep.mubr.bf16.mxu0 0
      %876 = vmatmul.mubr.bf16.gmra.mrb[0].mxu0 %v726
      %v877 = vpop.f32.mrb[0].mxu0
      %v878 = vadd.f32 %v662, %v877
      %v879 = vpop.f32.mrb[0].mxu0
      %v880 = vpop.f32.mrb[0].mxu0
      %v881 = vadd.f32 %v665, %v880
      %v882 = vpop.f32.mrb[0].mxu0
      %883 = vmatprep.mubr.bf16.mxu0 0
      %884 = vmatmul.mubr.bf16.gmra.mrb[0].mxu0 %v728
      %v885 = vpop.f32.mrb[0].mxu0
      %v886 = vadd.f32 %v670, %v885
      %v887 = vpop.f32.mrb[0].mxu0
      %v888 = vpop.f32.mrb[0].mxu0
      %v889 = vadd.f32 %v673, %v888
      %v890 = vpop.f32.mrb[0].mxu0
      %891 = vmatprep.mubr.bf16.mxu0 0
      %892 = vmatmul.mubr.bf16.gmra.mrb[0].mxu0 %v730
      %v893 = vpop.f32.mrb[0].mxu0
      %v894 = vadd.f32 %v678, %v893
      %v895 = vpop.f32.mrb[0].mxu0
      %v896 = vpop.f32.mrb[0].mxu0
      %v897 = vadd.f32 %v681, %v896
      %v898 = vpop.f32.mrb[0].mxu0
      %899 = vmatprep.mubr.bf16.mxu0 0
      %900 = vmatmul.mubr.bf16.gmra.mrb[0].mxu0 %v732
      %v901 = vpop.f32.mrb[0].mxu0
      %v902 = vadd.f32 %v686, %v901
      %v903 = vpop.f32.mrb[0].mxu0
      %v904 = vpop.f32.mrb[0].mxu0
      %v905 = vadd.f32 %v689, %v904
      %v906 = vpop.f32.mrb[0].mxu0
      %907 = vmatprep.mubr.bf16.mxu0 0
      %908 = vmatmul.mubr.bf16.gmra.mrb[0].mxu0 %v734
      %v909 = vpop.f32.mrb[0].mxu0
      %v910 = vadd.f32 %v694, %v909
      %v911 = vpop.f32.mrb[0].mxu0
      %v912 = vpop.f32.mrb[0].mxu0
      %v913 = vadd.f32 %v697, %v912
      %v914 = vpop.f32.mrb[0].mxu0
      %915 = vdwg.mxu0
      %v916 = vld [vmem:[%s168] sm:$0xe]
      %s917 = scalar_lea.vmem %s172, 8
      %v918 = vld [vmem:[%s917] sm:$0xf]
      %v920 = vunpack.c.l.b16 %v916
      %v921 = vpack.c.b16 %v260, %v920
      %vm922 = vcmask 1046528
      %v923 = vrot.slane %v921, 1
      %v924 = vrot.slane %v297, 1
      %v925 = vsel %vm922, %v923, %v924
      %v926 = vrot.slane %v298, 1
      %v927 = vsel %vm922, %v924, %v926
      %v928 = vrot.slane %v299, 1
      %v929 = vsel %vm922, %v926, %v928
      %v930 = vrot.slane %v300, 1
      %v931 = vsel %vm922, %v928, %v930
      %v932 = vrot.slane %v301, 1
      %v933 = vsel %vm922, %v930, %v932
      %v934 = vrot.slane %v302, 1
      %v935 = vsel %vm922, %v932, %v934
      %v936 = vrot.slane %v303, 1
      %v937 = vsel %vm922, %v934, %v936
      %v938 = vrot.slane %v304, 1
      %v939 = vsel %vm922, %v936, %v938
      %v940 = vrot.slane %v305, 1
      %v941 = vsel %vm922, %v938, %v940
      %v942 = vrot.slane %v306, 1
      %v943 = vsel %vm922, %v940, %v942
      %v944 = vrot.slane %v307, 1
      %v945 = vsel %vm922, %v942, %v944
      %v946 = vrot.slane %v308, 1
      %v947 = vsel %vm922, %v944, %v946
      %v948 = vrot.slane %v309, 1
      %v949 = vsel %vm922, %v946, %v948
      %v950 = vrot.slane %v310, 1
      %v951 = vsel %vm922, %v948, %v950
      %v952 = vrot.slane %v311, 1
      %v953 = vsel %vm922, %v950, %v952
      %v954 = vrot.slane %v312, 1
      %v955 = vsel %vm922, %v952, %v954
      %v956 = vrot.slane %v313, 1
      %v957 = vsel %vm922, %v954, %v956
      %v958 = vrot.slane %v314, 1
      %v959 = vsel %vm922, %v956, %v958
      %v961 = vsel %vm464, %v925, 0
      %v964 = vsel %vm464, %v927, 0
      %v967 = vsel %vm464, %v929, 0
      %v970 = vsel %vm464, %v931, 0
      %v973 = vsel %vm464, %v933, 0
      %v976 = vsel %vm464, %v935, 0
      %v979 = vsel %vm464, %v937, 0
      %v982 = vsel %vm464, %v939, 0
      %v985 = vsel %vm464, %v941, 0
      %v988 = vsel %vm464, %v943, 0
      %v991 = vsel %vm464, %v945, 0
      %v994 = vsel %vm464, %v947, 0
      %v997 = vsel %vm464, %v949, 0
      %v1000 = vsel %vm464, %v951, 0
      %v1003 = vsel %vm464, %v953, 0
      %v1006 = vsel %vm464, %v955, 0
      %v1009 = vsel %vm464, %v957, 0
      %v1012 = vsel %vm464, %v959, 0
      %v1015 = vsel %vm519, %v918, 0
      %1017 = vmatprep.subr.bf16.mxu0 0
      %1018 = vmatpush1.bf16.msra.mxu0 %v1015
      %1019 = vmatprep.subr.bf16.mxu0 0
      %1020 = vmatpush1.bf16.msra.mxu0 0
      %1021 = vmatprep.subr.bf16.mxu0 0
      %1022 = vmatpush1.bf16.msra.mxu0 0
      %1023 = vmatprep.subr.bf16.mxu0 0
      %1024 = vmatpush1.bf16.msra.mxu0 0
      %1025 = vmatprep.subr.bf16.mxu0 0
      %1026 = vmatpush1.bf16.msra.mxu0 0
      %1027 = vmatprep.subr.bf16.mxu0 0
      %1028 = vmatpush1.bf16.msra.mxu0 0
      %1029 = vmatprep.subr.bf16.mxu0 0
      %1030 = vmatpush1.bf16.msra.mxu0 0
      %1031 = vmatprep.subr.bf16.mxu0 0
      %1032 = vmatpush1.bf16.msra.mxu0 0
      %1033 = vmatprep.subr.bf16.mxu0 0
      %1034 = vmatpush1.bf16.msra.mxu0 0
      %1035 = vmatprep.subr.bf16.mxu0 0
      %1036 = vmatpush1.bf16.msra.mxu0 0
      %1037 = vmatprep.subr.bf16.mxu0 0
      %1038 = vmatpush1.bf16.msra.mxu0 0
      %1039 = vmatprep.subr.bf16.mxu0 0
      %1040 = vmatpush1.bf16.msra.mxu0 0
      %1041 = vmatprep.subr.bf16.mxu0 0
      %1042 = vmatpush1.bf16.msra.mxu0 0
      %1043 = vmatprep.subr.bf16.mxu0 0
      %1044 = vmatpush1.bf16.msra.mxu0 0
      %1045 = vmatprep.subr.bf16.mxu0 0
      %1046 = vmatpush1.bf16.msra.mxu0 0
      %1047 = vmatprep.subr.bf16.mxu0 0
      %1048 = vmatpush1.bf16.msra.mxu0 0
      %1049 = vmatprep.mubr.bf16.mxu0 0
      %1050 = vmatmul.mubr.bf16.gmra.mrb[0].mxu0 %v961
      %v1051 = vpop.f32.mrb[0].mxu0
      %v1052 = vadd.f32 0.0, %v1051
      %v1053 = vpop.f32.mrb[0].mxu0
      %v1054 = vpop.f32.mrb[0].mxu0
      %v1055 = vadd.f32 0.0, %v1054
      %v1056 = vpop.f32.mrb[0].mxu0
      %1057 = vmatprep.mubr.bf16.mxu0 0
      %1058 = vmatmul.mubr.bf16.gmra.mrb[0].mxu0 %v964
      %v1059 = vpop.f32.mrb[0].mxu0
      %v1060 = vadd.f32 0.0, %v1059
      %v1061 = vpop.f32.mrb[0].mxu0
      %v1062 = vpop.f32.mrb[0].mxu0
      %v1063 = vadd.f32 0.0, %v1062
      %v1064 = vpop.f32.mrb[0].mxu0
      %1065 = vmatprep.mubr.bf16.mxu0 0
      %1066 = vmatmul.mubr.bf16.gmra.mrb[0].mxu0 %v967
      %v1067 = vpop.f32.mrb[0].mxu0
      %v1068 = vadd.f32 0.0, %v1067
      %v1069 = vpop.f32.mrb[0].mxu0
      %v1070 = vpop.f32.mrb[0].mxu0
      %v1071 = vadd.f32 0.0, %v1070
      %v1072 = vpop.f32.mrb[0].mxu0
      %1073 = vmatprep.mubr.bf16.mxu0 0
      %1074 = vmatmul.mubr.bf16.gmra.mrb[0].mxu0 %v970
      %v1075 = vpop.f32.mrb[0].mxu0
      %v1076 = vadd.f32 0.0, %v1075
      %v1077 = vpop.f32.mrb[0].mxu0
      %v1078 = vpop.f32.mrb[0].mxu0
      %v1079 = vadd.f32 0.0, %v1078
      %v1080 = vpop.f32.mrb[0].mxu0
      %1081 = vmatprep.mubr.bf16.mxu0 0
      %1082 = vmatmul.mubr.bf16.gmra.mrb[0].mxu0 %v973
      %v1083 = vpop.f32.mrb[0].mxu0
      %v1084 = vadd.f32 0.0, %v1083
      %v1085 = vpop.f32.mrb[0].mxu0
      %v1086 = vpop.f32.mrb[0].mxu0
      %v1087 = vadd.f32 0.0, %v1086
      %v1088 = vpop.f32.mrb[0].mxu0
      %1089 = vmatprep.mubr.bf16.mxu0 0
      %1090 = vmatmul.mubr.bf16.gmra.mrb[0].mxu0 %v976
      %v1091 = vpop.f32.mrb[0].mxu0
      %v1092 = vadd.f32 0.0, %v1091
      %v1093 = vpop.f32.mrb[0].mxu0
      %v1094 = vpop.f32.mrb[0].mxu0
      %v1095 = vadd.f32 0.0, %v1094
      %v1096 = vpop.f32.mrb[0].mxu0
      %1097 = vmatprep.mubr.bf16.mxu0 0
      %1098 = vmatmul.mubr.bf16.gmra.mrb[0].mxu0 %v979
      %v1099 = vpop.f32.mrb[0].mxu0
      %v1100 = vadd.f32 0.0, %v1099
      %v1101 = vpop.f32.mrb[0].mxu0
      %v1102 = vpop.f32.mrb[0].mxu0
      %v1103 = vadd.f32 0.0, %v1102
      %v1104 = vpop.f32.mrb[0].mxu0
      %1105 = vmatprep.mubr.bf16.mxu0 0
      %1106 = vmatmul.mubr.bf16.gmra.mrb[0].mxu0 %v982
      %v1107 = vpop.f32.mrb[0].mxu0
      %v1108 = vadd.f32 0.0, %v1107
      %v1109 = vpop.f32.mrb[0].mxu0
      %v1110 = vpop.f32.mrb[0].mxu0
      %v1111 = vadd.f32 0.0, %v1110
      %v1112 = vpop.f32.mrb[0].mxu0
      %1113 = vmatprep.mubr.bf16.mxu0 0
      %1114 = vmatmul.mubr.bf16.gmra.mrb[0].mxu0 %v985
      %v1115 = vpop.f32.mrb[0].mxu0
      %v1116 = vadd.f32 0.0, %v1115
      %v1117 = vpop.f32.mrb[0].mxu0
      %v1118 = vpop.f32.mrb[0].mxu0
      %v1119 = vadd.f32 0.0, %v1118
      %v1120 = vpop.f32.mrb[0].mxu0
      %1121 = vmatprep.mubr.bf16.mxu0 0
      %1122 = vmatmul.mubr.bf16.gmra.mrb[0].mxu0 %v988
      %v1123 = vpop.f32.mrb[0].mxu0
      %v1124 = vadd.f32 0.0, %v1123
      %v1125 = vpop.f32.mrb[0].mxu0
      %v1126 = vpop.f32.mrb[0].mxu0
      %v1127 = vadd.f32 0.0, %v1126
      %v1128 = vpop.f32.mrb[0].mxu0
      %1129 = vmatprep.mubr.bf16.mxu0 0
      %1130 = vmatmul.mubr.bf16.gmra.mrb[0].mxu0 %v991
      %v1131 = vpop.f32.mrb[0].mxu0
      %v1132 = vadd.f32 0.0, %v1131
      %v1133 = vpop.f32.mrb[0].mxu0
      %v1134 = vpop.f32.mrb[0].mxu0
      %v1135 = vadd.f32 0.0, %v1134
      %v1136 = vpop.f32.mrb[0].mxu0
      %1137 = vmatprep.mubr.bf16.mxu0 0
      %1138 = vmatmul.mubr.bf16.gmra.mrb[0].mxu0 %v994
      %v1139 = vpop.f32.mrb[0].mxu0
      %v1140 = vadd.f32 0.0, %v1139
      %v1141 = vpop.f32.mrb[0].mxu0
      %v1142 = vpop.f32.mrb[0].mxu0
      %v1143 = vadd.f32 0.0, %v1142
      %v1144 = vpop.f32.mrb[0].mxu0
      %1145 = vmatprep.mubr.bf16.mxu0 0
      %1146 = vmatmul.mubr.bf16.gmra.mrb[0].mxu0 %v997
      %v1147 = vpop.f32.mrb[0].mxu0
      %v1148 = vadd.f32 0.0, %v1147
      %v1149 = vpop.f32.mrb[0].mxu0
      %v1150 = vpop.f32.mrb[0].mxu0
      %v1151 = vadd.f32 0.0, %v1150
      %v1152 = vpop.f32.mrb[0].mxu0
      %1153 = vmatprep.mubr.bf16.mxu0 0
      %1154 = vmatmul.mubr.bf16.gmra.mrb[0].mxu0 %v1000
      %v1155 = vpop.f32.mrb[0].mxu0
      %v1156 = vadd.f32 0.0, %v1155
      %v1157 = vpop.f32.mrb[0].mxu0
      %v1158 = vpop.f32.mrb[0].mxu0
      %v1159 = vadd.f32 0.0, %v1158
      %v1160 = vpop.f32.mrb[0].mxu0
      %1161 = vmatprep.mubr.bf16.mxu0 0
      %1162 = vmatmul.mubr.bf16.gmra.mrb[0].mxu0 %v1003
      %v1163 = vpop.f32.mrb[0].mxu0
      %v1164 = vadd.f32 0.0, %v1163
      %v1165 = vpop.f32.mrb[0].mxu0
      %v1166 = vpop.f32.mrb[0].mxu0
      %v1167 = vadd.f32 0.0, %v1166
      %v1168 = vpop.f32.mrb[0].mxu0
      %1169 = vmatprep.mubr.bf16.mxu0 0
      %1170 = vmatmul.mubr.bf16.gmra.mrb[0].mxu0 %v1006
      %v1171 = vpop.f32.mrb[0].mxu0
      %v1172 = vadd.f32 0.0, %v1171
      %v1173 = vpop.f32.mrb[0].mxu0
      %v1174 = vpop.f32.mrb[0].mxu0
      %v1175 = vadd.f32 0.0, %v1174
      %v1176 = vpop.f32.mrb[0].mxu0
      %1177 = vmatprep.mubr.bf16.mxu0 0
      %1178 = vmatmul.mubr.bf16.gmra.mrb[0].mxu0 %v1009
      %v1179 = vpop.f32.mrb[0].mxu0
      %v1180 = vadd.f32 0.0, %v1179
      %v1181 = vpop.f32.mrb[0].mxu0
      %v1182 = vpop.f32.mrb[0].mxu0
      %v1183 = vadd.f32 0.0, %v1182
      %v1184 = vpop.f32.mrb[0].mxu0
      %1185 = vmatprep.mubr.bf16.mxu0 0
      %1186 = vmatmul.mubr.bf16.gmra.mrb[0].mxu0 %v1012
      %v1187 = vpop.f32.mrb[0].mxu0
      %v1188 = vadd.f32 0.0, %v1187
      %v1189 = vpop.f32.mrb[0].mxu0
      %v1190 = vpop.f32.mrb[0].mxu0
      %v1191 = vadd.f32 0.0, %v1190
      %v1192 = vpop.f32.mrb[0].mxu0
      %1193 = vdwg.mxu0
      %v1194 = vadd.f32 %v774, %v1052
      %v1195 = vadd.f32 %v777, %v1055
      %v1196 = vadd.f32 %v782, %v1060
      %v1197 = vadd.f32 %v785, %v1063
      %v1198 = vadd.f32 %v790, %v1068
      %v1199 = vadd.f32 %v793, %v1071
      %v1200 = vadd.f32 %v798, %v1076
      %v1201 = vadd.f32 %v801, %v1079
      %v1202 = vadd.f32 %v806, %v1084
      %v1203 = vadd.f32 %v809, %v1087
      %v1204 = vadd.f32 %v814, %v1092
      %v1205 = vadd.f32 %v817, %v1095
      %v1206 = vadd.f32 %v822, %v1100
      %v1207 = vadd.f32 %v825, %v1103
      %v1208 = vadd.f32 %v830, %v1108
      %v1209 = vadd.f32 %v833, %v1111
      %v1210 = vadd.f32 %v838, %v1116
      %v1211 = vadd.f32 %v841, %v1119
      %v1212 = vadd.f32 %v846, %v1124
      %v1213 = vadd.f32 %v849, %v1127
      %v1214 = vadd.f32 %v854, %v1132
      %v1215 = vadd.f32 %v857, %v1135
      %v1216 = vadd.f32 %v862, %v1140
      %v1217 = vadd.f32 %v865, %v1143
      %v1218 = vadd.f32 %v870, %v1148
      %v1219 = vadd.f32 %v873, %v1151
      %v1220 = vadd.f32 %v878, %v1156
      %v1221 = vadd.f32 %v881, %v1159
      %v1222 = vadd.f32 %v886, %v1164
      %v1223 = vadd.f32 %v889, %v1167
      %v1224 = vadd.f32 %v894, %v1172
      %v1225 = vadd.f32 %v897, %v1175
      %v1226 = vadd.f32 %v902, %v1180
      %v1227 = vadd.f32 %v905, %v1183
      %v1228 = vadd.f32 %v910, %v1188
      %v1229 = vadd.f32 %v913, %v1191
      %v1230 = vld [vmem:[%s168 + $0x8] sm:$0xe]
      %v1231 = vld [vmem:[%s168 + $0xc] sm:$0xf]
      %v1232 = vld [vmem:[%s168 + $0x10] sm:$0xf]
      %v1233 = vld [vmem:[%s168 + $0x14] sm:$0xf]
      %v1234 = vld [vmem:[%s168 + $0x18] sm:$0xf]
      %v1235 = vld [vmem:[%s168 + $0x1c] sm:$0xf]
      %v1236 = vld [vmem:[%s168 + $0x20] sm:$0xf]
      %v1237 = vld [vmem:[%s168 + $0x24] sm:$0xf]
      %v1238 = vld [vmem:[%s168 + $0x28] sm:$0xf]
      %v1239 = vld [vmem:[%s168 + $0x2c] sm:$0xf]
      %v1240 = vld [vmem:[%s168 + $0x30] sm:$0xf]
      %v1241 = vld [vmem:[%s168 + $0x34] sm:$0xf]
      %v1242 = vld [vmem:[%s168 + $0x38] sm:$0xf]
      %v1243 = vld [vmem:[%s168 + $0x3c] sm:$0xf]
      %v1244 = vld [vmem:[%s168 + $0x40] sm:$0xf]
      %v1245 = vld [vmem:[%s168 + $0x44] sm:$0xf]
      %v1246 = vld [vmem:[%s168 + $0x48] sm:$0xf]
      %v1247 = vld [vmem:[%s168 + $0x4c] sm:$0xf]
      %v1248 = vld [vmem:[%s168 + $0x50] sm:$0xf]
      %v1249 = vld [vmem:[%s168 + $0x54] sm:$0xf]
      %v1250 = vld [vmem:[%s168 + $0x58] sm:$0xf]
      %v1251 = vld [vmem:[%s168 + $0x5c] sm:$0xf]
      %v1252 = vld [vmem:[%s168 + $0x60] sm:$0xf]
      %v1253 = vld [vmem:[%s168 + $0x64] sm:$0xf]
      %v1254 = vld [vmem:[%s168 + $0x68] sm:$0xf]
      %v1255 = vld [vmem:[%s168 + $0x6c] sm:$0xf]
      %v1256 = vld [vmem:[%s168 + $0x70] sm:$0xf]
      %v1257 = vld [vmem:[%s168 + $0x74] sm:$0xf]
      %v1258 = vld [vmem:[%s168 + $0x78] sm:$0xf]
      %v1259 = vld [vmem:[%s168 + $0x7c] sm:$0xf]
      %v1260 = vld [vmem:[%s168 + $0x80] sm:$0xf]
      %v1261 = vld [vmem:[%s168 + $0x84] sm:$0xf]
      %v1262 = vld [vmem:[%s168 + $0x88] sm:$0xf]
      %v1263 = vld [vmem:[%s168 + $0x8c] sm:$0xf]
      %v1264 = vld [vmem:[%s168 + $0x90] sm:$0xf]
      %v1265 = vld [vmem:[%s168 + $0x94] sm:$0xf]
      %v1266 = vld [vmem:[%s168 + $0x98] sm:$0x1]
      %s1267 = scalar_lea.vmem %s172, 12
      %v1268 = vld [vmem:[%s1267] sm:$0xf]
      %v1306 = vunpack.c.l.b16 %v1230
      %v1307 = vunpack.c.l.b16 %v1231
      %v1308 = vunpack.c.l.b16 %v1232
      %v1309 = vunpack.c.l.b16 %v1233
      %v1310 = vunpack.c.l.b16 %v1234
      %v1311 = vunpack.c.l.b16 %v1235
      %v1312 = vunpack.c.l.b16 %v1236
      %v1313 = vunpack.c.l.b16 %v1237
      %v1314 = vunpack.c.l.b16 %v1238
      %v1315 = vunpack.c.l.b16 %v1239
      %v1316 = vunpack.c.l.b16 %v1240
      %v1317 = vunpack.c.l.b16 %v1241
      %v1318 = vunpack.c.l.b16 %v1242
      %v1319 = vunpack.c.l.b16 %v1243
      %v1320 = vunpack.c.l.b16 %v1244
      %v1321 = vunpack.c.l.b16 %v1245
      %v1322 = vunpack.c.l.b16 %v1246
      %v1323 = vunpack.c.l.b16 %v1247
      %v1324 = vunpack.c.l.b16 %v1248
      %v1325 = vunpack.c.l.b16 %v1249
      %v1326 = vunpack.c.l.b16 %v1250
      %v1327 = vunpack.c.l.b16 %v1251
      %v1328 = vunpack.c.l.b16 %v1252
      %v1329 = vunpack.c.l.b16 %v1253
      %v1330 = vunpack.c.l.b16 %v1254
      %v1331 = vunpack.c.l.b16 %v1255
      %v1332 = vunpack.c.l.b16 %v1256
      %v1333 = vunpack.c.l.b16 %v1257
      %v1334 = vunpack.c.l.b16 %v1258
      %v1335 = vunpack.c.l.b16 %v1259
      %v1336 = vunpack.c.l.b16 %v1260
      %v1337 = vunpack.c.l.b16 %v1261
      %v1338 = vunpack.c.l.b16 %v1262
      %v1339 = vunpack.c.l.b16 %v1263
      %v1340 = vunpack.c.l.b16 %v1264
      %v1341 = vunpack.c.l.b16 %v1265
      %v1342 = vunpack.c.l.b16 %v1266
      %v1343 = vpack.c.b16 %v1307, %v1306
      %v1344 = vpack.c.b16 %v1309, %v1308
      %v1345 = vpack.c.b16 %v1311, %v1310
      %v1346 = vpack.c.b16 %v1313, %v1312
      %v1347 = vpack.c.b16 %v1315, %v1314
      %v1348 = vpack.c.b16 %v1317, %v1316
      %v1349 = vpack.c.b16 %v1319, %v1318
      %v1350 = vpack.c.b16 %v1321, %v1320
      %v1351 = vpack.c.b16 %v1323, %v1322
      %v1352 = vpack.c.b16 %v1325, %v1324
      %v1353 = vpack.c.b16 %v1327, %v1326
      %v1354 = vpack.c.b16 %v1329, %v1328
      %v1355 = vpack.c.b16 %v1331, %v1330
      %v1356 = vpack.c.b16 %v1333, %v1332
      %v1357 = vpack.c.b16 %v1335, %v1334
      %v1358 = vpack.c.b16 %v1337, %v1336
      %v1359 = vpack.c.b16 %v1339, %v1338
      %v1360 = vpack.c.b16 %v1341, %v1340
      %v1361 = vpack.c.b16 %v1342, %v1342
      %v1362 = vrot.slane %v1343, 1
      %v1363 = vrot.slane %v1344, 1
      %v1364 = vsel %vm922, %v1362, %v1363
      %v1365 = vrot.slane %v1345, 1
      %v1366 = vsel %vm922, %v1363, %v1365
      %v1367 = vrot.slane %v1346, 1
      %v1368 = vsel %vm922, %v1365, %v1367
      %v1369 = vrot.slane %v1347, 1
      %v1370 = vsel %vm922, %v1367, %v1369
      %v1371 = vrot.slane %v1348, 1
      %v1372 = vsel %vm922, %v1369, %v1371
      %v1373 = vrot.slane %v1349, 1
      %v1374 = vsel %vm922, %v1371, %v1373
      %v1375 = vrot.slane %v1350, 1
      %v1376 = vsel %vm922, %v1373, %v1375
      %v1377 = vrot.slane %v1351, 1
      %v1378 = vsel %vm922, %v1375, %v1377
      %v1379 = vrot.slane %v1352, 1
      %v1380 = vsel %vm922, %v1377, %v1379
      %v1381 = vrot.slane %v1353, 1
      %v1382 = vsel %vm922, %v1379, %v1381
      %v1383 = vrot.slane %v1354, 1
      %v1384 = vsel %vm922, %v1381, %v1383
      %v1385 = vrot.slane %v1355, 1
      %v1386 = vsel %vm922, %v1383, %v1385
      %v1387 = vrot.slane %v1356, 1
      %v1388 = vsel %vm922, %v1385, %v1387
      %v1389 = vrot.slane %v1357, 1
      %v1390 = vsel %vm922, %v1387, %v1389
      %v1391 = vrot.slane %v1358, 1
      %v1392 = vsel %vm922, %v1389, %v1391
      %v1393 = vrot.slane %v1359, 1
      %v1394 = vsel %vm922, %v1391, %v1393
      %v1395 = vrot.slane %v1360, 1
      %v1396 = vsel %vm922, %v1393, %v1395
      %v1397 = vrot.slane %v1361, 1
      %v1398 = vsel %vm922, %v1395, %v1397
      %v1400 = vsel %vm464, %v1364, 0
      %v1403 = vsel %vm464, %v1366, 0
      %v1406 = vsel %vm464, %v1368, 0
      %v1409 = vsel %vm464, %v1370, 0
      %v1412 = vsel %vm464, %v1372, 0
      %v1415 = vsel %vm464, %v1374, 0
      %v1418 = vsel %vm464, %v1376, 0
      %v1421 = vsel %vm464, %v1378, 0
      %v1424 = vsel %vm464, %v1380, 0
      %v1427 = vsel %vm464, %v1382, 0
      %v1430 = vsel %vm464, %v1384, 0
      %v1433 = vsel %vm464, %v1386, 0
      %v1436 = vsel %vm464, %v1388, 0
      %v1439 = vsel %vm464, %v1390, 0
      %v1442 = vsel %vm464, %v1392, 0
      %v1445 = vsel %vm464, %v1394, 0
      %v1448 = vsel %vm464, %v1396, 0
      %v1451 = vsel %vm464, %v1398, 0
      %v1454 = vsel %vm519, %v1268, 0
      %1456 = vmatprep.subr.bf16.mxu0 0
      %1457 = vmatpush1.bf16.msra.mxu0 %v1454
      %1458 = vmatprep.subr.bf16.mxu0 0
      %1459 = vmatpush1.bf16.msra.mxu0 0
      %1460 = vmatprep.subr.bf16.mxu0 0
      %1461 = vmatpush1.bf16.msra.mxu0 0
      %1462 = vmatprep.subr.bf16.mxu0 0
      %1463 = vmatpush1.bf16.msra.mxu0 0
      %1464 = vmatprep.subr.bf16.mxu0 0
      %1465 = vmatpush1.bf16.msra.mxu0 0
      %1466 = vmatprep.subr.bf16.mxu0 0
      %1467 = vmatpush1.bf16.msra.mxu0 0
      %1468 = vmatprep.subr.bf16.mxu0 0
      %1469 = vmatpush1.bf16.msra.mxu0 0
      %1470 = vmatprep.subr.bf16.mxu0 0
      %1471 = vmatpush1.bf16.msra.mxu0 0
      %1472 = vmatprep.subr.bf16.mxu0 0
      %1473 = vmatpush1.bf16.msra.mxu0 0
      %1474 = vmatprep.subr.bf16.mxu0 0
      %1475 = vmatpush1.bf16.msra.mxu0 0
      %1476 = vmatprep.subr.bf16.mxu0 0
      %1477 = vmatpush1.bf16.msra.mxu0 0
      %1478 = vmatprep.subr.bf16.mxu0 0
      %1479 = vmatpush1.bf16.msra.mxu0 0
      %1480 = vmatprep.subr.bf16.mxu0 0
      %1481 = vmatpush1.bf16.msra.mxu0 0
      %1482 = vmatprep.subr.bf16.mxu0 0
      %1483 = vmatpush1.bf16.msra.mxu0 0
      %1484 = vmatprep.subr.bf16.mxu0 0
      %1485 = vmatpush1.bf16.msra.mxu0 0
      %1486 = vmatprep.subr.bf16.mxu0 0
      %1487 = vmatpush1.bf16.msra.mxu0 0
      %1488 = vmatprep.mubr.bf16.mxu0 0
      %1489 = vmatmul.mubr.bf16.gmra.mrb[0].mxu0 %v1400
      %v1490 = vpop.f32.mrb[0].mxu0
      %v1491 = vadd.f32 0.0, %v1490
      %v1492 = vpop.f32.mrb[0].mxu0
      %v1493 = vpop.f32.mrb[0].mxu0
      %v1494 = vadd.f32 0.0, %v1493
      %v1495 = vpop.f32.mrb[0].mxu0
      %1496 = vmatprep.mubr.bf16.mxu0 0
      %1497 = vmatmul.mubr.bf16.gmra.mrb[0].mxu0 %v1403
      %v1498 = vpop.f32.mrb[0].mxu0
      %v1499 = vadd.f32 0.0, %v1498
      %v1500 = vpop.f32.mrb[0].mxu0
      %v1501 = vpop.f32.mrb[0].mxu0
      %v1502 = vadd.f32 0.0, %v1501
      %v1503 = vpop.f32.mrb[0].mxu0
      %1504 = vmatprep.mubr.bf16.mxu0 0
      %1505 = vmatmul.mubr.bf16.gmra.mrb[0].mxu0 %v1406
      %v1506 = vpop.f32.mrb[0].mxu0
      %v1507 = vadd.f32 0.0, %v1506
      %v1508 = vpop.f32.mrb[0].mxu0
      %v1509 = vpop.f32.mrb[0].mxu0
      %v1510 = vadd.f32 0.0, %v1509
      %v1511 = vpop.f32.mrb[0].mxu0
      %1512 = vmatprep.mubr.bf16.mxu0 0
      %1513 = vmatmul.mubr.bf16.gmra.mrb[0].mxu0 %v1409
      %v1514 = vpop.f32.mrb[0].mxu0
      %v1515 = vadd.f32 0.0, %v1514
      %v1516 = vpop.f32.mrb[0].mxu0
      %v1517 = vpop.f32.mrb[0].mxu0
      %v1518 = vadd.f32 0.0, %v1517
      %v1519 = vpop.f32.mrb[0].mxu0
      %1520 = vmatprep.mubr.bf16.mxu0 0
      %1521 = vmatmul.mubr.bf16.gmra.mrb[0].mxu0 %v1412
      %v1522 = vpop.f32.mrb[0].mxu0
      %v1523 = vadd.f32 0.0, %v1522
      %v1524 = vpop.f32.mrb[0].mxu0
      %v1525 = vpop.f32.mrb[0].mxu0
      %v1526 = vadd.f32 0.0, %v1525
      %v1527 = vpop.f32.mrb[0].mxu0
      %1528 = vmatprep.mubr.bf16.mxu0 0
      %1529 = vmatmul.mubr.bf16.gmra.mrb[0].mxu0 %v1415
      %v1530 = vpop.f32.mrb[0].mxu0
      %v1531 = vadd.f32 0.0, %v1530
      %v1532 = vpop.f32.mrb[0].mxu0
      %v1533 = vpop.f32.mrb[0].mxu0
      %v1534 = vadd.f32 0.0, %v1533
      %v1535 = vpop.f32.mrb[0].mxu0
      %1536 = vmatprep.mubr.bf16.mxu0 0
      %1537 = vmatmul.mubr.bf16.gmra.mrb[0].mxu0 %v1418
      %v1538 = vpop.f32.mrb[0].mxu0
      %v1539 = vadd.f32 0.0, %v1538
      %v1540 = vpop.f32.mrb[0].mxu0
      %v1541 = vpop.f32.mrb[0].mxu0
      %v1542 = vadd.f32 0.0, %v1541
      %v1543 = vpop.f32.mrb[0].mxu0
      %1544 = vmatprep.mubr.bf16.mxu0 0
      %1545 = vmatmul.mubr.bf16.gmra.mrb[0].mxu0 %v1421
      %v1546 = vpop.f32.mrb[0].mxu0
      %v1547 = vadd.f32 0.0, %v1546
      %v1548 = vpop.f32.mrb[0].mxu0
      %v1549 = vpop.f32.mrb[0].mxu0
      %v1550 = vadd.f32 0.0, %v1549
      %v1551 = vpop.f32.mrb[0].mxu0
      %1552 = vmatprep.mubr.bf16.mxu0 0
      %1553 = vmatmul.mubr.bf16.gmra.mrb[0].mxu0 %v1424
      %v1554 = vpop.f32.mrb[0].mxu0
      %v1555 = vadd.f32 0.0, %v1554
      %v1556 = vpop.f32.mrb[0].mxu0
      %v1557 = vpop.f32.mrb[0].mxu0
      %v1558 = vadd.f32 0.0, %v1557
      %v1559 = vpop.f32.mrb[0].mxu0
      %1560 = vmatprep.mubr.bf16.mxu0 0
      %1561 = vmatmul.mubr.bf16.gmra.mrb[0].mxu0 %v1427
      %v1562 = vpop.f32.mrb[0].mxu0
      %v1563 = vadd.f32 0.0, %v1562
      %v1564 = vpop.f32.mrb[0].mxu0
      %v1565 = vpop.f32.mrb[0].mxu0
      %v1566 = vadd.f32 0.0, %v1565
      %v1567 = vpop.f32.mrb[0].mxu0
      %1568 = vmatprep.mubr.bf16.mxu0 0
      %1569 = vmatmul.mubr.bf16.gmra.mrb[0].mxu0 %v1430
      %v1570 = vpop.f32.mrb[0].mxu0
      %v1571 = vadd.f32 0.0, %v1570
      %v1572 = vpop.f32.mrb[0].mxu0
      %v1573 = vpop.f32.mrb[0].mxu0
      %v1574 = vadd.f32 0.0, %v1573
      %v1575 = vpop.f32.mrb[0].mxu0
      %1576 = vmatprep.mubr.bf16.mxu0 0
      %1577 = vmatmul.mubr.bf16.gmra.mrb[0].mxu0 %v1433
      %v1578 = vpop.f32.mrb[0].mxu0
      %v1579 = vadd.f32 0.0, %v1578
      %v1580 = vpop.f32.mrb[0].mxu0
      %v1581 = vpop.f32.mrb[0].mxu0
      %v1582 = vadd.f32 0.0, %v1581
      %v1583 = vpop.f32.mrb[0].mxu0
      %1584 = vmatprep.mubr.bf16.mxu0 0
      %1585 = vmatmul.mubr.bf16.gmra.mrb[0].mxu0 %v1436
      %v1586 = vpop.f32.mrb[0].mxu0
      %v1587 = vadd.f32 0.0, %v1586
      %v1588 = vpop.f32.mrb[0].mxu0
      %v1589 = vpop.f32.mrb[0].mxu0
      %v1590 = vadd.f32 0.0, %v1589
      %v1591 = vpop.f32.mrb[0].mxu0
      %1592 = vmatprep.mubr.bf16.mxu0 0
      %1593 = vmatmul.mubr.bf16.gmra.mrb[0].mxu0 %v1439
      %v1594 = vpop.f32.mrb[0].mxu0
      %v1595 = vadd.f32 0.0, %v1594
      %v1596 = vpop.f32.mrb[0].mxu0
      %v1597 = vpop.f32.mrb[0].mxu0
      %v1598 = vadd.f32 0.0, %v1597
      %v1599 = vpop.f32.mrb[0].mxu0
      %1600 = vmatprep.mubr.bf16.mxu0 0
      %1601 = vmatmul.mubr.bf16.gmra.mrb[0].mxu0 %v1442
      %v1602 = vpop.f32.mrb[0].mxu0
      %v1603 = vadd.f32 0.0, %v1602
      %v1604 = vpop.f32.mrb[0].mxu0
      %v1605 = vpop.f32.mrb[0].mxu0
      %v1606 = vadd.f32 0.0, %v1605
      %v1607 = vpop.f32.mrb[0].mxu0
      %1608 = vmatprep.mubr.bf16.mxu0 0
      %1609 = vmatmul.mubr.bf16.gmra.mrb[0].mxu0 %v1445
      %v1610 = vpop.f32.mrb[0].mxu0
      %v1611 = vadd.f32 0.0, %v1610
      %v1612 = vpop.f32.mrb[0].mxu0
      %v1613 = vpop.f32.mrb[0].mxu0
      %v1614 = vadd.f32 0.0, %v1613
      %v1615 = vpop.f32.mrb[0].mxu0
      %1616 = vmatprep.mubr.bf16.mxu0 0
      %1617 = vmatmul.mubr.bf16.gmra.mrb[0].mxu0 %v1448
      %v1618 = vpop.f32.mrb[0].mxu0
      %v1619 = vadd.f32 0.0, %v1618
      %v1620 = vpop.f32.mrb[0].mxu0
      %v1621 = vpop.f32.mrb[0].mxu0
      %v1622 = vadd.f32 0.0, %v1621
      %v1623 = vpop.f32.mrb[0].mxu0
      %1624 = vmatprep.mubr.bf16.mxu0 0
      %1625 = vmatmul.mubr.bf16.gmra.mrb[0].mxu0 %v1451
      %v1626 = vpop.f32.mrb[0].mxu0
      %v1627 = vadd.f32 0.0, %v1626
      %v1628 = vpop.f32.mrb[0].mxu0
      %v1629 = vpop.f32.mrb[0].mxu0
      %v1630 = vadd.f32 0.0, %v1629
      %v1631 = vpop.f32.mrb[0].mxu0
      %1632 = vdwg.mxu0
      %v1633 = vadd.f32 %v1194, %v1491
      %v1634 = vadd.f32 %v1195, %v1494
      %v1635 = vadd.f32 %v1196, %v1499
      %v1636 = vadd.f32 %v1197, %v1502
      %v1637 = vadd.f32 %v1198, %v1507
      %v1638 = vadd.f32 %v1199, %v1510
      %v1639 = vadd.f32 %v1200, %v1515
      %v1640 = vadd.f32 %v1201, %v1518
      %v1641 = vadd.f32 %v1202, %v1523
      %v1642 = vadd.f32 %v1203, %v1526
      %v1643 = vadd.f32 %v1204, %v1531
      %v1644 = vadd.f32 %v1205, %v1534
      %v1645 = vadd.f32 %v1206, %v1539
      %v1646 = vadd.f32 %v1207, %v1542
      %v1647 = vadd.f32 %v1208, %v1547
      %v1648 = vadd.f32 %v1209, %v1550
      %v1649 = vadd.f32 %v1210, %v1555
      %v1650 = vadd.f32 %v1211, %v1558
      %v1651 = vadd.f32 %v1212, %v1563
      %v1652 = vadd.f32 %v1213, %v1566
      %v1653 = vadd.f32 %v1214, %v1571
      %v1654 = vadd.f32 %v1215, %v1574
      %v1655 = vadd.f32 %v1216, %v1579
      %v1656 = vadd.f32 %v1217, %v1582
      %v1657 = vadd.f32 %v1218, %v1587
      %v1658 = vadd.f32 %v1219, %v1590
      %v1659 = vadd.f32 %v1220, %v1595
      %v1660 = vadd.f32 %v1221, %v1598
      %v1661 = vadd.f32 %v1222, %v1603
      %v1662 = vadd.f32 %v1223, %v1606
      %v1663 = vadd.f32 %v1224, %v1611
      %v1664 = vadd.f32 %v1225, %v1614
      %v1665 = vadd.f32 %v1226, %v1619
      %v1666 = vadd.f32 %v1227, %v1622
      %v1667 = vadd.f32 %v1228, %v1627
      %v1668 = vadd.f32 %v1229, %v1630
      %v1669 = vld [vmem:[%s168 + $0x98] sm:$0x3]
      %s1670 = scalar_lea.vmem %s172, 16
      %v1671 = vld [vmem:[%s1670] sm:$0xf]
      %v1673 = vunpack.c.l.b16 %v1669
      %v1674 = vpack.c.b16 %v1673, %v1673
      %vm1675 = vsmask.f32 6400
      %v1677 = vshrl.u32 %v1343, 16
      %v1679 = vrot.slane %v1677, 1
      %v1680 = vshll.u32 %v1343, 16
      %v1682 = vrot.slane %v1680, 2
      %v1683 = vor.u32 %v1679, %v1682
      %v1685 = vshrl.u32 %v1344, 16
      %v1687 = vrot.slane %v1685, 1
      %v1688 = vshll.u32 %v1344, 16
      %v1690 = vrot.slane %v1688, 2
      %v1691 = vor.u32 %v1687, %v1690
      %v1692 = vsel %vm1675, %v1683, %v1691
      %v1694 = vshrl.u32 %v1345, 16
      %v1696 = vrot.slane %v1694, 1
      %v1697 = vshll.u32 %v1345, 16
      %v1699 = vrot.slane %v1697, 2
      %v1700 = vor.u32 %v1696, %v1699
      %v1701 = vsel %vm1675, %v1691, %v1700
      %v1703 = vshrl.u32 %v1346, 16
      %v1705 = vrot.slane %v1703, 1
      %v1706 = vshll.u32 %v1346, 16
      %v1708 = vrot.slane %v1706, 2
      %v1709 = vor.u32 %v1705, %v1708
      %v1710 = vsel %vm1675, %v1700, %v1709
      %v1712 = vshrl.u32 %v1347, 16
      %v1714 = vrot.slane %v1712, 1
      %v1715 = vshll.u32 %v1347, 16
      %v1717 = vrot.slane %v1715, 2
      %v1718 = vor.u32 %v1714, %v1717
      %v1719 = vsel %vm1675, %v1709, %v1718
      %v1721 = vshrl.u32 %v1348, 16
      %v1723 = vrot.slane %v1721, 1
      %v1724 = vshll.u32 %v1348, 16
      %v1726 = vrot.slane %v1724, 2
      %v1727 = vor.u32 %v1723, %v1726
      %v1728 = vsel %vm1675, %v1718, %v1727
      %v1730 = vshrl.u32 %v1349, 16
      %v1732 = vrot.slane %v1730, 1
      %v1733 = vshll.u32 %v1349, 16
      %v1735 = vrot.slane %v1733, 2
      %v1736 = vor.u32 %v1732, %v1735
      %v1737 = vsel %vm1675, %v1727, %v1736
      %v1739 = vshrl.u32 %v1350, 16
      %v1741 = vrot.slane %v1739, 1
      %v1742 = vshll.u32 %v1350, 16
      %v1744 = vrot.slane %v1742, 2
      %v1745 = vor.u32 %v1741, %v1744
      %v1746 = vsel %vm1675, %v1736, %v1745
      %v1748 = vshrl.u32 %v1351, 16
      %v1750 = vrot.slane %v1748, 1
      %v1751 = vshll.u32 %v1351, 16
      %v1753 = vrot.slane %v1751, 2
      %v1754 = vor.u32 %v1750, %v1753
      %v1755 = vsel %vm1675, %v1745, %v1754
      %v1757 = vshrl.u32 %v1352, 16
      %v1759 = vrot.slane %v1757, 1
      %v1760 = vshll.u32 %v1352, 16
      %v1762 = vrot.slane %v1760, 2
      %v1763 = vor.u32 %v1759, %v1762
      %v1764 = vsel %vm1675, %v1754, %v1763
      %v1766 = vshrl.u32 %v1353, 16
      %v1768 = vrot.slane %v1766, 1
      %v1769 = vshll.u32 %v1353, 16
      %v1771 = vrot.slane %v1769, 2
      %v1772 = vor.u32 %v1768, %v1771
      %v1773 = vsel %vm1675, %v1763, %v1772
      %v1775 = vshrl.u32 %v1354, 16
      %v1777 = vrot.slane %v1775, 1
      %v1778 = vshll.u32 %v1354, 16
      %v1780 = vrot.slane %v1778, 2
      %v1781 = vor.u32 %v1777, %v1780
      %v1782 = vsel %vm1675, %v1772, %v1781
      %v1784 = vshrl.u32 %v1355, 16
      %v1786 = vrot.slane %v1784, 1
      %v1787 = vshll.u32 %v1355, 16
      %v1789 = vrot.slane %v1787, 2
      %v1790 = vor.u32 %v1786, %v1789
      %v1791 = vsel %vm1675, %v1781, %v1790
      %v1793 = vshrl.u32 %v1356, 16
      %v1795 = vrot.slane %v1793, 1
      %v1796 = vshll.u32 %v1356, 16
      %v1798 = vrot.slane %v1796, 2
      %v1799 = vor.u32 %v1795, %v1798
      %v1800 = vsel %vm1675, %v1790, %v1799
      %v1802 = vshrl.u32 %v1357, 16
      %v1804 = vrot.slane %v1802, 1
      %v1805 = vshll.u32 %v1357, 16
      %v1807 = vrot.slane %v1805, 2
      %v1808 = vor.u32 %v1804, %v1807
      %v1809 = vsel %vm1675, %v1799, %v1808
      %v1811 = vshrl.u32 %v1358, 16
      %v1813 = vrot.slane %v1811, 1
      %v1814 = vshll.u32 %v1358, 16
      %v1816 = vrot.slane %v1814, 2
      %v1817 = vor.u32 %v1813, %v1816
      %v1818 = vsel %vm1675, %v1808, %v1817
      %v1820 = vshrl.u32 %v1359, 16
      %v1822 = vrot.slane %v1820, 1
      %v1823 = vshll.u32 %v1359, 16
      %v1825 = vrot.slane %v1823, 2
      %v1826 = vor.u32 %v1822, %v1825
      %v1827 = vsel %vm1675, %v1817, %v1826
      %v1829 = vshrl.u32 %v1360, 16
      %v1831 = vrot.slane %v1829, 1
      %v1832 = vshll.u32 %v1360, 16
      %v1834 = vrot.slane %v1832, 2
      %v1835 = vor.u32 %v1831, %v1834
      %v1836 = vsel %vm1675, %v1826, %v1835
      %v1838 = vshrl.u32 %v1674, 16
      %v1840 = vrot.slane %v1838, 1
      %v1841 = vshll.u32 %v1674, 16
      %v1843 = vrot.slane %v1841, 2
      %v1844 = vor.u32 %v1840, %v1843
      %v1845 = vsel %vm1675, %v1835, %v1844
      %v1847 = vsel %vm464, %v1692, 0
      %v1850 = vsel %vm464, %v1701, 0
      %v1853 = vsel %vm464, %v1710, 0
      %v1856 = vsel %vm464, %v1719, 0
      %v1859 = vsel %vm464, %v1728, 0
      %v1862 = vsel %vm464, %v1737, 0
      %v1865 = vsel %vm464, %v1746, 0
      %v1868 = vsel %vm464, %v1755, 0
      %v1871 = vsel %vm464, %v1764, 0
      %v1874 = vsel %vm464, %v1773, 0
      %v1877 = vsel %vm464, %v1782, 0
      %v1880 = vsel %vm464, %v1791, 0
      %v1883 = vsel %vm464, %v1800, 0
      %v1886 = vsel %vm464, %v1809, 0
      %v1889 = vsel %vm464, %v1818, 0
      %v1892 = vsel %vm464, %v1827, 0
      %v1895 = vsel %vm464, %v1836, 0
      %v1898 = vsel %vm464, %v1845, 0
      %v1901 = vsel %vm519, %v1671, 0
      %1903 = vmatprep.subr.bf16.mxu0 0
      %1904 = vmatpush1.bf16.msra.mxu0 %v1901
      %1905 = vmatprep.subr.bf16.mxu0 0
      %1906 = vmatpush1.bf16.msra.mxu0 0
      %1907 = vmatprep.subr.bf16.mxu0 0
      %1908 = vmatpush1.bf16.msra.mxu0 0
      %1909 = vmatprep.subr.bf16.mxu0 0
      %1910 = vmatpush1.bf16.msra.mxu0 0
      %1911 = vmatprep.subr.bf16.mxu0 0
      %1912 = vmatpush1.bf16.msra.mxu0 0
      %1913 = vmatprep.subr.bf16.mxu0 0
      %1914 = vmatpush1.bf16.msra.mxu0 0
      %1915 = vmatprep.subr.bf16.mxu0 0
      %1916 = vmatpush1.bf16.msra.mxu0 0
      %1917 = vmatprep.subr.bf16.mxu0 0
      %1918 = vmatpush1.bf16.msra.mxu0 0
      %1919 = vmatprep.subr.bf16.mxu0 0
      %1920 = vmatpush1.bf16.msra.mxu0 0
      %1921 = vmatprep.subr.bf16.mxu0 0
      %1922 = vmatpush1.bf16.msra.mxu0 0
      %1923 = vmatprep.subr.bf16.mxu0 0
      %1924 = vmatpush1.bf16.msra.mxu0 0
      %1925 = vmatprep.subr.bf16.mxu0 0
      %1926 = vmatpush1.bf16.msra.mxu0 0
      %1927 = vmatprep.subr.bf16.mxu0 0
      %1928 = vmatpush1.bf16.msra.mxu0 0
      %1929 = vmatprep.subr.bf16.mxu0 0
      %1930 = vmatpush1.bf16.msra.mxu0 0
      %1931 = vmatprep.subr.bf16.mxu0 0
      %1932 = vmatpush1.bf16.msra.mxu0 0
      %1933 = vmatprep.subr.bf16.mxu0 0
      %1934 = vmatpush1.bf16.msra.mxu0 0
      %1935 = vmatprep.mubr.bf16.mxu0 0
      %1936 = vmatmul.mubr.bf16.gmra.mrb[0].mxu0 %v1847
      %v1937 = vpop.f32.mrb[0].mxu0
      %v1938 = vadd.f32 0.0, %v1937
      %v1939 = vpop.f32.mrb[0].mxu0
      %v1940 = vpop.f32.mrb[0].mxu0
      %v1941 = vadd.f32 0.0, %v1940
      %v1942 = vpop.f32.mrb[0].mxu0
      %1943 = vmatprep.mubr.bf16.mxu0 0
      %1944 = vmatmul.mubr.bf16.gmra.mrb[0].mxu0 %v1850
      %v1945 = vpop.f32.mrb[0].mxu0
      %v1946 = vadd.f32 0.0, %v1945
      %v1947 = vpop.f32.mrb[0].mxu0
      %v1948 = vpop.f32.mrb[0].mxu0
      %v1949 = vadd.f32 0.0, %v1948
      %v1950 = vpop.f32.mrb[0].mxu0
      %1951 = vmatprep.mubr.bf16.mxu0 0
      %1952 = vmatmul.mubr.bf16.gmra.mrb[0].mxu0 %v1853
      %v1953 = vpop.f32.mrb[0].mxu0
      %v1954 = vadd.f32 0.0, %v1953
      %v1955 = vpop.f32.mrb[0].mxu0
      %v1956 = vpop.f32.mrb[0].mxu0
      %v1957 = vadd.f32 0.0, %v1956
      %v1958 = vpop.f32.mrb[0].mxu0
      %1959 = vmatprep.mubr.bf16.mxu0 0
      %1960 = vmatmul.mubr.bf16.gmra.mrb[0].mxu0 %v1856
      %v1961 = vpop.f32.mrb[0].mxu0
      %v1962 = vadd.f32 0.0, %v1961
      %v1963 = vpop.f32.mrb[0].mxu0
      %v1964 = vpop.f32.mrb[0].mxu0
      %v1965 = vadd.f32 0.0, %v1964
      %v1966 = vpop.f32.mrb[0].mxu0
      %1967 = vmatprep.mubr.bf16.mxu0 0
      %1968 = vmatmul.mubr.bf16.gmra.mrb[0].mxu0 %v1859
      %v1969 = vpop.f32.mrb[0].mxu0
      %v1970 = vadd.f32 0.0, %v1969
      %v1971 = vpop.f32.mrb[0].mxu0
      %v1972 = vpop.f32.mrb[0].mxu0
      %v1973 = vadd.f32 0.0, %v1972
      %v1974 = vpop.f32.mrb[0].mxu0
      %1975 = vmatprep.mubr.bf16.mxu0 0
      %1976 = vmatmul.mubr.bf16.gmra.mrb[0].mxu0 %v1862
      %v1977 = vpop.f32.mrb[0].mxu0
      %v1978 = vadd.f32 0.0, %v1977
      %v1979 = vpop.f32.mrb[0].mxu0
      %v1980 = vpop.f32.mrb[0].mxu0
      %v1981 = vadd.f32 0.0, %v1980
      %v1982 = vpop.f32.mrb[0].mxu0
      %1983 = vmatprep.mubr.bf16.mxu0 0
      %1984 = vmatmul.mubr.bf16.gmra.mrb[0].mxu0 %v1865
      %v1985 = vpop.f32.mrb[0].mxu0
      %v1986 = vadd.f32 0.0, %v1985
      %v1987 = vpop.f32.mrb[0].mxu0
      %v1988 = vpop.f32.mrb[0].mxu0
      %v1989 = vadd.f32 0.0, %v1988
      %v1990 = vpop.f32.mrb[0].mxu0
      %1991 = vmatprep.mubr.bf16.mxu0 0
      %1992 = vmatmul.mubr.bf16.gmra.mrb[0].mxu0 %v1868
      %v1993 = vpop.f32.mrb[0].mxu0
      %v1994 = vadd.f32 0.0, %v1993
      %v1995 = vpop.f32.mrb[0].mxu0
      %v1996 = vpop.f32.mrb[0].mxu0
      %v1997 = vadd.f32 0.0, %v1996
      %v1998 = vpop.f32.mrb[0].mxu0
      %1999 = vmatprep.mubr.bf16.mxu0 0
      %2000 = vmatmul.mubr.bf16.gmra.mrb[0].mxu0 %v1871
      %v2001 = vpop.f32.mrb[0].mxu0
      %v2002 = vadd.f32 0.0, %v2001
      %v2003 = vpop.f32.mrb[0].mxu0
      %v2004 = vpop.f32.mrb[0].mxu0
      %v2005 = vadd.f32 0.0, %v2004
      %v2006 = vpop.f32.mrb[0].mxu0
      %2007 = vmatprep.mubr.bf16.mxu0 0
      %2008 = vmatmul.mubr.bf16.gmra.mrb[0].mxu0 %v1874
      %v2009 = vpop.f32.mrb[0].mxu0
      %v2010 = vadd.f32 0.0, %v2009
      %v2011 = vpop.f32.mrb[0].mxu0
      %v2012 = vpop.f32.mrb[0].mxu0
      %v2013 = vadd.f32 0.0, %v2012
      %v2014 = vpop.f32.mrb[0].mxu0
      %2015 = vmatprep.mubr.bf16.mxu0 0
      %2016 = vmatmul.mubr.bf16.gmra.mrb[0].mxu0 %v1877
      %v2017 = vpop.f32.mrb[0].mxu0
      %v2018 = vadd.f32 0.0, %v2017
      %v2019 = vpop.f32.mrb[0].mxu0
      %v2020 = vpop.f32.mrb[0].mxu0
      %v2021 = vadd.f32 0.0, %v2020
      %v2022 = vpop.f32.mrb[0].mxu0
      %2023 = vmatprep.mubr.bf16.mxu0 0
      %2024 = vmatmul.mubr.bf16.gmra.mrb[0].mxu0 %v1880
      %v2025 = vpop.f32.mrb[0].mxu0
      %v2026 = vadd.f32 0.0, %v2025
      %v2027 = vpop.f32.mrb[0].mxu0
      %v2028 = vpop.f32.mrb[0].mxu0
      %v2029 = vadd.f32 0.0, %v2028
      %v2030 = vpop.f32.mrb[0].mxu0
      %2031 = vmatprep.mubr.bf16.mxu0 0
      %2032 = vmatmul.mubr.bf16.gmra.mrb[0].mxu0 %v1883
      %v2033 = vpop.f32.mrb[0].mxu0
      %v2034 = vadd.f32 0.0, %v2033
      %v2035 = vpop.f32.mrb[0].mxu0
      %v2036 = vpop.f32.mrb[0].mxu0
      %v2037 = vadd.f32 0.0, %v2036
      %v2038 = vpop.f32.mrb[0].mxu0
      %2039 = vmatprep.mubr.bf16.mxu0 0
      %2040 = vmatmul.mubr.bf16.gmra.mrb[0].mxu0 %v1886
      %v2041 = vpop.f32.mrb[0].mxu0
      %v2042 = vadd.f32 0.0, %v2041
      %v2043 = vpop.f32.mrb[0].mxu0
      %v2044 = vpop.f32.mrb[0].mxu0
      %v2045 = vadd.f32 0.0, %v2044
      %v2046 = vpop.f32.mrb[0].mxu0
      %2047 = vmatprep.mubr.bf16.mxu0 0
      %2048 = vmatmul.mubr.bf16.gmra.mrb[0].mxu0 %v1889
      %v2049 = vpop.f32.mrb[0].mxu0
      %v2050 = vadd.f32 0.0, %v2049
      %v2051 = vpop.f32.mrb[0].mxu0
      %v2052 = vpop.f32.mrb[0].mxu0
      %v2053 = vadd.f32 0.0, %v2052
      %v2054 = vpop.f32.mrb[0].mxu0
      %2055 = vmatprep.mubr.bf16.mxu0 0
      %2056 = vmatmul.mubr.bf16.gmra.mrb[0].mxu0 %v1892
      %v2057 = vpop.f32.mrb[0].mxu0
      %v2058 = vadd.f32 0.0, %v2057
      %v2059 = vpop.f32.mrb[0].mxu0
      %v2060 = vpop.f32.mrb[0].mxu0
      %v2061 = vadd.f32 0.0, %v2060
      %v2062 = vpop.f32.mrb[0].mxu0
      %2063 = vmatprep.mubr.bf16.mxu0 0
      %2064 = vmatmul.mubr.bf16.gmra.mrb[0].mxu0 %v1895
      %v2065 = vpop.f32.mrb[0].mxu0
      %v2066 = vadd.f32 0.0, %v2065
      %v2067 = vpop.f32.mrb[0].mxu0
      %v2068 = vpop.f32.mrb[0].mxu0
      %v2069 = vadd.f32 0.0, %v2068
      %v2070 = vpop.f32.mrb[0].mxu0
      %2071 = vmatprep.mubr.bf16.mxu0 0
      %2072 = vmatmul.mubr.bf16.gmra.mrb[0].mxu0 %v1898
      %v2073 = vpop.f32.mrb[0].mxu0
      %v2074 = vadd.f32 0.0, %v2073
      %v2075 = vpop.f32.mrb[0].mxu0
      %v2076 = vpop.f32.mrb[0].mxu0
      %v2077 = vadd.f32 0.0, %v2076
      %v2078 = vpop.f32.mrb[0].mxu0
      %2079 = vdwg.mxu0
      %v2080 = vadd.f32 %v1633, %v1938
      %v2081 = vadd.f32 %v1634, %v1941
      %v2082 = vadd.f32 %v1635, %v1946
      %v2083 = vadd.f32 %v1636, %v1949
      %v2084 = vadd.f32 %v1637, %v1954
      %v2085 = vadd.f32 %v1638, %v1957
      %v2086 = vadd.f32 %v1639, %v1962
      %v2087 = vadd.f32 %v1640, %v1965
      %v2088 = vadd.f32 %v1641, %v1970
      %v2089 = vadd.f32 %v1642, %v1973
      %v2090 = vadd.f32 %v1643, %v1978
      %v2091 = vadd.f32 %v1644, %v1981
      %v2092 = vadd.f32 %v1645, %v1986
      %v2093 = vadd.f32 %v1646, %v1989
      %v2094 = vadd.f32 %v1647, %v1994
      %v2095 = vadd.f32 %v1648, %v1997
      %v2096 = vadd.f32 %v1649, %v2002
      %v2097 = vadd.f32 %v1650, %v2005
      %v2098 = vadd.f32 %v1651, %v2010
      %v2099 = vadd.f32 %v1652, %v2013
      %v2100 = vadd.f32 %v1653, %v2018
      %v2101 = vadd.f32 %v1654, %v2021
      %v2102 = vadd.f32 %v1655, %v2026
      %v2103 = vadd.f32 %v1656, %v2029
      %v2104 = vadd.f32 %v1657, %v2034
      %v2105 = vadd.f32 %v1658, %v2037
      %v2106 = vadd.f32 %v1659, %v2042
      %v2107 = vadd.f32 %v1660, %v2045
      %v2108 = vadd.f32 %v1661, %v2050
      %v2109 = vadd.f32 %v1662, %v2053
      %v2110 = vadd.f32 %v1663, %v2058
      %v2111 = vadd.f32 %v1664, %v2061
      %v2112 = vadd.f32 %v1665, %v2066
      %v2113 = vadd.f32 %v1666, %v2069
      %v2114 = vadd.f32 %v1667, %v2074
      %v2115 = vadd.f32 %v1668, %v2077
      %v2116 = vld [vmem:[%s168 + $0x8] sm:$0xc]
      %s2117 = scalar_lea.vmem %s172, 20
      %v2118 = vld [vmem:[%s2117] sm:$0xf]
      %v2120 = vunpack.c.l.b16 %v2116
      %v2121 = vpack.c.b16 %v1307, %v2120
      %vm2122 = vcmask 1045504
      %v2123 = vrot.slane %v2121, 2
      %v2124 = vrot.slane %v1344, 2
      %v2125 = vsel %vm2122, %v2123, %v2124
      %v2126 = vrot.slane %v1345, 2
      %v2127 = vsel %vm2122, %v2124, %v2126
      %v2128 = vrot.slane %v1346, 2
      %v2129 = vsel %vm2122, %v2126, %v2128
      %v2130 = vrot.slane %v1347, 2
      %v2131 = vsel %vm2122, %v2128, %v2130
      %v2132 = vrot.slane %v1348, 2
      %v2133 = vsel %vm2122, %v2130, %v2132
      %v2134 = vrot.slane %v1349, 2
      %v2135 = vsel %vm2122, %v2132, %v2134
      %v2136 = vrot.slane %v1350, 2
      %v2137 = vsel %vm2122, %v2134, %v2136
      %v2138 = vrot.slane %v1351, 2
      %v2139 = vsel %vm2122, %v2136, %v2138
      %v2140 = vrot.slane %v1352, 2
      %v2141 = vsel %vm2122, %v2138, %v2140
      %v2142 = vrot.slane %v1353, 2
      %v2143 = vsel %vm2122, %v2140, %v2142
      %v2144 = vrot.slane %v1354, 2
      %v2145 = vsel %vm2122, %v2142, %v2144
      %v2146 = vrot.slane %v1355, 2
      %v2147 = vsel %vm2122, %v2144, %v2146
      %v2148 = vrot.slane %v1356, 2
      %v2149 = vsel %vm2122, %v2146, %v2148
      %v2150 = vrot.slane %v1357, 2
      %v2151 = vsel %vm2122, %v2148, %v2150
      %v2152 = vrot.slane %v1358, 2
      %v2153 = vsel %vm2122, %v2150, %v2152
      %v2154 = vrot.slane %v1359, 2
      %v2155 = vsel %vm2122, %v2152, %v2154
      %v2156 = vrot.slane %v1360, 2
      %v2157 = vsel %vm2122, %v2154, %v2156
      %v2158 = vrot.slane %v1674, 2
      %v2159 = vsel %vm2122, %v2156, %v2158
      %v2161 = vsel %vm464, %v2125, 0
      %v2164 = vsel %vm464, %v2127, 0
      %v2167 = vsel %vm464, %v2129, 0
      %v2170 = vsel %vm464, %v2131, 0
      %v2173 = vsel %vm464, %v2133, 0
      %v2176 = vsel %vm464, %v2135, 0
      %v2179 = vsel %vm464, %v2137, 0
      %v2182 = vsel %vm464, %v2139, 0
      %v2185 = vsel %vm464, %v2141, 0
      %v2188 = vsel %vm464, %v2143, 0
      %v2191 = vsel %vm464, %v2145, 0
      %v2194 = vsel %vm464, %v2147, 0
      %v2197 = vsel %vm464, %v2149, 0
      %v2200 = vsel %vm464, %v2151, 0
      %v2203 = vsel %vm464, %v2153, 0
      %v2206 = vsel %vm464, %v2155, 0
      %v2209 = vsel %vm464, %v2157, 0
      %v2212 = vsel %vm464, %v2159, 0
      %v2215 = vsel %vm519, %v2118, 0
      %2217 = vmatprep.subr.bf16.mxu0 0
      %2218 = vmatpush1.bf16.msra.mxu0 %v2215
      %2219 = vmatprep.subr.bf16.mxu0 0
      %2220 = vmatpush1.bf16.msra.mxu0 0
      %2221 = vmatprep.subr.bf16.mxu0 0
      %2222 = vmatpush1.bf16.msra.mxu0 0
      %2223 = vmatprep.subr.bf16.mxu0 0
      %2224 = vmatpush1.bf16.msra.mxu0 0
      %2225 = vmatprep.subr.bf16.mxu0 0
      %2226 = vmatpush1.bf16.msra.mxu0 0
      %2227 = vmatprep.subr.bf16.mxu0 0
      %2228 = vmatpush1.bf16.msra.mxu0 0
      %2229 = vmatprep.subr.bf16.mxu0 0
      %2230 = vmatpush1.bf16.msra.mxu0 0
      %2231 = vmatprep.subr.bf16.mxu0 0
      %2232 = vmatpush1.bf16.msra.mxu0 0
      %2233 = vmatprep.subr.bf16.mxu0 0
      %2234 = vmatpush1.bf16.msra.mxu0 0
      %2235 = vmatprep.subr.bf16.mxu0 0
      %2236 = vmatpush1.bf16.msra.mxu0 0
      %2237 = vmatprep.subr.bf16.mxu0 0
      %2238 = vmatpush1.bf16.msra.mxu0 0
      %2239 = vmatprep.subr.bf16.mxu0 0
      %2240 = vmatpush1.bf16.msra.mxu0 0
      %2241 = vmatprep.subr.bf16.mxu0 0
      %2242 = vmatpush1.bf16.msra.mxu0 0
      %2243 = vmatprep.subr.bf16.mxu0 0
      %2244 = vmatpush1.bf16.msra.mxu0 0
      %2245 = vmatprep.subr.bf16.mxu0 0
      %2246 = vmatpush1.bf16.msra.mxu0 0
      %2247 = vmatprep.subr.bf16.mxu0 0
      %2248 = vmatpush1.bf16.msra.mxu0 0
      %2249 = vmatprep.mubr.bf16.mxu0 0
      %2250 = vmatmul.mubr.bf16.gmra.mrb[0].mxu0 %v2161
      %v2251 = vpop.f32.mrb[0].mxu0
      %v2252 = vadd.f32 0.0, %v2251
      %v2253 = vpop.f32.mrb[0].mxu0
      %v2254 = vpop.f32.mrb[0].mxu0
      %v2255 = vadd.f32 0.0, %v2254
      %v2256 = vpop.f32.mrb[0].mxu0
      %2257 = vmatprep.mubr.bf16.mxu0 0
      %2258 = vmatmul.mubr.bf16.gmra.mrb[0].mxu0 %v2164
      %v2259 = vpop.f32.mrb[0].mxu0
      %v2260 = vadd.f32 0.0, %v2259
      %v2261 = vpop.f32.mrb[0].mxu0
      %v2262 = vpop.f32.mrb[0].mxu0
      %v2263 = vadd.f32 0.0, %v2262
      %v2264 = vpop.f32.mrb[0].mxu0
      %2265 = vmatprep.mubr.bf16.mxu0 0
      %2266 = vmatmul.mubr.bf16.gmra.mrb[0].mxu0 %v2167
      %v2267 = vpop.f32.mrb[0].mxu0
      %v2268 = vadd.f32 0.0, %v2267
      %v2269 = vpop.f32.mrb[0].mxu0
      %v2270 = vpop.f32.mrb[0].mxu0
      %v2271 = vadd.f32 0.0, %v2270
      %v2272 = vpop.f32.mrb[0].mxu0
      %2273 = vmatprep.mubr.bf16.mxu0 0
      %2274 = vmatmul.mubr.bf16.gmra.mrb[0].mxu0 %v2170
      %v2275 = vpop.f32.mrb[0].mxu0
      %v2276 = vadd.f32 0.0, %v2275
      %v2277 = vpop.f32.mrb[0].mxu0
      %v2278 = vpop.f32.mrb[0].mxu0
      %v2279 = vadd.f32 0.0, %v2278
      %v2280 = vpop.f32.mrb[0].mxu0
      %2281 = vmatprep.mubr.bf16.mxu0 0
      %2282 = vmatmul.mubr.bf16.gmra.mrb[0].mxu0 %v2173
      %v2283 = vpop.f32.mrb[0].mxu0
      %v2284 = vadd.f32 0.0, %v2283
      %v2285 = vpop.f32.mrb[0].mxu0
      %v2286 = vpop.f32.mrb[0].mxu0
      %v2287 = vadd.f32 0.0, %v2286
      %v2288 = vpop.f32.mrb[0].mxu0
      %2289 = vmatprep.mubr.bf16.mxu0 0
      %2290 = vmatmul.mubr.bf16.gmra.mrb[0].mxu0 %v2176
      %v2291 = vpop.f32.mrb[0].mxu0
      %v2292 = vadd.f32 0.0, %v2291
      %v2293 = vpop.f32.mrb[0].mxu0
      %v2294 = vpop.f32.mrb[0].mxu0
      %v2295 = vadd.f32 0.0, %v2294
      %v2296 = vpop.f32.mrb[0].mxu0
      %2297 = vmatprep.mubr.bf16.mxu0 0
      %2298 = vmatmul.mubr.bf16.gmra.mrb[0].mxu0 %v2179
      %v2299 = vpop.f32.mrb[0].mxu0
      %v2300 = vadd.f32 0.0, %v2299
      %v2301 = vpop.f32.mrb[0].mxu0
      %v2302 = vpop.f32.mrb[0].mxu0
      %v2303 = vadd.f32 0.0, %v2302
      %v2304 = vpop.f32.mrb[0].mxu0
      %2305 = vmatprep.mubr.bf16.mxu0 0
      %2306 = vmatmul.mubr.bf16.gmra.mrb[0].mxu0 %v2182
      %v2307 = vpop.f32.mrb[0].mxu0
      %v2308 = vadd.f32 0.0, %v2307
      %v2309 = vpop.f32.mrb[0].mxu0
      %v2310 = vpop.f32.mrb[0].mxu0
      %v2311 = vadd.f32 0.0, %v2310
      %v2312 = vpop.f32.mrb[0].mxu0
      %2313 = vmatprep.mubr.bf16.mxu0 0
      %2314 = vmatmul.mubr.bf16.gmra.mrb[0].mxu0 %v2185
      %v2315 = vpop.f32.mrb[0].mxu0
      %v2316 = vadd.f32 0.0, %v2315
      %v2317 = vpop.f32.mrb[0].mxu0
      %v2318 = vpop.f32.mrb[0].mxu0
      %v2319 = vadd.f32 0.0, %v2318
      %v2320 = vpop.f32.mrb[0].mxu0
      %2321 = vmatprep.mubr.bf16.mxu0 0
      %2322 = vmatmul.mubr.bf16.gmra.mrb[0].mxu0 %v2188
      %v2323 = vpop.f32.mrb[0].mxu0
      %v2324 = vadd.f32 0.0, %v2323
      %v2325 = vpop.f32.mrb[0].mxu0
      %v2326 = vpop.f32.mrb[0].mxu0
      %v2327 = vadd.f32 0.0, %v2326
      %v2328 = vpop.f32.mrb[0].mxu0
      %2329 = vmatprep.mubr.bf16.mxu0 0
      %2330 = vmatmul.mubr.bf16.gmra.mrb[0].mxu0 %v2191
      %v2331 = vpop.f32.mrb[0].mxu0
      %v2332 = vadd.f32 0.0, %v2331
      %v2333 = vpop.f32.mrb[0].mxu0
      %v2334 = vpop.f32.mrb[0].mxu0
      %v2335 = vadd.f32 0.0, %v2334
      %v2336 = vpop.f32.mrb[0].mxu0
      %2337 = vmatprep.mubr.bf16.mxu0 0
      %2338 = vmatmul.mubr.bf16.gmra.mrb[0].mxu0 %v2194
      %v2339 = vpop.f32.mrb[0].mxu0
      %v2340 = vadd.f32 0.0, %v2339
      %v2341 = vpop.f32.mrb[0].mxu0
      %v2342 = vpop.f32.mrb[0].mxu0
      %v2343 = vadd.f32 0.0, %v2342
      %v2344 = vpop.f32.mrb[0].mxu0
      %2345 = vmatprep.mubr.bf16.mxu0 0
      %2346 = vmatmul.mubr.bf16.gmra.mrb[0].mxu0 %v2197
      %v2347 = vpop.f32.mrb[0].mxu0
      %v2348 = vadd.f32 0.0, %v2347
      %v2349 = vpop.f32.mrb[0].mxu0
      %v2350 = vpop.f32.mrb[0].mxu0
      %v2351 = vadd.f32 0.0, %v2350
      %v2352 = vpop.f32.mrb[0].mxu0
      %2353 = vmatprep.mubr.bf16.mxu0 0
      %2354 = vmatmul.mubr.bf16.gmra.mrb[0].mxu0 %v2200
      %v2355 = vpop.f32.mrb[0].mxu0
      %v2356 = vadd.f32 0.0, %v2355
      %v2357 = vpop.f32.mrb[0].mxu0
      %v2358 = vpop.f32.mrb[0].mxu0
      %v2359 = vadd.f32 0.0, %v2358
      %v2360 = vpop.f32.mrb[0].mxu0
      %2361 = vmatprep.mubr.bf16.mxu0 0
      %2362 = vmatmul.mubr.bf16.gmra.mrb[0].mxu0 %v2203
      %v2363 = vpop.f32.mrb[0].mxu0
      %v2364 = vadd.f32 0.0, %v2363
      %v2365 = vpop.f32.mrb[0].mxu0
      %v2366 = vpop.f32.mrb[0].mxu0
      %v2367 = vadd.f32 0.0, %v2366
      %v2368 = vpop.f32.mrb[0].mxu0
      %2369 = vmatprep.mubr.bf16.mxu0 0
      %2370 = vmatmul.mubr.bf16.gmra.mrb[0].mxu0 %v2206
      %v2371 = vpop.f32.mrb[0].mxu0
      %v2372 = vadd.f32 0.0, %v2371
      %v2373 = vpop.f32.mrb[0].mxu0
      %v2374 = vpop.f32.mrb[0].mxu0
      %v2375 = vadd.f32 0.0, %v2374
      %v2376 = vpop.f32.mrb[0].mxu0
      %2377 = vmatprep.mubr.bf16.mxu0 0
      %2378 = vmatmul.mubr.bf16.gmra.mrb[0].mxu0 %v2209
      %v2379 = vpop.f32.mrb[0].mxu0
      %v2380 = vadd.f32 0.0, %v2379
      %v2381 = vpop.f32.mrb[0].mxu0
      %v2382 = vpop.f32.mrb[0].mxu0
      %v2383 = vadd.f32 0.0, %v2382
      %v2384 = vpop.f32.mrb[0].mxu0
      %2385 = vmatprep.mubr.bf16.mxu0 0
      %2386 = vmatmul.mubr.bf16.gmra.mrb[0].mxu0 %v2212
      %v2387 = vpop.f32.mrb[0].mxu0
      %v2388 = vadd.f32 0.0, %v2387
      %v2389 = vpop.f32.mrb[0].mxu0
      %v2390 = vpop.f32.mrb[0].mxu0
      %v2391 = vadd.f32 0.0, %v2390
      %v2392 = vpop.f32.mrb[0].mxu0
      %2393 = vdwg.mxu0
      %v2394 = vadd.f32 %v2080, %v2252
      %v2395 = vadd.f32 %v2081, %v2255
      %v2396 = vadd.f32 %v2082, %v2260
      %v2397 = vadd.f32 %v2083, %v2263
      %v2398 = vadd.f32 %v2084, %v2268
      %v2399 = vadd.f32 %v2085, %v2271
      %v2400 = vadd.f32 %v2086, %v2276
      %v2401 = vadd.f32 %v2087, %v2279
      %v2402 = vadd.f32 %v2088, %v2284
      %v2403 = vadd.f32 %v2089, %v2287
      %v2404 = vadd.f32 %v2090, %v2292
      %v2405 = vadd.f32 %v2091, %v2295
      %v2406 = vadd.f32 %v2092, %v2300
      %v2407 = vadd.f32 %v2093, %v2303
      %v2408 = vadd.f32 %v2094, %v2308
      %v2409 = vadd.f32 %v2095, %v2311
      %v2410 = vadd.f32 %v2096, %v2316
      %v2411 = vadd.f32 %v2097, %v2319
      %v2412 = vadd.f32 %v2098, %v2324
      %v2413 = vadd.f32 %v2099, %v2327
      %v2414 = vadd.f32 %v2100, %v2332
      %v2415 = vadd.f32 %v2101, %v2335
      %v2416 = vadd.f32 %v2102, %v2340
      %v2417 = vadd.f32 %v2103, %v2343
      %v2418 = vadd.f32 %v2104, %v2348
      %v2419 = vadd.f32 %v2105, %v2351
      %v2420 = vadd.f32 %v2106, %v2356
      %v2421 = vadd.f32 %v2107, %v2359
      %v2422 = vadd.f32 %v2108, %v2364
      %v2423 = vadd.f32 %v2109, %v2367
      %v2424 = vadd.f32 %v2110, %v2372
      %v2425 = vadd.f32 %v2111, %v2375
      %v2426 = vadd.f32 %v2112, %v2380
      %v2427 = vadd.f32 %v2113, %v2383
      %v2428 = vadd.f32 %v2114, %v2388
      %v2429 = vadd.f32 %v2115, %v2391
      %v2430 = vld [vmem:[%s168 + $0x10] sm:$0xc]
      %v2431 = vld [vmem:[%s168 + $0x14] sm:$0xf]
      %v2432 = vld [vmem:[%s168 + $0x18] sm:$0xf]
      %v2433 = vld [vmem:[%s168 + $0x1c] sm:$0xf]
      %v2434 = vld [vmem:[%s168 + $0x20] sm:$0xf]
      %v2435 = vld [vmem:[%s168 + $0x24] sm:$0xf]
      %v2436 = vld [vmem:[%s168 + $0x28] sm:$0xf]
      %v2437 = vld [vmem:[%s168 + $0x2c] sm:$0xf]
      %v2438 = vld [vmem:[%s168 + $0x30] sm:$0xf]
      %v2439 = vld [vmem:[%s168 + $0x34] sm:$0xf]
      %v2440 = vld [vmem:[%s168 + $0x38] sm:$0xf]
      %v2441 = vld [vmem:[%s168 + $0x3c] sm:$0xf]
      %v2442 = vld [vmem:[%s168 + $0x40] sm:$0xf]
      %v2443 = vld [vmem:[%s168 + $0x44] sm:$0xf]
      %v2444 = vld [vmem:[%s168 + $0x48] sm:$0xf]
      %v2445 = vld [vmem:[%s168 + $0x4c] sm:$0xf]
      %v2446 = vld [vmem:[%s168 + $0x50] sm:$0xf]
      %v2447 = vld [vmem:[%s168 + $0x54] sm:$0xf]
      %v2448 = vld [vmem:[%s168 + $0x58] sm:$0xf]
      %v2449 = vld [vmem:[%s168 + $0x5c] sm:$0xf]
      %v2450 = vld [vmem:[%s168 + $0x60] sm:$0xf]
      %v2451 = vld [vmem:[%s168 + $0x64] sm:$0xf]
      %v2452 = vld [vmem:[%s168 + $0x68] sm:$0xf]
      %v2453 = vld [vmem:[%s168 + $0x6c] sm:$0xf]
      %v2454 = vld [vmem:[%s168 + $0x70] sm:$0xf]
      %v2455 = vld [vmem:[%s168 + $0x74] sm:$0xf]
      %v2456 = vld [vmem:[%s168 + $0x78] sm:$0xf]
      %v2457 = vld [vmem:[%s168 + $0x7c] sm:$0xf]
      %v2458 = vld [vmem:[%s168 + $0x80] sm:$0xf]
      %v2459 = vld [vmem:[%s168 + $0x84] sm:$0xf]
      %v2460 = vld [vmem:[%s168 + $0x88] sm:$0xf]
      %v2461 = vld [vmem:[%s168 + $0x8c] sm:$0xf]
      %v2462 = vld [vmem:[%s168 + $0x90] sm:$0xf]
      %v2463 = vld [vmem:[%s168 + $0x94] sm:$0xf]
      %v2464 = vld [vmem:[%s168 + $0x98] sm:$0xf]
      %v2465 = vld [vmem:[%s168 + $0x9c] sm:$0xf]
      %v2466 = vld [vmem:[%s168 + $0xa0] sm:$0x3]
      %s2467 = scalar_lea.vmem %s172, 24
      %v2468 = vld [vmem:[%s2467] sm:$0xf]
      %v2506 = vunpack.c.l.b16 %v2430
      %v2507 = vunpack.c.l.b16 %v2431
      %v2508 = vunpack.c.l.b16 %v2432
      %v2509 = vunpack.c.l.b16 %v2433
      %v2510 = vunpack.c.l.b16 %v2434
      %v2511 = vunpack.c.l.b16 %v2435
      %v2512 = vunpack.c.l.b16 %v2436
      %v2513 = vunpack.c.l.b16 %v2437
      %v2514 = vunpack.c.l.b16 %v2438
      %v2515 = vunpack.c.l.b16 %v2439
      %v2516 = vunpack.c.l.b16 %v2440
      %v2517 = vunpack.c.l.b16 %v2441
      %v2518 = vunpack.c.l.b16 %v2442
      %v2519 = vunpack.c.l.b16 %v2443
      %v2520 = vunpack.c.l.b16 %v2444
      %v2521 = vunpack.c.l.b16 %v2445
      %v2522 = vunpack.c.l.b16 %v2446
      %v2523 = vunpack.c.l.b16 %v2447
      %v2524 = vunpack.c.l.b16 %v2448
      %v2525 = vunpack.c.l.b16 %v2449
      %v2526 = vunpack.c.l.b16 %v2450
      %v2527 = vunpack.c.l.b16 %v2451
      %v2528 = vunpack.c.l.b16 %v2452
      %v2529 = vunpack.c.l.b16 %v2453
      %v2530 = vunpack.c.l.b16 %v2454
      %v2531 = vunpack.c.l.b16 %v2455
      %v2532 = vunpack.c.l.b16 %v2456
      %v2533 = vunpack.c.l.b16 %v2457
      %v2534 = vunpack.c.l.b16 %v2458
      %v2535 = vunpack.c.l.b16 %v2459
      %v2536 = vunpack.c.l.b16 %v2460
      %v2537 = vunpack.c.l.b16 %v2461
      %v2538 = vunpack.c.l.b16 %v2462
      %v2539 = vunpack.c.l.b16 %v2463
      %v2540 = vunpack.c.l.b16 %v2464
      %v2541 = vunpack.c.l.b16 %v2465
      %v2542 = vunpack.c.l.b16 %v2466
      %v2543 = vpack.c.b16 %v2507, %v2506
      %v2544 = vpack.c.b16 %v2509, %v2508
      %v2545 = vpack.c.b16 %v2511, %v2510
      %v2546 = vpack.c.b16 %v2513, %v2512
      %v2547 = vpack.c.b16 %v2515, %v2514
      %v2548 = vpack.c.b16 %v2517, %v2516
      %v2549 = vpack.c.b16 %v2519, %v2518
      %v2550 = vpack.c.b16 %v2521, %v2520
      %v2551 = vpack.c.b16 %v2523, %v2522
      %v2552 = vpack.c.b16 %v2525, %v2524
      %v2553 = vpack.c.b16 %v2527, %v2526
      %v2554 = vpack.c.b16 %v2529, %v2528
      %v2555 = vpack.c.b16 %v2531, %v2530
      %v2556 = vpack.c.b16 %v2533, %v2532
      %v2557 = vpack.c.b16 %v2535, %v2534
      %v2558 = vpack.c.b16 %v2537, %v2536
      %v2559 = vpack.c.b16 %v2539, %v2538
      %v2560 = vpack.c.b16 %v2541, %v2540
      %v2561 = vpack.c.b16 %v2542, %v2542
      %v2562 = vrot.slane %v2543, 2
      %v2563 = vrot.slane %v2544, 2
      %v2564 = vsel %vm2122, %v2562, %v2563
      %v2565 = vrot.slane %v2545, 2
      %v2566 = vsel %vm2122, %v2563, %v2565
      %v2567 = vrot.slane %v2546, 2
      %v2568 = vsel %vm2122, %v2565, %v2567
      %v2569 = vrot.slane %v2547, 2
      %v2570 = vsel %vm2122, %v2567, %v2569
      %v2571 = vrot.slane %v2548, 2
      %v2572 = vsel %vm2122, %v2569, %v2571
      %v2573 = vrot.slane %v2549, 2
      %v2574 = vsel %vm2122, %v2571, %v2573
      %v2575 = vrot.slane %v2550, 2
      %v2576 = vsel %vm2122, %v2573, %v2575
      %v2577 = vrot.slane %v2551, 2
      %v2578 = vsel %vm2122, %v2575, %v2577
      %v2579 = vrot.slane %v2552, 2
      %v2580 = vsel %vm2122, %v2577, %v2579
      %v2581 = vrot.slane %v2553, 2
      %v2582 = vsel %vm2122, %v2579, %v2581
      %v2583 = vrot.slane %v2554, 2
      %v2584 = vsel %vm2122, %v2581, %v2583
      %v2585 = vrot.slane %v2555, 2
      %v2586 = vsel %vm2122, %v2583, %v2585
      %v2587 = vrot.slane %v2556, 2
      %v2588 = vsel %vm2122, %v2585, %v2587
      %v2589 = vrot.slane %v2557, 2
      %v2590 = vsel %vm2122, %v2587, %v2589
      %v2591 = vrot.slane %v2558, 2
      %v2592 = vsel %vm2122, %v2589, %v2591
      %v2593 = vrot.slane %v2559, 2
      %v2594 = vsel %vm2122, %v2591, %v2593
      %v2595 = vrot.slane %v2560, 2
      %v2596 = vsel %vm2122, %v2593, %v2595
      %v2597 = vrot.slane %v2561, 2
      %v2598 = vsel %vm2122, %v2595, %v2597
      %v2600 = vsel %vm464, %v2564, 0
      %v2603 = vsel %vm464, %v2566, 0
      %v2606 = vsel %vm464, %v2568, 0
      %v2609 = vsel %vm464, %v2570, 0
      %v2612 = vsel %vm464, %v2572, 0
      %v2615 = vsel %vm464, %v2574, 0
      %v2618 = vsel %vm464, %v2576, 0
      %v2621 = vsel %vm464, %v2578, 0
      %v2624 = vsel %vm464, %v2580, 0
      %v2627 = vsel %vm464, %v2582, 0
      %v2630 = vsel %vm464, %v2584, 0
      %v2633 = vsel %vm464, %v2586, 0
      %v2636 = vsel %vm464, %v2588, 0
      %v2639 = vsel %vm464, %v2590, 0
      %v2642 = vsel %vm464, %v2592, 0
      %v2645 = vsel %vm464, %v2594, 0
      %v2648 = vsel %vm464, %v2596, 0
      %v2651 = vsel %vm464, %v2598, 0
      %v2654 = vsel %vm519, %v2468, 0
      %2656 = vmatprep.subr.bf16.mxu0 0
      %2657 = vmatpush1.bf16.msra.mxu0 %v2654
      %2658 = vmatprep.subr.bf16.mxu0 0
      %2659 = vmatpush1.bf16.msra.mxu0 0
      %2660 = vmatprep.subr.bf16.mxu0 0
      %2661 = vmatpush1.bf16.msra.mxu0 0
      %2662 = vmatprep.subr.bf16.mxu0 0
      %2663 = vmatpush1.bf16.msra.mxu0 0
      %2664 = vmatprep.subr.bf16.mxu0 0
      %2665 = vmatpush1.bf16.msra.mxu0 0
      %2666 = vmatprep.subr.bf16.mxu0 0
      %2667 = vmatpush1.bf16.msra.mxu0 0
      %2668 = vmatprep.subr.bf16.mxu0 0
      %2669 = vmatpush1.bf16.msra.mxu0 0
      %2670 = vmatprep.subr.bf16.mxu0 0
      %2671 = vmatpush1.bf16.msra.mxu0 0
      %2672 = vmatprep.subr.bf16.mxu0 0
      %2673 = vmatpush1.bf16.msra.mxu0 0
      %2674 = vmatprep.subr.bf16.mxu0 0
      %2675 = vmatpush1.bf16.msra.mxu0 0
      %2676 = vmatprep.subr.bf16.mxu0 0
      %2677 = vmatpush1.bf16.msra.mxu0 0
      %2678 = vmatprep.subr.bf16.mxu0 0
      %2679 = vmatpush1.bf16.msra.mxu0 0
      %2680 = vmatprep.subr.bf16.mxu0 0
      %2681 = vmatpush1.bf16.msra.mxu0 0
      %2682 = vmatprep.subr.bf16.mxu0 0
      %2683 = vmatpush1.bf16.msra.mxu0 0
      %2684 = vmatprep.subr.bf16.mxu0 0
      %2685 = vmatpush1.bf16.msra.mxu0 0
      %2686 = vmatprep.subr.bf16.mxu0 0
      %2687 = vmatpush1.bf16.msra.mxu0 0
      %2688 = vmatprep.mubr.bf16.mxu0 0
      %2689 = vmatmul.mubr.bf16.gmra.mrb[0].mxu0 %v2600
      %v2690 = vpop.f32.mrb[0].mxu0
      %v2691 = vadd.f32 0.0, %v2690
      %v2692 = vpop.f32.mrb[0].mxu0
      %v2693 = vpop.f32.mrb[0].mxu0
      %v2694 = vadd.f32 0.0, %v2693
      %v2695 = vpop.f32.mrb[0].mxu0
      %2696 = vmatprep.mubr.bf16.mxu0 0
      %2697 = vmatmul.mubr.bf16.gmra.mrb[0].mxu0 %v2603
      %v2698 = vpop.f32.mrb[0].mxu0
      %v2699 = vadd.f32 0.0, %v2698
      %v2700 = vpop.f32.mrb[0].mxu0
      %v2701 = vpop.f32.mrb[0].mxu0
      %v2702 = vadd.f32 0.0, %v2701
      %v2703 = vpop.f32.mrb[0].mxu0
      %2704 = vmatprep.mubr.bf16.mxu0 0
      %2705 = vmatmul.mubr.bf16.gmra.mrb[0].mxu0 %v2606
      %v2706 = vpop.f32.mrb[0].mxu0
      %v2707 = vadd.f32 0.0, %v2706
      %v2708 = vpop.f32.mrb[0].mxu0
      %v2709 = vpop.f32.mrb[0].mxu0
      %v2710 = vadd.f32 0.0, %v2709
      %v2711 = vpop.f32.mrb[0].mxu0
      %2712 = vmatprep.mubr.bf16.mxu0 0
      %2713 = vmatmul.mubr.bf16.gmra.mrb[0].mxu0 %v2609
      %v2714 = vpop.f32.mrb[0].mxu0
      %v2715 = vadd.f32 0.0, %v2714
      %v2716 = vpop.f32.mrb[0].mxu0
      %v2717 = vpop.f32.mrb[0].mxu0
      %v2718 = vadd.f32 0.0, %v2717
      %v2719 = vpop.f32.mrb[0].mxu0
      %2720 = vmatprep.mubr.bf16.mxu0 0
      %2721 = vmatmul.mubr.bf16.gmra.mrb[0].mxu0 %v2612
      %v2722 = vpop.f32.mrb[0].mxu0
      %v2723 = vadd.f32 0.0, %v2722
      %v2724 = vpop.f32.mrb[0].mxu0
      %v2725 = vpop.f32.mrb[0].mxu0
      %v2726 = vadd.f32 0.0, %v2725
      %v2727 = vpop.f32.mrb[0].mxu0
      %2728 = vmatprep.mubr.bf16.mxu0 0
      %2729 = vmatmul.mubr.bf16.gmra.mrb[0].mxu0 %v2615
      %v2730 = vpop.f32.mrb[0].mxu0
      %v2731 = vadd.f32 0.0, %v2730
      %v2732 = vpop.f32.mrb[0].mxu0
      %v2733 = vpop.f32.mrb[0].mxu0
      %v2734 = vadd.f32 0.0, %v2733
      %v2735 = vpop.f32.mrb[0].mxu0
      %2736 = vmatprep.mubr.bf16.mxu0 0
      %2737 = vmatmul.mubr.bf16.gmra.mrb[0].mxu0 %v2618
      %v2738 = vpop.f32.mrb[0].mxu0
      %v2739 = vadd.f32 0.0, %v2738
      %v2740 = vpop.f32.mrb[0].mxu0
      %v2741 = vpop.f32.mrb[0].mxu0
      %v2742 = vadd.f32 0.0, %v2741
      %v2743 = vpop.f32.mrb[0].mxu0
      %2744 = vmatprep.mubr.bf16.mxu0 0
      %2745 = vmatmul.mubr.bf16.gmra.mrb[0].mxu0 %v2621
      %v2746 = vpop.f32.mrb[0].mxu0
      %v2747 = vadd.f32 0.0, %v2746
      %v2748 = vpop.f32.mrb[0].mxu0
      %v2749 = vpop.f32.mrb[0].mxu0
      %v2750 = vadd.f32 0.0, %v2749
      %v2751 = vpop.f32.mrb[0].mxu0
      %2752 = vmatprep.mubr.bf16.mxu0 0
      %2753 = vmatmul.mubr.bf16.gmra.mrb[0].mxu0 %v2624
      %v2754 = vpop.f32.mrb[0].mxu0
      %v2755 = vadd.f32 0.0, %v2754
      %v2756 = vpop.f32.mrb[0].mxu0
      %v2757 = vpop.f32.mrb[0].mxu0
      %v2758 = vadd.f32 0.0, %v2757
      %v2759 = vpop.f32.mrb[0].mxu0
      %2760 = vmatprep.mubr.bf16.mxu0 0
      %2761 = vmatmul.mubr.bf16.gmra.mrb[0].mxu0 %v2627
      %v2762 = vpop.f32.mrb[0].mxu0
      %v2763 = vadd.f32 0.0, %v2762
      %v2764 = vpop.f32.mrb[0].mxu0
      %v2765 = vpop.f32.mrb[0].mxu0
      %v2766 = vadd.f32 0.0, %v2765
      %v2767 = vpop.f32.mrb[0].mxu0
      %2768 = vmatprep.mubr.bf16.mxu0 0
      %2769 = vmatmul.mubr.bf16.gmra.mrb[0].mxu0 %v2630
      %v2770 = vpop.f32.mrb[0].mxu0
      %v2771 = vadd.f32 0.0, %v2770
      %v2772 = vpop.f32.mrb[0].mxu0
      %v2773 = vpop.f32.mrb[0].mxu0
      %v2774 = vadd.f32 0.0, %v2773
      %v2775 = vpop.f32.mrb[0].mxu0
      %2776 = vmatprep.mubr.bf16.mxu0 0
      %2777 = vmatmul.mubr.bf16.gmra.mrb[0].mxu0 %v2633
      %v2778 = vpop.f32.mrb[0].mxu0
      %v2779 = vadd.f32 0.0, %v2778
      %v2780 = vpop.f32.mrb[0].mxu0
      %v2781 = vpop.f32.mrb[0].mxu0
      %v2782 = vadd.f32 0.0, %v2781
      %v2783 = vpop.f32.mrb[0].mxu0
      %2784 = vmatprep.mubr.bf16.mxu0 0
      %2785 = vmatmul.mubr.bf16.gmra.mrb[0].mxu0 %v2636
      %v2786 = vpop.f32.mrb[0].mxu0
      %v2787 = vadd.f32 0.0, %v2786
      %v2788 = vpop.f32.mrb[0].mxu0
      %v2789 = vpop.f32.mrb[0].mxu0
      %v2790 = vadd.f32 0.0, %v2789
      %v2791 = vpop.f32.mrb[0].mxu0
      %2792 = vmatprep.mubr.bf16.mxu0 0
      %2793 = vmatmul.mubr.bf16.gmra.mrb[0].mxu0 %v2639
      %v2794 = vpop.f32.mrb[0].mxu0
      %v2795 = vadd.f32 0.0, %v2794
      %v2796 = vpop.f32.mrb[0].mxu0
      %v2797 = vpop.f32.mrb[0].mxu0
      %v2798 = vadd.f32 0.0, %v2797
      %v2799 = vpop.f32.mrb[0].mxu0
      %2800 = vmatprep.mubr.bf16.mxu0 0
      %2801 = vmatmul.mubr.bf16.gmra.mrb[0].mxu0 %v2642
      %v2802 = vpop.f32.mrb[0].mxu0
      %v2803 = vadd.f32 0.0, %v2802
      %v2804 = vpop.f32.mrb[0].mxu0
      %v2805 = vpop.f32.mrb[0].mxu0
      %v2806 = vadd.f32 0.0, %v2805
      %v2807 = vpop.f32.mrb[0].mxu0
      %2808 = vmatprep.mubr.bf16.mxu0 0
      %2809 = vmatmul.mubr.bf16.gmra.mrb[0].mxu0 %v2645
      %v2810 = vpop.f32.mrb[0].mxu0
      %v2811 = vadd.f32 0.0, %v2810
      %v2812 = vpop.f32.mrb[0].mxu0
      %v2813 = vpop.f32.mrb[0].mxu0
      %v2814 = vadd.f32 0.0, %v2813
      %v2815 = vpop.f32.mrb[0].mxu0
      %2816 = vmatprep.mubr.bf16.mxu0 0
      %2817 = vmatmul.mubr.bf16.gmra.mrb[0].mxu0 %v2648
      %v2818 = vpop.f32.mrb[0].mxu0
      %v2819 = vadd.f32 0.0, %v2818
      %v2820 = vpop.f32.mrb[0].mxu0
      %v2821 = vpop.f32.mrb[0].mxu0
      %v2822 = vadd.f32 0.0, %v2821
      %v2823 = vpop.f32.mrb[0].mxu0
      %2824 = vmatprep.mubr.bf16.mxu0 0
      %2825 = vmatmul.mubr.bf16.gmra.mrb[0].mxu0 %v2651
      %v2826 = vpop.f32.mrb[0].mxu0
      %v2827 = vadd.f32 0.0, %v2826
      %v2828 = vpop.f32.mrb[0].mxu0
      %v2829 = vpop.f32.mrb[0].mxu0
      %v2830 = vadd.f32 0.0, %v2829
      %v2831 = vpop.f32.mrb[0].mxu0
      %2832 = vdwg.mxu0
      %v2833 = vadd.f32 %v2394, %v2691
      %v2834 = vadd.f32 %v2395, %v2694
      %v2835 = vadd.f32 %v2396, %v2699
      %v2836 = vadd.f32 %v2397, %v2702
      %v2837 = vadd.f32 %v2398, %v2707
      %v2838 = vadd.f32 %v2399, %v2710
      %v2839 = vadd.f32 %v2400, %v2715
      %v2840 = vadd.f32 %v2401, %v2718
      %v2841 = vadd.f32 %v2402, %v2723
      %v2842 = vadd.f32 %v2403, %v2726
      %v2843 = vadd.f32 %v2404, %v2731
      %v2844 = vadd.f32 %v2405, %v2734
      %v2845 = vadd.f32 %v2406, %v2739
      %v2846 = vadd.f32 %v2407, %v2742
      %v2847 = vadd.f32 %v2408, %v2747
      %v2848 = vadd.f32 %v2409, %v2750
      %v2849 = vadd.f32 %v2410, %v2755
      %v2850 = vadd.f32 %v2411, %v2758
      %v2851 = vadd.f32 %v2412, %v2763
      %v2852 = vadd.f32 %v2413, %v2766
      %v2853 = vadd.f32 %v2414, %v2771
      %v2854 = vadd.f32 %v2415, %v2774
      %v2855 = vadd.f32 %v2416, %v2779
      %v2856 = vadd.f32 %v2417, %v2782
      %v2857 = vadd.f32 %v2418, %v2787
      %v2858 = vadd.f32 %v2419, %v2790
      %v2859 = vadd.f32 %v2420, %v2795
      %v2860 = vadd.f32 %v2421, %v2798
      %v2861 = vadd.f32 %v2422, %v2803
      %v2862 = vadd.f32 %v2423, %v2806
      %v2863 = vadd.f32 %v2424, %v2811
      %v2864 = vadd.f32 %v2425, %v2814
      %v2865 = vadd.f32 %v2426, %v2819
      %v2866 = vadd.f32 %v2427, %v2822
      %v2867 = vadd.f32 %v2428, %v2827
      %v2868 = vadd.f32 %v2429, %v2830
      %v2869 = vld [vmem:[%s168 + $0xa0] sm:$0x7]
      %s2870 = scalar_lea.vmem %s172, 28
      %v2871 = vld [vmem:[%s2870] sm:$0xf]
      %v2873 = vunpack.c.l.b16 %v2869
      %v2874 = vpack.c.b16 %v2873, %v2873
      %vm2875 = vsmask.f32 5376
      %v2877 = vshrl.u32 %v2543, 16
      %v2879 = vrot.slane %v2877, 2
      %v2880 = vshll.u32 %v2543, 16
      %v2882 = vrot.slane %v2880, 3
      %v2883 = vor.u32 %v2879, %v2882
      %v2885 = vshrl.u32 %v2544, 16
      %v2887 = vrot.slane %v2885, 2
      %v2888 = vshll.u32 %v2544, 16
      %v2890 = vrot.slane %v2888, 3
      %v2891 = vor.u32 %v2887, %v2890
      %v2892 = vsel %vm2875, %v2883, %v2891
      %v2894 = vshrl.u32 %v2545, 16
      %v2896 = vrot.slane %v2894, 2
      %v2897 = vshll.u32 %v2545, 16
      %v2899 = vrot.slane %v2897, 3
      %v2900 = vor.u32 %v2896, %v2899
      %v2901 = vsel %vm2875, %v2891, %v2900
      %v2903 = vshrl.u32 %v2546, 16
      %v2905 = vrot.slane %v2903, 2
      %v2906 = vshll.u32 %v2546, 16
      %v2908 = vrot.slane %v2906, 3
      %v2909 = vor.u32 %v2905, %v2908
      %v2910 = vsel %vm2875, %v2900, %v2909
      %v2912 = vshrl.u32 %v2547, 16
      %v2914 = vrot.slane %v2912, 2
      %v2915 = vshll.u32 %v2547, 16
      %v2917 = vrot.slane %v2915, 3
      %v2918 = vor.u32 %v2914, %v2917
      %v2919 = vsel %vm2875, %v2909, %v2918
      %v2921 = vshrl.u32 %v2548, 16
      %v2923 = vrot.slane %v2921, 2
      %v2924 = vshll.u32 %v2548, 16
      %v2926 = vrot.slane %v2924, 3
      %v2927 = vor.u32 %v2923, %v2926
      %v2928 = vsel %vm2875, %v2918, %v2927
      %v2930 = vshrl.u32 %v2549, 16
      %v2932 = vrot.slane %v2930, 2
      %v2933 = vshll.u32 %v2549, 16
      %v2935 = vrot.slane %v2933, 3
      %v2936 = vor.u32 %v2932, %v2935
      %v2937 = vsel %vm2875, %v2927, %v2936
      %v2939 = vshrl.u32 %v2550, 16
      %v2941 = vrot.slane %v2939, 2
      %v2942 = vshll.u32 %v2550, 16
      %v2944 = vrot.slane %v2942, 3
      %v2945 = vor.u32 %v2941, %v2944
      %v2946 = vsel %vm2875, %v2936, %v2945
      %v2948 = vshrl.u32 %v2551, 16
      %v2950 = vrot.slane %v2948, 2
      %v2951 = vshll.u32 %v2551, 16
      %v2953 = vrot.slane %v2951, 3
      %v2954 = vor.u32 %v2950, %v2953
      %v2955 = vsel %vm2875, %v2945, %v2954
      %v2957 = vshrl.u32 %v2552, 16
      %v2959 = vrot.slane %v2957, 2
      %v2960 = vshll.u32 %v2552, 16
      %v2962 = vrot.slane %v2960, 3
      %v2963 = vor.u32 %v2959, %v2962
      %v2964 = vsel %vm2875, %v2954, %v2963
      %v2966 = vshrl.u32 %v2553, 16
      %v2968 = vrot.slane %v2966, 2
      %v2969 = vshll.u32 %v2553, 16
      %v2971 = vrot.slane %v2969, 3
      %v2972 = vor.u32 %v2968, %v2971
      %v2973 = vsel %vm2875, %v2963, %v2972
      %v2975 = vshrl.u32 %v2554, 16
      %v2977 = vrot.slane %v2975, 2
      %v2978 = vshll.u32 %v2554, 16
      %v2980 = vrot.slane %v2978, 3
      %v2981 = vor.u32 %v2977, %v2980
      %v2982 = vsel %vm2875, %v2972, %v2981
      %v2984 = vshrl.u32 %v2555, 16
      %v2986 = vrot.slane %v2984, 2
      %v2987 = vshll.u32 %v2555, 16
      %v2989 = vrot.slane %v2987, 3
      %v2990 = vor.u32 %v2986, %v2989
      %v2991 = vsel %vm2875, %v2981, %v2990
      %v2993 = vshrl.u32 %v2556, 16
      %v2995 = vrot.slane %v2993, 2
      %v2996 = vshll.u32 %v2556, 16
      %v2998 = vrot.slane %v2996, 3
      %v2999 = vor.u32 %v2995, %v2998
      %v3000 = vsel %vm2875, %v2990, %v2999
      %v3002 = vshrl.u32 %v2557, 16
      %v3004 = vrot.slane %v3002, 2
      %v3005 = vshll.u32 %v2557, 16
      %v3007 = vrot.slane %v3005, 3
      %v3008 = vor.u32 %v3004, %v3007
      %v3009 = vsel %vm2875, %v2999, %v3008
      %v3011 = vshrl.u32 %v2558, 16
      %v3013 = vrot.slane %v3011, 2
      %v3014 = vshll.u32 %v2558, 16
      %v3016 = vrot.slane %v3014, 3
      %v3017 = vor.u32 %v3013, %v3016
      %v3018 = vsel %vm2875, %v3008, %v3017
      %v3020 = vshrl.u32 %v2559, 16
      %v3022 = vrot.slane %v3020, 2
      %v3023 = vshll.u32 %v2559, 16
      %v3025 = vrot.slane %v3023, 3
      %v3026 = vor.u32 %v3022, %v3025
      %v3027 = vsel %vm2875, %v3017, %v3026
      %v3029 = vshrl.u32 %v2560, 16
      %v3031 = vrot.slane %v3029, 2
      %v3032 = vshll.u32 %v2560, 16
      %v3034 = vrot.slane %v3032, 3
      %v3035 = vor.u32 %v3031, %v3034
      %v3036 = vsel %vm2875, %v3026, %v3035
      %v3038 = vshrl.u32 %v2874, 16
      %v3040 = vrot.slane %v3038, 2
      %v3041 = vshll.u32 %v2874, 16
      %v3043 = vrot.slane %v3041, 3
      %v3044 = vor.u32 %v3040, %v3043
      %v3045 = vsel %vm2875, %v3035, %v3044
      %v3047 = vsel %vm464, %v2892, 0
      %v3050 = vsel %vm464, %v2901, 0
      %v3053 = vsel %vm464, %v2910, 0
      %v3056 = vsel %vm464, %v2919, 0
      %v3059 = vsel %vm464, %v2928, 0
      %v3062 = vsel %vm464, %v2937, 0
      %v3065 = vsel %vm464, %v2946, 0
      %v3068 = vsel %vm464, %v2955, 0
      %v3071 = vsel %vm464, %v2964, 0
      %v3074 = vsel %vm464, %v2973, 0
      %v3077 = vsel %vm464, %v2982, 0
      %v3080 = vsel %vm464, %v2991, 0
      %v3083 = vsel %vm464, %v3000, 0
      %v3086 = vsel %vm464, %v3009, 0
      %v3089 = vsel %vm464, %v3018, 0
      %v3092 = vsel %vm464, %v3027, 0
      %v3095 = vsel %vm464, %v3036, 0
      %v3098 = vsel %vm464, %v3045, 0
      %v3101 = vsel %vm519, %v2871, 0
      %3103 = vmatprep.subr.bf16.mxu0 0
      %3104 = vmatpush1.bf16.msra.mxu0 %v3101
      %3105 = vmatprep.subr.bf16.mxu0 0
      %3106 = vmatpush1.bf16.msra.mxu0 0
      %3107 = vmatprep.subr.bf16.mxu0 0
      %3108 = vmatpush1.bf16.msra.mxu0 0
      %3109 = vmatprep.subr.bf16.mxu0 0
      %3110 = vmatpush1.bf16.msra.mxu0 0
      %3111 = vmatprep.subr.bf16.mxu0 0
      %3112 = vmatpush1.bf16.msra.mxu0 0
      %3113 = vmatprep.subr.bf16.mxu0 0
      %3114 = vmatpush1.bf16.msra.mxu0 0
      %3115 = vmatprep.subr.bf16.mxu0 0
      %3116 = vmatpush1.bf16.msra.mxu0 0
      %3117 = vmatprep.subr.bf16.mxu0 0
      %3118 = vmatpush1.bf16.msra.mxu0 0
      %3119 = vmatprep.subr.bf16.mxu0 0
      %3120 = vmatpush1.bf16.msra.mxu0 0
      %3121 = vmatprep.subr.bf16.mxu0 0
      %3122 = vmatpush1.bf16.msra.mxu0 0
      %3123 = vmatprep.subr.bf16.mxu0 0
      %3124 = vmatpush1.bf16.msra.mxu0 0
      %3125 = vmatprep.subr.bf16.mxu0 0
      %3126 = vmatpush1.bf16.msra.mxu0 0
      %3127 = vmatprep.subr.bf16.mxu0 0
      %3128 = vmatpush1.bf16.msra.mxu0 0
      %3129 = vmatprep.subr.bf16.mxu0 0
      %3130 = vmatpush1.bf16.msra.mxu0 0
      %3131 = vmatprep.subr.bf16.mxu0 0
      %3132 = vmatpush1.bf16.msra.mxu0 0
      %3133 = vmatprep.subr.bf16.mxu0 0
      %3134 = vmatpush1.bf16.msra.mxu0 0
      %3135 = vmatprep.mubr.bf16.mxu0 0
      %3136 = vmatmul.mubr.bf16.gmra.mrb[0].mxu0 %v3047
      %v3137 = vpop.f32.mrb[0].mxu0
      %v3138 = vadd.f32 0.0, %v3137
      %v3139 = vpop.f32.mrb[0].mxu0
      %v3140 = vpop.f32.mrb[0].mxu0
      %v3141 = vadd.f32 0.0, %v3140
      %v3142 = vpop.f32.mrb[0].mxu0
      %3143 = vmatprep.mubr.bf16.mxu0 0
      %3144 = vmatmul.mubr.bf16.gmra.mrb[0].mxu0 %v3050
      %v3145 = vpop.f32.mrb[0].mxu0
      %v3146 = vadd.f32 0.0, %v3145
      %v3147 = vpop.f32.mrb[0].mxu0
      %v3148 = vpop.f32.mrb[0].mxu0
      %v3149 = vadd.f32 0.0, %v3148
      %v3150 = vpop.f32.mrb[0].mxu0
      %3151 = vmatprep.mubr.bf16.mxu0 0
      %3152 = vmatmul.mubr.bf16.gmra.mrb[0].mxu0 %v3053
      %v3153 = vpop.f32.mrb[0].mxu0
      %v3154 = vadd.f32 0.0, %v3153
      %v3155 = vpop.f32.mrb[0].mxu0
      %v3156 = vpop.f32.mrb[0].mxu0
      %v3157 = vadd.f32 0.0, %v3156
      %v3158 = vpop.f32.mrb[0].mxu0
      %3159 = vmatprep.mubr.bf16.mxu0 0
      %3160 = vmatmul.mubr.bf16.gmra.mrb[0].mxu0 %v3056
      %v3161 = vpop.f32.mrb[0].mxu0
      %v3162 = vadd.f32 0.0, %v3161
      %v3163 = vpop.f32.mrb[0].mxu0
      %v3164 = vpop.f32.mrb[0].mxu0
      %v3165 = vadd.f32 0.0, %v3164
      %v3166 = vpop.f32.mrb[0].mxu0
      %3167 = vmatprep.mubr.bf16.mxu0 0
      %3168 = vmatmul.mubr.bf16.gmra.mrb[0].mxu0 %v3059
      %v3169 = vpop.f32.mrb[0].mxu0
      %v3170 = vadd.f32 0.0, %v3169
      %v3171 = vpop.f32.mrb[0].mxu0
      %v3172 = vpop.f32.mrb[0].mxu0
      %v3173 = vadd.f32 0.0, %v3172
      %v3174 = vpop.f32.mrb[0].mxu0
      %3175 = vmatprep.mubr.bf16.mxu0 0
      %3176 = vmatmul.mubr.bf16.gmra.mrb[0].mxu0 %v3062
      %v3177 = vpop.f32.mrb[0].mxu0
      %v3178 = vadd.f32 0.0, %v3177
      %v3179 = vpop.f32.mrb[0].mxu0
      %v3180 = vpop.f32.mrb[0].mxu0
      %v3181 = vadd.f32 0.0, %v3180
      %v3182 = vpop.f32.mrb[0].mxu0
      %3183 = vmatprep.mubr.bf16.mxu0 0
      %3184 = vmatmul.mubr.bf16.gmra.mrb[0].mxu0 %v3065
      %v3185 = vpop.f32.mrb[0].mxu0
      %v3186 = vadd.f32 0.0, %v3185
      %v3187 = vpop.f32.mrb[0].mxu0
      %v3188 = vpop.f32.mrb[0].mxu0
      %v3189 = vadd.f32 0.0, %v3188
      %v3190 = vpop.f32.mrb[0].mxu0
      %3191 = vmatprep.mubr.bf16.mxu0 0
      %3192 = vmatmul.mubr.bf16.gmra.mrb[0].mxu0 %v3068
      %v3193 = vpop.f32.mrb[0].mxu0
      %v3194 = vadd.f32 0.0, %v3193
      %v3195 = vpop.f32.mrb[0].mxu0
      %v3196 = vpop.f32.mrb[0].mxu0
      %v3197 = vadd.f32 0.0, %v3196
      %v3198 = vpop.f32.mrb[0].mxu0
      %3199 = vmatprep.mubr.bf16.mxu0 0
      %3200 = vmatmul.mubr.bf16.gmra.mrb[0].mxu0 %v3071
      %v3201 = vpop.f32.mrb[0].mxu0
      %v3202 = vadd.f32 0.0, %v3201
      %v3203 = vpop.f32.mrb[0].mxu0
      %v3204 = vpop.f32.mrb[0].mxu0
      %v3205 = vadd.f32 0.0, %v3204
      %v3206 = vpop.f32.mrb[0].mxu0
      %3207 = vmatprep.mubr.bf16.mxu0 0
      %3208 = vmatmul.mubr.bf16.gmra.mrb[0].mxu0 %v3074
      %v3209 = vpop.f32.mrb[0].mxu0
      %v3210 = vadd.f32 0.0, %v3209
      %v3211 = vpop.f32.mrb[0].mxu0
      %v3212 = vpop.f32.mrb[0].mxu0
      %v3213 = vadd.f32 0.0, %v3212
      %v3214 = vpop.f32.mrb[0].mxu0
      %3215 = vmatprep.mubr.bf16.mxu0 0
      %3216 = vmatmul.mubr.bf16.gmra.mrb[0].mxu0 %v3077
      %v3217 = vpop.f32.mrb[0].mxu0
      %v3218 = vadd.f32 0.0, %v3217
      %v3219 = vpop.f32.mrb[0].mxu0
      %v3220 = vpop.f32.mrb[0].mxu0
      %v3221 = vadd.f32 0.0, %v3220
      %v3222 = vpop.f32.mrb[0].mxu0
      %3223 = vmatprep.mubr.bf16.mxu0 0
      %3224 = vmatmul.mubr.bf16.gmra.mrb[0].mxu0 %v3080
      %v3225 = vpop.f32.mrb[0].mxu0
      %v3226 = vadd.f32 0.0, %v3225
      %v3227 = vpop.f32.mrb[0].mxu0
      %v3228 = vpop.f32.mrb[0].mxu0
      %v3229 = vadd.f32 0.0, %v3228
      %v3230 = vpop.f32.mrb[0].mxu0
      %3231 = vmatprep.mubr.bf16.mxu0 0
      %3232 = vmatmul.mubr.bf16.gmra.mrb[0].mxu0 %v3083
      %v3233 = vpop.f32.mrb[0].mxu0
      %v3234 = vadd.f32 0.0, %v3233
      %v3235 = vpop.f32.mrb[0].mxu0
      %v3236 = vpop.f32.mrb[0].mxu0
      %v3237 = vadd.f32 0.0, %v3236
      %v3238 = vpop.f32.mrb[0].mxu0
      %3239 = vmatprep.mubr.bf16.mxu0 0
      %3240 = vmatmul.mubr.bf16.gmra.mrb[0].mxu0 %v3086
      %v3241 = vpop.f32.mrb[0].mxu0
      %v3242 = vadd.f32 0.0, %v3241
      %v3243 = vpop.f32.mrb[0].mxu0
      %v3244 = vpop.f32.mrb[0].mxu0
      %v3245 = vadd.f32 0.0, %v3244
      %v3246 = vpop.f32.mrb[0].mxu0
      %3247 = vmatprep.mubr.bf16.mxu0 0
      %3248 = vmatmul.mubr.bf16.gmra.mrb[0].mxu0 %v3089
      %v3249 = vpop.f32.mrb[0].mxu0
      %v3250 = vadd.f32 0.0, %v3249
      %v3251 = vpop.f32.mrb[0].mxu0
      %v3252 = vpop.f32.mrb[0].mxu0
      %v3253 = vadd.f32 0.0, %v3252
      %v3254 = vpop.f32.mrb[0].mxu0
      %3255 = vmatprep.mubr.bf16.mxu0 0
      %3256 = vmatmul.mubr.bf16.gmra.mrb[0].mxu0 %v3092
      %v3257 = vpop.f32.mrb[0].mxu0
      %v3258 = vadd.f32 0.0, %v3257
      %v3259 = vpop.f32.mrb[0].mxu0
      %v3260 = vpop.f32.mrb[0].mxu0
      %v3261 = vadd.f32 0.0, %v3260
      %v3262 = vpop.f32.mrb[0].mxu0
      %3263 = vmatprep.mubr.bf16.mxu0 0
      %3264 = vmatmul.mubr.bf16.gmra.mrb[0].mxu0 %v3095
      %v3265 = vpop.f32.mrb[0].mxu0
      %v3266 = vadd.f32 0.0, %v3265
      %v3267 = vpop.f32.mrb[0].mxu0
      %v3268 = vpop.f32.mrb[0].mxu0
      %v3269 = vadd.f32 0.0, %v3268
      %v3270 = vpop.f32.mrb[0].mxu0
      %3271 = vmatprep.mubr.bf16.mxu0 0
      %3272 = vmatmul.mubr.bf16.gmra.mrb[0].mxu0 %v3098
      %v3273 = vpop.f32.mrb[0].mxu0
      %v3274 = vadd.f32 0.0, %v3273
      %v3275 = vpop.f32.mrb[0].mxu0
      %v3276 = vpop.f32.mrb[0].mxu0
      %v3277 = vadd.f32 0.0, %v3276
      %v3278 = vpop.f32.mrb[0].mxu0
      %3279 = vdwg.mxu0
      %v3280 = vadd.f32 %v2833, %v3138
      %v3281 = vadd.f32 %v2834, %v3141
      %v3282 = vadd.f32 %v2835, %v3146
      %v3283 = vadd.f32 %v2836, %v3149
      %v3284 = vadd.f32 %v2837, %v3154
      %v3285 = vadd.f32 %v2838, %v3157
      %v3286 = vadd.f32 %v2839, %v3162
      %v3287 = vadd.f32 %v2840, %v3165
      %v3288 = vadd.f32 %v2841, %v3170
      %v3289 = vadd.f32 %v2842, %v3173
      %v3290 = vadd.f32 %v2843, %v3178
      %v3291 = vadd.f32 %v2844, %v3181
      %v3292 = vadd.f32 %v2845, %v3186
      %v3293 = vadd.f32 %v2846, %v3189
      %v3294 = vadd.f32 %v2847, %v3194
      %v3295 = vadd.f32 %v2848, %v3197
      %v3296 = vadd.f32 %v2849, %v3202
      %v3297 = vadd.f32 %v2850, %v3205
      %v3298 = vadd.f32 %v2851, %v3210
      %v3299 = vadd.f32 %v2852, %v3213
      %v3300 = vadd.f32 %v2853, %v3218
      %v3301 = vadd.f32 %v2854, %v3221
      %v3302 = vadd.f32 %v2855, %v3226
      %v3303 = vadd.f32 %v2856, %v3229
      %v3304 = vadd.f32 %v2857, %v3234
      %v3305 = vadd.f32 %v2858, %v3237
      %v3306 = vadd.f32 %v2859, %v3242
      %v3307 = vadd.f32 %v2860, %v3245
      %v3308 = vadd.f32 %v2861, %v3250
      %v3309 = vadd.f32 %v2862, %v3253
      %v3310 = vadd.f32 %v2863, %v3258
      %v3311 = vadd.f32 %v2864, %v3261
      %v3312 = vadd.f32 %v2865, %v3266
      %v3313 = vadd.f32 %v2866, %v3269
      %v3314 = vadd.f32 %v2867, %v3274
      %v3315 = vadd.f32 %v2868, %v3277
      %v3316 = vld [vmem:[%s168 + $0x10] sm:$0x8]
      %s3317 = scalar_lea.vmem %s172, 32
      %v3318 = vld [vmem:[%s3317] sm:$0xf]
      %v3320 = vunpack.c.l.b16 %v3316
      %v3321 = vpack.c.b16 %v2507, %v3320
      %vm3322 = vcmask 1044480
      %v3323 = vrot.slane %v3321, 3
      %v3324 = vrot.slane %v2544, 3
      %v3325 = vsel %vm3322, %v3323, %v3324
      %v3326 = vrot.slane %v2545, 3
      %v3327 = vsel %vm3322, %v3324, %v3326
      %v3328 = vrot.slane %v2546, 3
      %v3329 = vsel %vm3322, %v3326, %v3328
      %v3330 = vrot.slane %v2547, 3
      %v3331 = vsel %vm3322, %v3328, %v3330
      %v3332 = vrot.slane %v2548, 3
      %v3333 = vsel %vm3322, %v3330, %v3332
      %v3334 = vrot.slane %v2549, 3
      %v3335 = vsel %vm3322, %v3332, %v3334
      %v3336 = vrot.slane %v2550, 3
      %v3337 = vsel %vm3322, %v3334, %v3336
      %v3338 = vrot.slane %v2551, 3
      %v3339 = vsel %vm3322, %v3336, %v3338
      %v3340 = vrot.slane %v2552, 3
      %v3341 = vsel %vm3322, %v3338, %v3340
      %v3342 = vrot.slane %v2553, 3
      %v3343 = vsel %vm3322, %v3340, %v3342
      %v3344 = vrot.slane %v2554, 3
      %v3345 = vsel %vm3322, %v3342, %v3344
      %v3346 = vrot.slane %v2555, 3
      %v3347 = vsel %vm3322, %v3344, %v3346
      %v3348 = vrot.slane %v2556, 3
      %v3349 = vsel %vm3322, %v3346, %v3348
      %v3350 = vrot.slane %v2557, 3
      %v3351 = vsel %vm3322, %v3348, %v3350
      %v3352 = vrot.slane %v2558, 3
      %v3353 = vsel %vm3322, %v3350, %v3352
      %v3354 = vrot.slane %v2559, 3
      %v3355 = vsel %vm3322, %v3352, %v3354
      %v3356 = vrot.slane %v2560, 3
      %v3357 = vsel %vm3322, %v3354, %v3356
      %v3358 = vrot.slane %v2874, 3
      %v3359 = vsel %vm3322, %v3356, %v3358
      %v3361 = vsel %vm464, %v3325, 0
      %v3364 = vsel %vm464, %v3327, 0
      %v3367 = vsel %vm464, %v3329, 0
      %v3370 = vsel %vm464, %v3331, 0
      %v3373 = vsel %vm464, %v3333, 0
      %v3376 = vsel %vm464, %v3335, 0
      %v3379 = vsel %vm464, %v3337, 0
      %v3382 = vsel %vm464, %v3339, 0
      %v3385 = vsel %vm464, %v3341, 0
      %v3388 = vsel %vm464, %v3343, 0
      %v3391 = vsel %vm464, %v3345, 0
      %v3394 = vsel %vm464, %v3347, 0
      %v3397 = vsel %vm464, %v3349, 0
      %v3400 = vsel %vm464, %v3351, 0
      %v3403 = vsel %vm464, %v3353, 0
      %v3406 = vsel %vm464, %v3355, 0
      %v3409 = vsel %vm464, %v3357, 0
      %v3412 = vsel %vm464, %v3359, 0
      %v3415 = vsel %vm519, %v3318, 0
      %3417 = vmatprep.subr.bf16.mxu0 0
      %3418 = vmatpush1.bf16.msra.mxu0 %v3415
      %3419 = vmatprep.subr.bf16.mxu0 0
      %3420 = vmatpush1.bf16.msra.mxu0 0
      %3421 = vmatprep.subr.bf16.mxu0 0
      %3422 = vmatpush1.bf16.msra.mxu0 0
      %3423 = vmatprep.subr.bf16.mxu0 0
      %3424 = vmatpush1.bf16.msra.mxu0 0
      %3425 = vmatprep.subr.bf16.mxu0 0
      %3426 = vmatpush1.bf16.msra.mxu0 0
      %3427 = vmatprep.subr.bf16.mxu0 0
      %3428 = vmatpush1.bf16.msra.mxu0 0
      %3429 = vmatprep.subr.bf16.mxu0 0
      %3430 = vmatpush1.bf16.msra.mxu0 0
      %3431 = vmatprep.subr.bf16.mxu0 0
      %3432 = vmatpush1.bf16.msra.mxu0 0
      %3433 = vmatprep.subr.bf16.mxu0 0
      %3434 = vmatpush1.bf16.msra.mxu0 0
      %3435 = vmatprep.subr.bf16.mxu0 0
      %3436 = vmatpush1.bf16.msra.mxu0 0
      %3437 = vmatprep.subr.bf16.mxu0 0
      %3438 = vmatpush1.bf16.msra.mxu0 0
      %3439 = vmatprep.subr.bf16.mxu0 0
      %3440 = vmatpush1.bf16.msra.mxu0 0
      %3441 = vmatprep.subr.bf16.mxu0 0
      %3442 = vmatpush1.bf16.msra.mxu0 0
      %3443 = vmatprep.subr.bf16.mxu0 0
      %3444 = vmatpush1.bf16.msra.mxu0 0
      %3445 = vmatprep.subr.bf16.mxu0 0
      %3446 = vmatpush1.bf16.msra.mxu0 0
      %3447 = vmatprep.subr.bf16.mxu0 0
      %3448 = vmatpush1.bf16.msra.mxu0 0
      %3449 = vmatprep.mubr.bf16.mxu0 0
      %3450 = vmatmul.mubr.bf16.gmra.mrb[0].mxu0 %v3361
      %v3451 = vpop.f32.mrb[0].mxu0
      %v3452 = vadd.f32 0.0, %v3451
      %v3453 = vpop.f32.mrb[0].mxu0
      %v3454 = vpop.f32.mrb[0].mxu0
      %v3455 = vadd.f32 0.0, %v3454
      %v3456 = vpop.f32.mrb[0].mxu0
      %3457 = vmatprep.mubr.bf16.mxu0 0
      %3458 = vmatmul.mubr.bf16.gmra.mrb[0].mxu0 %v3364
      %v3459 = vpop.f32.mrb[0].mxu0
      %v3460 = vadd.f32 0.0, %v3459
      %v3461 = vpop.f32.mrb[0].mxu0
      %v3462 = vpop.f32.mrb[0].mxu0
      %v3463 = vadd.f32 0.0, %v3462
      %v3464 = vpop.f32.mrb[0].mxu0
      %3465 = vmatprep.mubr.bf16.mxu0 0
      %3466 = vmatmul.mubr.bf16.gmra.mrb[0].mxu0 %v3367
      %v3467 = vpop.f32.mrb[0].mxu0
      %v3468 = vadd.f32 0.0, %v3467
      %v3469 = vpop.f32.mrb[0].mxu0
      %v3470 = vpop.f32.mrb[0].mxu0
      %v3471 = vadd.f32 0.0, %v3470
      %v3472 = vpop.f32.mrb[0].mxu0
      %3473 = vmatprep.mubr.bf16.mxu0 0
      %3474 = vmatmul.mubr.bf16.gmra.mrb[0].mxu0 %v3370
      %v3475 = vpop.f32.mrb[0].mxu0
      %v3476 = vadd.f32 0.0, %v3475
      %v3477 = vpop.f32.mrb[0].mxu0
      %v3478 = vpop.f32.mrb[0].mxu0
      %v3479 = vadd.f32 0.0, %v3478
      %v3480 = vpop.f32.mrb[0].mxu0
      %3481 = vmatprep.mubr.bf16.mxu0 0
      %3482 = vmatmul.mubr.bf16.gmra.mrb[0].mxu0 %v3373
      %v3483 = vpop.f32.mrb[0].mxu0
      %v3484 = vadd.f32 0.0, %v3483
      %v3485 = vpop.f32.mrb[0].mxu0
      %v3486 = vpop.f32.mrb[0].mxu0
      %v3487 = vadd.f32 0.0, %v3486
      %v3488 = vpop.f32.mrb[0].mxu0
      %3489 = vmatprep.mubr.bf16.mxu0 0
      %3490 = vmatmul.mubr.bf16.gmra.mrb[0].mxu0 %v3376
      %v3491 = vpop.f32.mrb[0].mxu0
      %v3492 = vadd.f32 0.0, %v3491
      %v3493 = vpop.f32.mrb[0].mxu0
      %v3494 = vpop.f32.mrb[0].mxu0
      %v3495 = vadd.f32 0.0, %v3494
      %v3496 = vpop.f32.mrb[0].mxu0
      %3497 = vmatprep.mubr.bf16.mxu0 0
      %3498 = vmatmul.mubr.bf16.gmra.mrb[0].mxu0 %v3379
      %v3499 = vpop.f32.mrb[0].mxu0
      %v3500 = vadd.f32 0.0, %v3499
      %v3501 = vpop.f32.mrb[0].mxu0
      %v3502 = vpop.f32.mrb[0].mxu0
      %v3503 = vadd.f32 0.0, %v3502
      %v3504 = vpop.f32.mrb[0].mxu0
      %3505 = vmatprep.mubr.bf16.mxu0 0
      %3506 = vmatmul.mubr.bf16.gmra.mrb[0].mxu0 %v3382
      %v3507 = vpop.f32.mrb[0].mxu0
      %v3508 = vadd.f32 0.0, %v3507
      %v3509 = vpop.f32.mrb[0].mxu0
      %v3510 = vpop.f32.mrb[0].mxu0
      %v3511 = vadd.f32 0.0, %v3510
      %v3512 = vpop.f32.mrb[0].mxu0
      %3513 = vmatprep.mubr.bf16.mxu0 0
      %3514 = vmatmul.mubr.bf16.gmra.mrb[0].mxu0 %v3385
      %v3515 = vpop.f32.mrb[0].mxu0
      %v3516 = vadd.f32 0.0, %v3515
      %v3517 = vpop.f32.mrb[0].mxu0
      %v3518 = vpop.f32.mrb[0].mxu0
      %v3519 = vadd.f32 0.0, %v3518
      %v3520 = vpop.f32.mrb[0].mxu0
      %3521 = vmatprep.mubr.bf16.mxu0 0
      %3522 = vmatmul.mubr.bf16.gmra.mrb[0].mxu0 %v3388
      %v3523 = vpop.f32.mrb[0].mxu0
      %v3524 = vadd.f32 0.0, %v3523
      %v3525 = vpop.f32.mrb[0].mxu0
      %v3526 = vpop.f32.mrb[0].mxu0
      %v3527 = vadd.f32 0.0, %v3526
      %v3528 = vpop.f32.mrb[0].mxu0
      %3529 = vmatprep.mubr.bf16.mxu0 0
      %3530 = vmatmul.mubr.bf16.gmra.mrb[0].mxu0 %v3391
      %v3531 = vpop.f32.mrb[0].mxu0
      %v3532 = vadd.f32 0.0, %v3531
      %v3533 = vpop.f32.mrb[0].mxu0
      %v3534 = vpop.f32.mrb[0].mxu0
      %v3535 = vadd.f32 0.0, %v3534
      %v3536 = vpop.f32.mrb[0].mxu0
      %3537 = vmatprep.mubr.bf16.mxu0 0
      %3538 = vmatmul.mubr.bf16.gmra.mrb[0].mxu0 %v3394
      %v3539 = vpop.f32.mrb[0].mxu0
      %v3540 = vadd.f32 0.0, %v3539
      %v3541 = vpop.f32.mrb[0].mxu0
      %v3542 = vpop.f32.mrb[0].mxu0
      %v3543 = vadd.f32 0.0, %v3542
      %v3544 = vpop.f32.mrb[0].mxu0
      %3545 = vmatprep.mubr.bf16.mxu0 0
      %3546 = vmatmul.mubr.bf16.gmra.mrb[0].mxu0 %v3397
      %v3547 = vpop.f32.mrb[0].mxu0
      %v3548 = vadd.f32 0.0, %v3547
      %v3549 = vpop.f32.mrb[0].mxu0
      %v3550 = vpop.f32.mrb[0].mxu0
      %v3551 = vadd.f32 0.0, %v3550
      %v3552 = vpop.f32.mrb[0].mxu0
      %3553 = vmatprep.mubr.bf16.mxu0 0
      %3554 = vmatmul.mubr.bf16.gmra.mrb[0].mxu0 %v3400
      %v3555 = vpop.f32.mrb[0].mxu0
      %v3556 = vadd.f32 0.0, %v3555
      %v3557 = vpop.f32.mrb[0].mxu0
      %v3558 = vpop.f32.mrb[0].mxu0
      %v3559 = vadd.f32 0.0, %v3558
      %v3560 = vpop.f32.mrb[0].mxu0
      %3561 = vmatprep.mubr.bf16.mxu0 0
      %3562 = vmatmul.mubr.bf16.gmra.mrb[0].mxu0 %v3403
      %v3563 = vpop.f32.mrb[0].mxu0
      %v3564 = vadd.f32 0.0, %v3563
      %v3565 = vpop.f32.mrb[0].mxu0
      %v3566 = vpop.f32.mrb[0].mxu0
      %v3567 = vadd.f32 0.0, %v3566
      %v3568 = vpop.f32.mrb[0].mxu0
      %3569 = vmatprep.mubr.bf16.mxu0 0
      %3570 = vmatmul.mubr.bf16.gmra.mrb[0].mxu0 %v3406
      %v3571 = vpop.f32.mrb[0].mxu0
      %v3572 = vadd.f32 0.0, %v3571
      %v3573 = vpop.f32.mrb[0].mxu0
      %v3574 = vpop.f32.mrb[0].mxu0
      %v3575 = vadd.f32 0.0, %v3574
      %v3576 = vpop.f32.mrb[0].mxu0
      %3577 = vmatprep.mubr.bf16.mxu0 0
      %3578 = vmatmul.mubr.bf16.gmra.mrb[0].mxu0 %v3409
      %v3579 = vpop.f32.mrb[0].mxu0
      %v3580 = vadd.f32 0.0, %v3579
      %v3581 = vpop.f32.mrb[0].mxu0
      %v3582 = vpop.f32.mrb[0].mxu0
      %v3583 = vadd.f32 0.0, %v3582
      %v3584 = vpop.f32.mrb[0].mxu0
      %3585 = vmatprep.mubr.bf16.mxu0 0
      %3586 = vmatmul.mubr.bf16.gmra.mrb[0].mxu0 %v3412
      %v3587 = vpop.f32.mrb[0].mxu0
      %v3588 = vadd.f32 0.0, %v3587
      %v3589 = vpop.f32.mrb[0].mxu0
      %v3590 = vpop.f32.mrb[0].mxu0
      %v3591 = vadd.f32 0.0, %v3590
      %v3592 = vpop.f32.mrb[0].mxu0
      %3593 = vdwg.mxu0
      %v3594 = vadd.f32 %v3280, %v3452
      %v3595 = vadd.f32 %v3281, %v3455
      %v3596 = vadd.f32 %v3282, %v3460
      %v3597 = vadd.f32 %v3283, %v3463
      %v3598 = vadd.f32 %v3284, %v3468
      %v3599 = vadd.f32 %v3285, %v3471
      %v3600 = vadd.f32 %v3286, %v3476
      %v3601 = vadd.f32 %v3287, %v3479
      %v3602 = vadd.f32 %v3288, %v3484
      %v3603 = vadd.f32 %v3289, %v3487
      %v3604 = vadd.f32 %v3290, %v3492
      %v3605 = vadd.f32 %v3291, %v3495
      %v3606 = vadd.f32 %v3292, %v3500
      %v3607 = vadd.f32 %v3293, %v3503
      %v3608 = vadd.f32 %v3294, %v3508
      %v3609 = vadd.f32 %v3295, %v3511
      %v3610 = vadd.f32 %v3296, %v3516
      %v3611 = vadd.f32 %v3297, %v3519
      %v3612 = vadd.f32 %v3298, %v3524
      %v3613 = vadd.f32 %v3299, %v3527
      %v3614 = vadd.f32 %v3300, %v3532
      %v3615 = vadd.f32 %v3301, %v3535
      %v3616 = vadd.f32 %v3302, %v3540
      %v3617 = vadd.f32 %v3303, %v3543
      %v3618 = vadd.f32 %v3304, %v3548
      %v3619 = vadd.f32 %v3305, %v3551
      %v3620 = vadd.f32 %v3306, %v3556
      %v3621 = vadd.f32 %v3307, %v3559
      %v3622 = vadd.f32 %v3308, %v3564
      %v3623 = vadd.f32 %v3309, %v3567
      %v3624 = vadd.f32 %v3310, %v3572
      %v3625 = vadd.f32 %v3311, %v3575
      %v3626 = vadd.f32 %v3312, %v3580
      %v3627 = vadd.f32 %v3313, %v3583
      %v3628 = vadd.f32 %v3314, %v3588
      %v3629 = vadd.f32 %v3315, %v3591
      %3630 = vst [vmem:[%s180] sm:$0xff] %v3594
      %3631 = vst [vmem:[%s180 + $0x8] sm:$0xff] %v3595
      %3632 = vst [vmem:[%s180 + $0x10] sm:$0xff] %v3596
      %3633 = vst [vmem:[%s180 + $0x18] sm:$0xff] %v3597
      %3634 = vst [vmem:[%s180 + $0x20] sm:$0xff] %v3598
      %3635 = vst [vmem:[%s180 + $0x28] sm:$0xff] %v3599
      %3636 = vst [vmem:[%s180 + $0x30] sm:$0xff] %v3600
      %3637 = vst [vmem:[%s180 + $0x38] sm:$0xff] %v3601
      %3638 = vst [vmem:[%s180 + $0x40] sm:$0xff] %v3602
      %3639 = vst [vmem:[%s180 + $0x48] sm:$0xff] %v3603
      %3640 = vst [vmem:[%s180 + $0x50] sm:$0xff] %v3604
      %3641 = vst [vmem:[%s180 + $0x58] sm:$0xff] %v3605
      %3642 = vst [vmem:[%s180 + $0x60] sm:$0xff] %v3606
      %3643 = vst [vmem:[%s180 + $0x68] sm:$0xff] %v3607
      %3644 = vst [vmem:[%s180 + $0x70] sm:$0xff] %v3608
      %3645 = vst [vmem:[%s180 + $0x78] sm:$0xff] %v3609
      %3646 = vst [vmem:[%s180 + $0x80] sm:$0xff] %v3610
      %3647 = vst [vmem:[%s180 + $0x88] sm:$0xff] %v3611
      %3648 = vst [vmem:[%s180 + $0x90] sm:$0xff] %v3612
      %3649 = vst [vmem:[%s180 + $0x98] sm:$0xff] %v3613
      %3650 = vst [vmem:[%s180 + $0xa0] sm:$0xff] %v3614
      %3651 = vst [vmem:[%s180 + $0xa8] sm:$0xff] %v3615
      %3652 = vst [vmem:[%s180 + $0xb0] sm:$0xff] %v3616
      %3653 = vst [vmem:[%s180 + $0xb8] sm:$0xff] %v3617
      %3654 = vst [vmem:[%s180 + $0xc0] sm:$0xff] %v3618
      %3655 = vst [vmem:[%s180 + $0xc8] sm:$0xff] %v3619
      %3656 = vst [vmem:[%s180 + $0xd0] sm:$0xff] %v3620
      %3657 = vst [vmem:[%s180 + $0xd8] sm:$0xff] %v3621
      %3658 = vst [vmem:[%s180 + $0xe0] sm:$0xff] %v3622
      %3659 = vst [vmem:[%s180 + $0xe8] sm:$0xff] %v3623
      %3660 = vst [vmem:[%s180 + $0xf0] sm:$0xff] %v3624
      %3661 = vst [vmem:[%s180 + $0xf8] sm:$0xff] %v3625
      %3662 = vst [vmem:[%s180 + $0x100] sm:$0xff] %v3626
      %3663 = vst [vmem:[%s180 + $0x108] sm:$0xff] %v3627
      %3664 = vst [vmem:[%s180 + $0x110] sm:$0xff] %v3628
      %3665 = vst [vmem:[%s180 + $0x118] sm:$0xff] %v3629
      %p3666 = scmp.lt.s32.totalorder %s17, 1
      %s3667 = scalar_select %p3666, %s17, 1
      %p3668 = scmp.lt.s32.totalorder %s18, 0
      %s3669 = scalar_select %p3668, %s18, 0
      %s3670 = smul.addr %s3667, 36
      %s3671 = sadd.s32 %s3669, %s3670
      %s3672 = smul.addr %s3671, 8
      %s3673 = scalar_lea.vmem %s2, %s3672
      // Predicated region
      $region29: #{conv_forward.1} parent=27 // pred_check
        %p3674 = pneg %p97
      $region30: #{conv_forward.1} parent=27 // pred_check_branch
        %3676 = sbr.rel (%p3674) target = $region32
      $region31: #{conv_forward.1} parent=27 // pred_region
        _
      $region32: #{conv_forward.1} parent=27 // pred_fallthru
        _
    $region28: #{conv_forward.1} parent=5 // pred_fallthru
      _
    %p3677 = scmp.le.s32.totalorder 2, %s8
    // Predicated region
    $region33: #{conv_forward.1} parent=5 // pred_check
      %p3678 = pneg %p3677
    $region34: #{conv_forward.1} parent=5 // pred_check_branch
      %3680 = sbr.rel (%p3678) target = $region36
    $region35: #{conv_forward.1} parent=5 // pred_region
      %s3681 = ssub.s32 %s8, 2
      // Predicated region
      $region37: #{conv_forward.1} parent=35 // pred_check
        %p3682 = pneg %p103
      $region38: #{conv_forward.1} parent=35 // pred_check_branch
        %3684 = sbr.rel (%p3682) target = $region40
      $region39: #{conv_forward.1} parent=35 // pred_region
        %p3685 = scmp.lt.s32.totalorder %s19, 1
        %s3686 = scalar_select %p3685, %s19, 1
        %p3687 = scmp.lt.s32.totalorder %s20, 0
        %s3688 = scalar_select %p3687, %s20, 0
        %s3689 = smul.addr %s3686, 36
        %s3690 = sadd.s32 %s3688, %s3689
        %s3691 = smul.addr %s3690, 8
        %s3692 = scalar_lea.vmem %s2, %s3691
      $region40: #{conv_forward.1} parent=35 // pred_fallthru
        _
    $region36: #{conv_forward.1} parent=5 // pred_fallthru
      _
  $region6: #{conv_forward.1} parent=0 // loop_footer
    %s12 = sadd.s32 1, %s8
  $region7: #{conv_forward.1} parent=0 // loop_footer_branch
    %7 = sbr.rel target = $region3
  $region8: #{conv_forward.1} parent=0 // loop_exit
    _

</llo_original>
